<compile_context>
chip_gen: v7x
topology: tpu7x:2x2x1
jax: 0.10.0
libtpu: 0.0.40
codegen_flags: <defaults>
</compile_context>

<pallas_src>
import math
import functools

import jax
import jax.numpy as jnp
from jax import lax
from jax.experimental import pallas as pl
from jax.experimental.pallas import tpu as pltpu


def _self_attention_kernel(xq_ref, xkv_ref, wq_ref, bq_ref, wk_ref, bk_ref,
                           wv_ref, bv_ref, wo_ref, bo_ref, o_ref,
                           q_scr, m_scr, l_scr, acc_scr,
                           *, num_heads, head_dim, inv_scale, bt, tq, tk):
    """Grid = (batch_block, q_tile, kv_tile). KV axis is the online-softmax
    reduction; running stats and the per-head context live in VMEM scratch."""
    H, hd = num_heads, head_dim
    D = H * hd
    ki = pl.program_id(2)
    n_kv = pl.num_programs(2)

    # ---- init (first KV tile of every (batch_block, q_tile)) -------------
    @pl.when(ki == 0)
    def _init():
        m_scr[...] = jnp.full(m_scr.shape, -jnp.inf, dtype=jnp.float32)
        l_scr[...] = jnp.zeros(l_scr.shape, dtype=jnp.float32)
        acc_scr[...] = jnp.zeros(acc_scr.shape, dtype=jnp.float32)
        # Q projection once per query tile (bf16 MXU, f32 accumulation).
        xq = xq_ref[...].reshape(bt * tq, D)
        q = jnp.dot(xq, wq_ref[...], preferred_element_type=jnp.float32) \
            + bq_ref[...]
        q_scr[...] = q.astype(jnp.bfloat16)

    # ---- K/V projections for the current KV tile -------------------------
    xkv = xkv_ref[...].reshape(bt * tk, D)
    k = (jnp.dot(xkv, wk_ref[...], preferred_element_type=jnp.float32)
         + bk_ref[...]).astype(jnp.bfloat16)
    v = (jnp.dot(xkv, wv_ref[...], preferred_element_type=jnp.float32)
         + bv_ref[...]).astype(jnp.bfloat16)

    q_all = q_scr[...]                                   # (bt*tq, D) bf16

    # ---- online-softmax update per (folded batch, head) -------------------
    # TODO(synk): optional attention mask (mask==0 -> -1e9) not plumbed;
    #             module default is mask=None.
    # TODO(synk): dropout on attention weights skipped (inference/eval mode).
    for b in range(bt):
        for h in range(H):
            idx = b * H + h
            qh = q_all[b * tq:(b + 1) * tq, h * hd:(h + 1) * hd]   # (tq, hd)
            kh = k[b * tk:(b + 1) * tk, h * hd:(h + 1) * hd]       # (tk, hd)
            vh = v[b * tk:(b + 1) * tk, h * hd:(h + 1) * hd]       # (tk, hd)

            # scores = qh @ kh^T without an explicit transpose (trans_b form).
            s = lax.dot_general(qh, kh, (((1,), (1,)), ((), ())),
                                preferred_element_type=jnp.float32) * inv_scale

            m_prev = m_scr[idx]                                    # (tq, 1)
            m_new = jnp.maximum(m_prev, jnp.max(s, axis=-1, keepdims=True))
            alpha = jnp.exp(m_prev - m_new)                        # (tq, 1)
            p = jnp.exp(s - m_new)                                 # (tq, tk) f32

            l_scr[idx] = alpha * l_scr[idx] + jnp.sum(p, axis=-1, keepdims=True)
            acc_scr[idx] = alpha * acc_scr[idx] + jnp.dot(
                p.astype(jnp.bfloat16), vh, preferred_element_type=jnp.float32)
            m_scr[idx] = m_new

    # ---- finalize (last KV tile): normalize + fused output projection -----
    @pl.when(ki == n_kv - 1)
    def _finalize():
        bo = bo_ref[...]                     # (1, D) f32, broadcast-added once
        wo = wo_ref[...]                     # (D, D) bf16, loaded once
        for b in range(bt):
            out = jnp.zeros((tq, D), jnp.float32)
            for h in range(H):
                idx = b * H + h
                inv_l = pl.reciprocal(l_scr[idx], approx=True)     # EUP slot
                ctx = (acc_scr[idx] * inv_l).astype(jnp.bfloat16)  # (tq, hd)
                # Accumulate through Wo instead of concatenating heads.
                out = out + jnp.dot(ctx, wo[h * hd:(h + 1) * hd, :],
                                    preferred_element_type=jnp.float32)
            o_ref[b] = (out + bo).astype(o_ref.dtype)


def self_attention(x, params, *, num_heads):
    """x: (B, S, D) float32. params: pre-transposed weights (D, D) + biases (1, D)."""
    B, S, D = x.shape
    assert D % num_heads == 0, "dim must be divisible by num_heads"
    head_dim = D // num_heads
    inv_scale = 1.0 / math.sqrt(head_dim)
    out_dtype = x.dtype

    # Sequence tiles (flash-style). Large S would give multiple KV tiles.
    TQ = min(S, 512)
    TK = min(S, 512)
    assert S % TQ == 0 and S % TK == 0

    # Fold batch elements into one grid step while the projection matmul M-dim
    # is small, so the MXU and per-step overhead are better amortized.
    BT = 1
    while BT < B and B % (2 * BT) == 0 and BT * TQ < 128:
        BT *= 2

    # bf16 operands, f32 accumulation (biases stay f32).
    xb = x.astype(jnp.bfloat16)
    wq = params["wq"].astype(jnp.bfloat16)
    wk = params["wk"].astype(jnp.bfloat16)
    wv = params["wv"].astype(jnp.bfloat16)
    wo = params["wo"].astype(jnp.bfloat16)

    kernel = functools.partial(
        _self_attention_kernel,
        num_heads=num_heads, head_dim=head_dim, inv_scale=inv_scale,
        bt=BT, tq=TQ, tk=TK)

    grid = (B // BT, S // TQ, S // TK)
    w_spec = pl.BlockSpec((D, D), lambda b, qi, ki: (0, 0))
    b_spec = pl.BlockSpec((1, D), lambda b, qi, ki: (0, 0))

    return pl.pallas_call(
        kernel,
        out_shape=jax.ShapeDtypeStruct((B, S, D), out_dtype),
        grid_spec=pltpu.PrefetchScalarGridSpec(
            num_scalar_prefetch=0,
            grid=grid,
            in_specs=[
                pl.BlockSpec((BT, TQ, D), lambda b, qi, ki: (b, qi, 0)),  # x (queries)
                pl.BlockSpec((BT, TK, D), lambda b, qi, ki: (b, ki, 0)),  # x (keys/values)
                w_spec, b_spec,                                           # Wq, bq
                w_spec, b_spec,                                           # Wk, bk
                w_spec, b_spec,                                           # Wv, bv
                w_spec, b_spec,                                           # Wo, bo
            ],
            out_specs=pl.BlockSpec((BT, TQ, D), lambda b, qi, ki: (b, qi, 0)),
            scratch_shapes=[
                pltpu.VMEM((BT * TQ, D), jnp.bfloat16),                   # Q tile
                pltpu.VMEM((BT * num_heads, TQ, 1), jnp.float32),         # running max
                pltpu.VMEM((BT * num_heads, TQ, 1), jnp.float32),         # running sum
                pltpu.VMEM((BT * num_heads, TQ, head_dim), jnp.float32),  # ctx accum
            ],
        ),
        compiler_params=pltpu.CompilerParams(
            dimension_semantics=("parallel", "parallel", "arbitrary"),
            vmem_limit_bytes=48 * 1024 * 1024,  # tune per generation / D
        ),
    )(xb, xb,
      wq, params["bq"], wk, params["bk"], wv, params["bv"], wo, params["bo"])


def init_params(key, dim):
    """Deterministic synthetic init. Weights stored as (D_in, D_out) so that
    y = x @ W + b matches PyTorch's y = x @ weight.T + bias."""
    keys = jax.random.split(key, 8)
    bound = 1.0 / math.sqrt(dim)

    def lin(kw, kb):
        w = jax.random.uniform(kw, (dim, dim), jnp.float32, -bound, bound)
        b = jax.random.uniform(kb, (1, dim), jnp.float32, -bound, bound)
        return w, b

    wq, bq = lin(keys[0], keys[1])
    wk, bk = lin(keys[2], keys[3])
    wv, bv = lin(keys[4], keys[5])
    wo, bo = lin(keys[6], keys[7])
    return dict(wq=wq, bq=bq, wk=wk, bk=bk, wv=wv, bv=bv, wo=wo, bo=bo)


def reference(x, params, *, num_heads):
    """Plain-JAX f32 reference of the PyTorch forward (mask=None, eval mode)."""
    B, S, D = x.shape
    hd = D // num_heads
    q = x @ params["wq"] + params["bq"]
    k = x @ params["wk"] + params["bk"]
    v = x @ params["wv"] + params["bv"]
    q = q.reshape(B, S, num_heads, hd).transpose(0, 2, 1, 3)
    k = k.reshape(B, S, num_heads, hd).transpose(0, 2, 1, 3)
    v = v.reshape(B, S, num_heads, hd).transpose(0, 2, 1, 3)
    scores = jnp.einsum("bhqd,bhkd->bhqk", q, k) / math.sqrt(hd)
    attn = jax.nn.softmax(scores, axis=-1)
    out = jnp.einsum("bhqk,bhkd->bhqd", attn, v)
    out = out.transpose(0, 2, 1, 3).reshape(B, S, D)
    return out @ params["wo"] + params["bo"]


if __name__ == "__main__":
    B, S, D, H = 2, 8, 32, 8
    key = jax.random.PRNGKey(0)
    kx, kp = jax.random.split(key)
    x = jax.random.normal(kx, (B, S, D), jnp.float32)
    params = init_params(kp, D)

    out = self_attention(x, params, num_heads=H)
    out = jax.block_until_ready(out)

    ref = reference(x, params, num_heads=H)
    assert out.shape == (B, S, D)
    # bf16 operands vs f32 reference -> tolerance loosened accordingly.
    assert jnp.allclose(out, ref, atol=3e-2, rtol=3e-2), "mismatch vs reference"
    print("KERNEL_OK")
</pallas_src>

<mosaic_0001>
module attributes {stable_mosaic.version = 11 : i64} {
  func.func @_self_attention_kernel(%arg0: i32, %arg1: i32, %arg2: i32, %arg3: memref<2x8x32xbf16, #tpu.memory_space<vmem>>, %arg4: memref<2x8x32xbf16, #tpu.memory_space<vmem>>, %arg5: memref<32x32xbf16, #tpu.memory_space<vmem>>, %arg6: memref<1x32xf32, #tpu.memory_space<vmem>>, %arg7: memref<32x32xbf16, #tpu.memory_space<vmem>>, %arg8: memref<1x32xf32, #tpu.memory_space<vmem>>, %arg9: memref<32x32xbf16, #tpu.memory_space<vmem>>, %arg10: memref<1x32xf32, #tpu.memory_space<vmem>>, %arg11: memref<32x32xbf16, #tpu.memory_space<vmem>>, %arg12: memref<1x32xf32, #tpu.memory_space<vmem>>, %arg13: memref<2x8x32xf32, #tpu.memory_space<vmem>>, %arg14: memref<16x32xbf16, #tpu.memory_space<vmem>>, %arg15: memref<16x8x1xf32, #tpu.memory_space<vmem>>, %arg16: memref<16x8x1xf32, #tpu.memory_space<vmem>>, %arg17: memref<16x8x4xf32, #tpu.memory_space<vmem>>) attributes {dimension_semantics = [#tpu.dimension_semantics<parallel>, #tpu.dimension_semantics<parallel>, #tpu.dimension_semantics<arbitrary>], iteration_bounds = array<i64: 1, 1, 1>, scalar_prefetch = 0 : i64, scratch_operands = 4 : i64, tpu.core_type = #tpu.core_type<tc>, window_params = [{transform_indices = @transform_0, window_bounds = array<i64: 2, 8, 32>}, {transform_indices = @transform_1, window_bounds = array<i64: 2, 8, 32>}, {pipeline_mode = #tpu.pipeline_mode<synchronous>, transform_indices = @transform_2, window_bounds = array<i64: 32, 32>}, {pipeline_mode = #tpu.pipeline_mode<synchronous>, transform_indices = @transform_3, window_bounds = array<i64: 1, 32>}, {pipeline_mode = #tpu.pipeline_mode<synchronous>, transform_indices = @transform_4, window_bounds = array<i64: 32, 32>}, {pipeline_mode = #tpu.pipeline_mode<synchronous>, transform_indices = @transform_5, window_bounds = array<i64: 1, 32>}, {pipeline_mode = #tpu.pipeline_mode<synchronous>, transform_indices = @transform_6, window_bounds = array<i64: 32, 32>}, {pipeline_mode = #tpu.pipeline_mode<synchronous>, transform_indices = @transform_7, window_bounds = array<i64: 1, 32>}, {pipeline_mode = #tpu.pipeline_mode<synchronous>, transform_indices = @transform_8, window_bounds = array<i64: 32, 32>}, {pipeline_mode = #tpu.pipeline_mode<synchronous>, transform_indices = @transform_9, window_bounds = array<i64: 1, 32>}, {transform_indices = @transform_10, window_bounds = array<i64: 2, 8, 32>}]} {
    %c0_i32 = arith.constant 0 : i32
    %0 = arith.cmpi eq, %arg2, %c0_i32 : i32
    %1 = arith.extui %0 : i1 to i32
    %c0_i32_0 = arith.constant 0 : i32
    %2 = arith.cmpi ne, %1, %c0_i32_0 : i32
    scf.if %2 {
      %cst_369 = arith.constant 0xFF800000 : f32
      %629 = vector.broadcast %cst_369 : f32 to vector<16x8x1xf32>
      %c0_370 = arith.constant 0 : index
      %c0_371 = arith.constant 0 : index
      %c0_372 = arith.constant 0 : index
      %630 = vector.load %arg15[%c0_370, %c0_371, %c0_372] : memref<16x8x1xf32, #tpu.memory_space<vmem>>, vector<16x8x1xf32>
      tpu.vector_store %arg15[%c0_370, %c0_371, %c0_372], %629 {strides = array<i32>} : memref<16x8x1xf32, #tpu.memory_space<vmem>>, vector<16x8x1xf32>,
      %cst_373 = arith.constant 0.000000e+00 : f32
      %631 = vector.broadcast %cst_373 : f32 to vector<16x8x1xf32>
      %c0_374 = arith.constant 0 : index
      %c0_375 = arith.constant 0 : index
      %c0_376 = arith.constant 0 : index
      %632 = vector.load %arg16[%c0_374, %c0_375, %c0_376] : memref<16x8x1xf32, #tpu.memory_space<vmem>>, vector<16x8x1xf32>
      tpu.vector_store %arg16[%c0_374, %c0_375, %c0_376], %631 {strides = array<i32>} : memref<16x8x1xf32, #tpu.memory_space<vmem>>, vector<16x8x1xf32>,
      %cst_377 = arith.constant 0.000000e+00 : f32
      %633 = vector.broadcast %cst_377 : f32 to vector<16x8x4xf32>
      %c0_378 = arith.constant 0 : index
      %c0_379 = arith.constant 0 : index
      %c0_380 = arith.constant 0 : index
      %634 = vector.load %arg17[%c0_378, %c0_379, %c0_380] : memref<16x8x4xf32, #tpu.memory_space<vmem>>, vector<16x8x4xf32>
      tpu.vector_store %arg17[%c0_378, %c0_379, %c0_380], %633 {strides = array<i32>} : memref<16x8x4xf32, #tpu.memory_space<vmem>>, vector<16x8x4xf32>,
      %c0_381 = arith.constant 0 : index
      %c0_382 = arith.constant 0 : index
      %c0_383 = arith.constant 0 : index
      %635 = vector.load %arg3[%c0_381, %c0_382, %c0_383] : memref<2x8x32xbf16, #tpu.memory_space<vmem>>, vector<2x8x32xbf16>
      %636 = vector.shape_cast %635 : vector<2x8x32xbf16> to vector<16x32xbf16>
      %c0_384 = arith.constant 0 : index
      %c0_385 = arith.constant 0 : index
      %637 = vector.load %arg5[%c0_384, %c0_385] : memref<32x32xbf16, #tpu.memory_space<vmem>>, vector<32x32xbf16>
      %cst_386 = arith.constant dense<0.000000e+00> : vector<16x32xf32>
      %638 = tpu.matmul %636, %637, %cst_386 {dimension_numbers = #tpu.dot_dimension_numbers<[1], [0], [0], [1], [0, 0, 1, 1], [], []>} : vector<16x32xbf16>, vector<32x32xbf16>, vector<16x32xf32> -> vector<16x32xf32>
      %c0_387 = arith.constant 0 : index
      %c0_388 = arith.constant 0 : index
      %639 = vector.load %arg6[%c0_387, %c0_388] : memref<1x32xf32, #tpu.memory_space<vmem>>, vector<1x32xf32>
      %640 = vector.broadcast %639 : vector<1x32xf32> to vector<16x32xf32>
      %641 = arith.addf %638, %640 : vector<16x32xf32>
      %642 = arith.truncf %641 : vector<16x32xf32> to vector<16x32xbf16>
      %c0_389 = arith.constant 0 : index
      %c0_390 = arith.constant 0 : index
      %643 = vector.load %arg14[%c0_389, %c0_390] : memref<16x32xbf16, #tpu.memory_space<vmem>>, vector<16x32xbf16>
      tpu.vector_store %arg14[%c0_389, %c0_390], %642 {strides = array<i32>} : memref<16x32xbf16, #tpu.memory_space<vmem>>, vector<16x32xbf16>,
    } else {
    }
    %c0 = arith.constant 0 : index
    %c0_1 = arith.constant 0 : index
    %c0_2 = arith.constant 0 : index
    %3 = vector.load %arg4[%c0, %c0_1, %c0_2] : memref<2x8x32xbf16, #tpu.memory_space<vmem>>, vector<2x8x32xbf16>
    %4 = vector.shape_cast %3 : vector<2x8x32xbf16> to vector<16x32xbf16>
    %c0_3 = arith.constant 0 : index
    %c0_4 = arith.constant 0 : index
    %5 = vector.load %arg7[%c0_3, %c0_4] : memref<32x32xbf16, #tpu.memory_space<vmem>>, vector<32x32xbf16>
    %cst = arith.constant dense<0.000000e+00> : vector<16x32xf32>
    %6 = tpu.matmul %4, %5, %cst {dimension_numbers = #tpu.dot_dimension_numbers<[1], [0], [0], [1], [0, 0, 1, 1], [], []>} : vector<16x32xbf16>, vector<32x32xbf16>, vector<16x32xf32> -> vector<16x32xf32>
    %c0_5 = arith.constant 0 : index
    %c0_6 = arith.constant 0 : index
    %7 = vector.load %arg8[%c0_5, %c0_6] : memref<1x32xf32, #tpu.memory_space<vmem>>, vector<1x32xf32>
    %8 = vector.broadcast %7 : vector<1x32xf32> to vector<16x32xf32>
    %9 = arith.addf %6, %8 : vector<16x32xf32>
    %10 = arith.truncf %9 : vector<16x32xf32> to vector<16x32xbf16>
    %c0_7 = arith.constant 0 : index
    %c0_8 = arith.constant 0 : index
    %11 = vector.load %arg9[%c0_7, %c0_8] : memref<32x32xbf16, #tpu.memory_space<vmem>>, vector<32x32xbf16>
    %cst_9 = arith.constant dense<0.000000e+00> : vector<16x32xf32>
    %12 = tpu.matmul %4, %11, %cst_9 {dimension_numbers = #tpu.dot_dimension_numbers<[1], [0], [0], [1], [0, 0, 1, 1], [], []>} : vector<16x32xbf16>, vector<32x32xbf16>, vector<16x32xf32> -> vector<16x32xf32>
    %c0_10 = arith.constant 0 : index
    %c0_11 = arith.constant 0 : index
    %13 = vector.load %arg10[%c0_10, %c0_11] : memref<1x32xf32, #tpu.memory_space<vmem>>, vector<1x32xf32>
    %14 = vector.broadcast %13 : vector<1x32xf32> to vector<16x32xf32>
    %15 = arith.addf %12, %14 : vector<16x32xf32>
    %16 = arith.truncf %15 : vector<16x32xf32> to vector<16x32xbf16>
    %c0_12 = arith.constant 0 : index
    %c0_13 = arith.constant 0 : index
    %17 = vector.load %arg14[%c0_12, %c0_13] : memref<16x32xbf16, #tpu.memory_space<vmem>>, vector<16x32xbf16>
    %18 = vector.extract_strided_slice %17 {offsets = [0, 0], sizes = [8, 4], strides = [1, 1]} : vector<16x32xbf16> to vector<8x4xbf16>
    %19 = vector.extract_strided_slice %10 {offsets = [0, 0], sizes = [8, 4], strides = [1, 1]} : vector<16x32xbf16> to vector<8x4xbf16>
    %20 = vector.extract_strided_slice %16 {offsets = [0, 0], sizes = [8, 4], strides = [1, 1]} : vector<16x32xbf16> to vector<8x4xbf16>
    %cst_14 = arith.constant dense<0.000000e+00> : vector<8x8xf32>
    %21 = tpu.matmul %18, %19, %cst_14 {dimension_numbers = #tpu.dot_dimension_numbers<[1], [1], [0], [0], [0, 0, 1, 0], [], []>} : vector<8x4xbf16>, vector<8x4xbf16>, vector<8x8xf32> -> vector<8x8xf32>
    %cst_15 = arith.constant 5.000000e-01 : f32
    %22 = vector.broadcast %cst_15 : f32 to vector<8x8xf32>
    %23 = arith.mulf %21, %22 : vector<8x8xf32>
    %c0_16 = arith.constant 0 : index
    %c0_17 = arith.constant 0 : index
    %c0_18 = arith.constant 0 : index
    %24 = vector.load %arg15[%c0_16, %c0_17, %c0_18] : memref<16x8x1xf32, #tpu.memory_space<vmem>>, vector<1x8x1xf32>
    %25 = vector.shape_cast %24 : vector<1x8x1xf32> to vector<8x1xf32>
    %cst_19 = arith.constant dense<0xFF800000> : vector<8xf32>
    %26 = vector.multi_reduction <maximumf>, %23, %cst_19 [1] : vector<8x8xf32> to vector<8xf32>
    %27 = vector.shape_cast %26 : vector<8xf32> to vector<8x1xf32>
    %28 = arith.maximumf %25, %27 : vector<8x1xf32>
    %29 = arith.subf %25, %28 : vector<8x1xf32>
    %30 = math.exp %29 : vector<8x1xf32>
    %31 = vector.broadcast %28 : vector<8x1xf32> to vector<8x8xf32>
    %32 = arith.subf %23, %31 : vector<8x8xf32>
    %33 = math.exp %32 : vector<8x8xf32>
    %c0_20 = arith.constant 0 : index
    %c0_21 = arith.constant 0 : index
    %c0_22 = arith.constant 0 : index
    %34 = vector.load %arg16[%c0_20, %c0_21, %c0_22] : memref<16x8x1xf32, #tpu.memory_space<vmem>>, vector<1x8x1xf32>
    %35 = vector.shape_cast %34 : vector<1x8x1xf32> to vector<8x1xf32>
    %36 = arith.mulf %30, %35 : vector<8x1xf32>
    %cst_23 = arith.constant dense<0.000000e+00> : vector<8xf32>
    %37 = vector.multi_reduction <add>, %33, %cst_23 [1] : vector<8x8xf32> to vector<8xf32>
    %38 = vector.shape_cast %37 : vector<8xf32> to vector<8x1xf32>
    %39 = arith.addf %36, %38 : vector<8x1xf32>
    %c0_24 = arith.constant 0 : index
    %c0_25 = arith.constant 0 : index
    %c0_26 = arith.constant 0 : index
    %40 = vector.load %arg16[%c0_24, %c0_25, %c0_26] : memref<16x8x1xf32, #tpu.memory_space<vmem>>, vector<1x8x1xf32>
    %41 = vector.shape_cast %40 : vector<1x8x1xf32> to vector<8x1xf32>
    %42 = vector.shape_cast %39 : vector<8x1xf32> to vector<1x8x1xf32>
    tpu.vector_store %arg16[%c0_24, %c0_25, %c0_26], %42 {strides = array<i32>} : memref<16x8x1xf32, #tpu.memory_space<vmem>>, vector<1x8x1xf32>,
    %c0_27 = arith.constant 0 : index
    %c0_28 = arith.constant 0 : index
    %c0_29 = arith.constant 0 : index
    %43 = vector.load %arg17[%c0_27, %c0_28, %c0_29] : memref<16x8x4xf32, #tpu.memory_space<vmem>>, vector<1x8x4xf32>
    %44 = vector.shape_cast %43 : vector<1x8x4xf32> to vector<8x4xf32>
    %45 = vector.broadcast %30 : vector<8x1xf32> to vector<8x4xf32>
    %46 = arith.mulf %45, %44 : vector<8x4xf32>
    %47 = arith.truncf %33 : vector<8x8xf32> to vector<8x8xbf16>
    %cst_30 = arith.constant dense<0.000000e+00> : vector<8x4xf32>
    %48 = tpu.matmul %47, %20, %cst_30 {dimension_numbers = #tpu.dot_dimension_numbers<[1], [0], [0], [1], [0, 0, 1, 1], [], []>} : vector<8x8xbf16>, vector<8x4xbf16>, vector<8x4xf32> -> vector<8x4xf32>
    %49 = arith.addf %46, %48 : vector<8x4xf32>
    %c0_31 = arith.constant 0 : index
    %c0_32 = arith.constant 0 : index
    %c0_33 = arith.constant 0 : index
    %50 = vector.load %arg17[%c0_31, %c0_32, %c0_33] : memref<16x8x4xf32, #tpu.memory_space<vmem>>, vector<1x8x4xf32>
    %51 = vector.shape_cast %50 : vector<1x8x4xf32> to vector<8x4xf32>
    %52 = vector.shape_cast %49 : vector<8x4xf32> to vector<1x8x4xf32>
    tpu.vector_store %arg17[%c0_31, %c0_32, %c0_33], %52 {strides = array<i32>} : memref<16x8x4xf32, #tpu.memory_space<vmem>>, vector<1x8x4xf32>,
    %c0_34 = arith.constant 0 : index
    %c0_35 = arith.constant 0 : index
    %c0_36 = arith.constant 0 : index
    %53 = vector.load %arg15[%c0_34, %c0_35, %c0_36] : memref<16x8x1xf32, #tpu.memory_space<vmem>>, vector<1x8x1xf32>
    %54 = vector.shape_cast %53 : vector<1x8x1xf32> to vector<8x1xf32>
    %55 = vector.shape_cast %28 : vector<8x1xf32> to vector<1x8x1xf32>
    tpu.vector_store %arg15[%c0_34, %c0_35, %c0_36], %55 {strides = array<i32>} : memref<16x8x1xf32, #tpu.memory_space<vmem>>, vector<1x8x1xf32>,
    %56 = vector.extract_strided_slice %17 {offsets = [0, 4], sizes = [8, 4], strides = [1, 1]} : vector<16x32xbf16> to vector<8x4xbf16>
    %57 = vector.extract_strided_slice %10 {offsets = [0, 4], sizes = [8, 4], strides = [1, 1]} : vector<16x32xbf16> to vector<8x4xbf16>
    %58 = vector.extract_strided_slice %16 {offsets = [0, 4], sizes = [8, 4], strides = [1, 1]} : vector<16x32xbf16> to vector<8x4xbf16>
    %cst_37 = arith.constant dense<0.000000e+00> : vector<8x8xf32>
    %59 = tpu.matmul %56, %57, %cst_37 {dimension_numbers = #tpu.dot_dimension_numbers<[1], [1], [0], [0], [0, 0, 1, 0], [], []>} : vector<8x4xbf16>, vector<8x4xbf16>, vector<8x8xf32> -> vector<8x8xf32>
    %cst_38 = arith.constant 5.000000e-01 : f32
    %60 = vector.broadcast %cst_38 : f32 to vector<8x8xf32>
    %61 = arith.mulf %59, %60 : vector<8x8xf32>
    %c1 = arith.constant 1 : index
    %c0_39 = arith.constant 0 : index
    %c0_40 = arith.constant 0 : index
    %62 = vector.load %arg15[%c1, %c0_39, %c0_40] : memref<16x8x1xf32, #tpu.memory_space<vmem>>, vector<1x8x1xf32>
    %63 = vector.shape_cast %62 : vector<1x8x1xf32> to vector<8x1xf32>
    %cst_41 = arith.constant dense<0xFF800000> : vector<8xf32>
    %64 = vector.multi_reduction <maximumf>, %61, %cst_41 [1] : vector<8x8xf32> to vector<8xf32>
    %65 = vector.shape_cast %64 : vector<8xf32> to vector<8x1xf32>
    %66 = arith.maximumf %63, %65 : vector<8x1xf32>
    %67 = arith.subf %63, %66 : vector<8x1xf32>
    %68 = math.exp %67 : vector<8x1xf32>
    %69 = vector.broadcast %66 : vector<8x1xf32> to vector<8x8xf32>
    %70 = arith.subf %61, %69 : vector<8x8xf32>
    %71 = math.exp %70 : vector<8x8xf32>
    %c1_42 = arith.constant 1 : index
    %c0_43 = arith.constant 0 : index
    %c0_44 = arith.constant 0 : index
    %72 = vector.load %arg16[%c1_42, %c0_43, %c0_44] : memref<16x8x1xf32, #tpu.memory_space<vmem>>, vector<1x8x1xf32>
    %73 = vector.shape_cast %72 : vector<1x8x1xf32> to vector<8x1xf32>
    %74 = arith.mulf %68, %73 : vector<8x1xf32>
    %cst_45 = arith.constant dense<0.000000e+00> : vector<8xf32>
    %75 = vector.multi_reduction <add>, %71, %cst_45 [1] : vector<8x8xf32> to vector<8xf32>
    %76 = vector.shape_cast %75 : vector<8xf32> to vector<8x1xf32>
    %77 = arith.addf %74, %76 : vector<8x1xf32>
    %c1_46 = arith.constant 1 : index
    %c0_47 = arith.constant 0 : index
    %c0_48 = arith.constant 0 : index
    %78 = vector.load %arg16[%c1_46, %c0_47, %c0_48] : memref<16x8x1xf32, #tpu.memory_space<vmem>>, vector<1x8x1xf32>
    %79 = vector.shape_cast %78 : vector<1x8x1xf32> to vector<8x1xf32>
    %80 = vector.shape_cast %77 : vector<8x1xf32> to vector<1x8x1xf32>
    tpu.vector_store %arg16[%c1_46, %c0_47, %c0_48], %80 {strides = array<i32>} : memref<16x8x1xf32, #tpu.memory_space<vmem>>, vector<1x8x1xf32>,
    %c1_49 = arith.constant 1 : index
    %c0_50 = arith.constant 0 : index
    %c0_51 = arith.constant 0 : index
    %81 = vector.load %arg17[%c1_49, %c0_50, %c0_51] : memref<16x8x4xf32, #tpu.memory_space<vmem>>, vector<1x8x4xf32>
    %82 = vector.shape_cast %81 : vector<1x8x4xf32> to vector<8x4xf32>
    %83 = vector.broadcast %68 : vector<8x1xf32> to vector<8x4xf32>
    %84 = arith.mulf %83, %82 : vector<8x4xf32>
    %85 = arith.truncf %71 : vector<8x8xf32> to vector<8x8xbf16>
    %cst_52 = arith.constant dense<0.000000e+00> : vector<8x4xf32>
    %86 = tpu.matmul %85, %58, %cst_52 {dimension_numbers = #tpu.dot_dimension_numbers<[1], [0], [0], [1], [0, 0, 1, 1], [], []>} : vector<8x8xbf16>, vector<8x4xbf16>, vector<8x4xf32> -> vector<8x4xf32>
    %87 = arith.addf %84, %86 : vector<8x4xf32>
    %c1_53 = arith.constant 1 : index
    %c0_54 = arith.constant 0 : index
    %c0_55 = arith.constant 0 : index
    %88 = vector.load %arg17[%c1_53, %c0_54, %c0_55] : memref<16x8x4xf32, #tpu.memory_space<vmem>>, vector<1x8x4xf32>
    %89 = vector.shape_cast %88 : vector<1x8x4xf32> to vector<8x4xf32>
    %90 = vector.shape_cast %87 : vector<8x4xf32> to vector<1x8x4xf32>
    tpu.vector_store %arg17[%c1_53, %c0_54, %c0_55], %90 {strides = array<i32>} : memref<16x8x4xf32, #tpu.memory_space<vmem>>, vector<1x8x4xf32>,
    %c1_56 = arith.constant 1 : index
    %c0_57 = arith.constant 0 : index
    %c0_58 = arith.constant 0 : index
    %91 = vector.load %arg15[%c1_56, %c0_57, %c0_58] : memref<16x8x1xf32, #tpu.memory_space<vmem>>, vector<1x8x1xf32>
    %92 = vector.shape_cast %91 : vector<1x8x1xf32> to vector<8x1xf32>
    %93 = vector.shape_cast %66 : vector<8x1xf32> to vector<1x8x1xf32>
    tpu.vector_store %arg15[%c1_56, %c0_57, %c0_58], %93 {strides = array<i32>} : memref<16x8x1xf32, #tpu.memory_space<vmem>>, vector<1x8x1xf32>,
    %94 = vector.extract_strided_slice %17 {offsets = [0, 8], sizes = [8, 4], strides = [1, 1]} : vector<16x32xbf16> to vector<8x4xbf16>
    %95 = vector.extract_strided_slice %10 {offsets = [0, 8], sizes = [8, 4], strides = [1, 1]} : vector<16x32xbf16> to vector<8x4xbf16>
    %96 = vector.extract_strided_slice %16 {offsets = [0, 8], sizes = [8, 4], strides = [1, 1]} : vector<16x32xbf16> to vector<8x4xbf16>
    %cst_59 = arith.constant dense<0.000000e+00> : vector<8x8xf32>
    %97 = tpu.matmul %94, %95, %cst_59 {dimension_numbers = #tpu.dot_dimension_numbers<[1], [1], [0], [0], [0, 0, 1, 0], [], []>} : vector<8x4xbf16>, vector<8x4xbf16>, vector<8x8xf32> -> vector<8x8xf32>
    %cst_60 = arith.constant 5.000000e-01 : f32
    %98 = vector.broadcast %cst_60 : f32 to vector<8x8xf32>
    %99 = arith.mulf %97, %98 : vector<8x8xf32>
    %c2 = arith.constant 2 : index
    %c0_61 = arith.constant 0 : index
    %c0_62 = arith.constant 0 : index
    %100 = vector.load %arg15[%c2, %c0_61, %c0_62] : memref<16x8x1xf32, #tpu.memory_space<vmem>>, vector<1x8x1xf32>
    %101 = vector.shape_cast %100 : vector<1x8x1xf32> to vector<8x1xf32>
    %cst_63 = arith.constant dense<0xFF800000> : vector<8xf32>
    %102 = vector.multi_reduction <maximumf>, %99, %cst_63 [1] : vector<8x8xf32> to vector<8xf32>
    %103 = vector.shape_cast %102 : vector<8xf32> to vector<8x1xf32>
    %104 = arith.maximumf %101, %103 : vector<8x1xf32>
    %105 = arith.subf %101, %104 : vector<8x1xf32>
    %106 = math.exp %105 : vector<8x1xf32>
    %107 = vector.broadcast %104 : vector<8x1xf32> to vector<8x8xf32>
    %108 = arith.subf %99, %107 : vector<8x8xf32>
    %109 = math.exp %108 : vector<8x8xf32>
    %c2_64 = arith.constant 2 : index
    %c0_65 = arith.constant 0 : index
    %c0_66 = arith.constant 0 : index
    %110 = vector.load %arg16[%c2_64, %c0_65, %c0_66] : memref<16x8x1xf32, #tpu.memory_space<vmem>>, vector<1x8x1xf32>
    %111 = vector.shape_cast %110 : vector<1x8x1xf32> to vector<8x1xf32>
    %112 = arith.mulf %106, %111 : vector<8x1xf32>
    %cst_67 = arith.constant dense<0.000000e+00> : vector<8xf32>
    %113 = vector.multi_reduction <add>, %109, %cst_67 [1] : vector<8x8xf32> to vector<8xf32>
    %114 = vector.shape_cast %113 : vector<8xf32> to vector<8x1xf32>
    %115 = arith.addf %112, %114 : vector<8x1xf32>
    %c2_68 = arith.constant 2 : index
    %c0_69 = arith.constant 0 : index
    %c0_70 = arith.constant 0 : index
    %116 = vector.load %arg16[%c2_68, %c0_69, %c0_70] : memref<16x8x1xf32, #tpu.memory_space<vmem>>, vector<1x8x1xf32>
    %117 = vector.shape_cast %116 : vector<1x8x1xf32> to vector<8x1xf32>
    %118 = vector.shape_cast %115 : vector<8x1xf32> to vector<1x8x1xf32>
    tpu.vector_store %arg16[%c2_68, %c0_69, %c0_70], %118 {strides = array<i32>} : memref<16x8x1xf32, #tpu.memory_space<vmem>>, vector<1x8x1xf32>,
    %c2_71 = arith.constant 2 : index
    %c0_72 = arith.constant 0 : index
    %c0_73 = arith.constant 0 : index
    %119 = vector.load %arg17[%c2_71, %c0_72, %c0_73] : memref<16x8x4xf32, #tpu.memory_space<vmem>>, vector<1x8x4xf32>
    %120 = vector.shape_cast %119 : vector<1x8x4xf32> to vector<8x4xf32>
    %121 = vector.broadcast %106 : vector<8x1xf32> to vector<8x4xf32>
    %122 = arith.mulf %121, %120 : vector<8x4xf32>
    %123 = arith.truncf %109 : vector<8x8xf32> to vector<8x8xbf16>
    %cst_74 = arith.constant dense<0.000000e+00> : vector<8x4xf32>
    %124 = tpu.matmul %123, %96, %cst_74 {dimension_numbers = #tpu.dot_dimension_numbers<[1], [0], [0], [1], [0, 0, 1, 1], [], []>} : vector<8x8xbf16>, vector<8x4xbf16>, vector<8x4xf32> -> vector<8x4xf32>
    %125 = arith.addf %122, %124 : vector<8x4xf32>
    %c2_75 = arith.constant 2 : index
    %c0_76 = arith.constant 0 : index
    %c0_77 = arith.constant 0 : index
    %126 = vector.load %arg17[%c2_75, %c0_76, %c0_77] : memref<16x8x4xf32, #tpu.memory_space<vmem>>, vector<1x8x4xf32>
    %127 = vector.shape_cast %126 : vector<1x8x4xf32> to vector<8x4xf32>
    %128 = vector.shape_cast %125 : vector<8x4xf32> to vector<1x8x4xf32>
    tpu.vector_store %arg17[%c2_75, %c0_76, %c0_77], %128 {strides = array<i32>} : memref<16x8x4xf32, #tpu.memory_space<vmem>>, vector<1x8x4xf32>,
    %c2_78 = arith.constant 2 : index
    %c0_79 = arith.constant 0 : index
    %c0_80 = arith.constant 0 : index
    %129 = vector.load %arg15[%c2_78, %c0_79, %c0_80] : memref<16x8x1xf32, #tpu.memory_space<vmem>>, vector<1x8x1xf32>
    %130 = vector.shape_cast %129 : vector<1x8x1xf32> to vector<8x1xf32>
    %131 = vector.shape_cast %104 : vector<8x1xf32> to vector<1x8x1xf32>
    tpu.vector_store %arg15[%c2_78, %c0_79, %c0_80], %131 {strides = array<i32>} : memref<16x8x1xf32, #tpu.memory_space<vmem>>, vector<1x8x1xf32>,
    %132 = vector.extract_strided_slice %17 {offsets = [0, 12], sizes = [8, 4], strides = [1, 1]} : vector<16x32xbf16> to vector<8x4xbf16>
    %133 = vector.extract_strided_slice %10 {offsets = [0, 12], sizes = [8, 4], strides = [1, 1]} : vector<16x32xbf16> to vector<8x4xbf16>
    %134 = vector.extract_strided_slice %16 {offsets = [0, 12], sizes = [8, 4], strides = [1, 1]} : vector<16x32xbf16> to vector<8x4xbf16>
    %cst_81 = arith.constant dense<0.000000e+00> : vector<8x8xf32>
    %135 = tpu.matmul %132, %133, %cst_81 {dimension_numbers = #tpu.dot_dimension_numbers<[1], [1], [0], [0], [0, 0, 1, 0], [], []>} : vector<8x4xbf16>, vector<8x4xbf16>, vector<8x8xf32> -> vector<8x8xf32>
    %cst_82 = arith.constant 5.000000e-01 : f32
    %136 = vector.broadcast %cst_82 : f32 to vector<8x8xf32>
    %137 = arith.mulf %135, %136 : vector<8x8xf32>
    %c3 = arith.constant 3 : index
    %c0_83 = arith.constant 0 : index
    %c0_84 = arith.constant 0 : index
    %138 = vector.load %arg15[%c3, %c0_83, %c0_84] : memref<16x8x1xf32, #tpu.memory_space<vmem>>, vector<1x8x1xf32>
    %139 = vector.shape_cast %138 : vector<1x8x1xf32> to vector<8x1xf32>
    %cst_85 = arith.constant dense<0xFF800000> : vector<8xf32>
    %140 = vector.multi_reduction <maximumf>, %137, %cst_85 [1] : vector<8x8xf32> to vector<8xf32>
    %141 = vector.shape_cast %140 : vector<8xf32> to vector<8x1xf32>
    %142 = arith.maximumf %139, %141 : vector<8x1xf32>
    %143 = arith.subf %139, %142 : vector<8x1xf32>
    %144 = math.exp %143 : vector<8x1xf32>
    %145 = vector.broadcast %142 : vector<8x1xf32> to vector<8x8xf32>
    %146 = arith.subf %137, %145 : vector<8x8xf32>
    %147 = math.exp %146 : vector<8x8xf32>
    %c3_86 = arith.constant 3 : index
    %c0_87 = arith.constant 0 : index
    %c0_88 = arith.constant 0 : index
    %148 = vector.load %arg16[%c3_86, %c0_87, %c0_88] : memref<16x8x1xf32, #tpu.memory_space<vmem>>, vector<1x8x1xf32>
    %149 = vector.shape_cast %148 : vector<1x8x1xf32> to vector<8x1xf32>
    %150 = arith.mulf %144, %149 : vector<8x1xf32>
    %cst_89 = arith.constant dense<0.000000e+00> : vector<8xf32>
    %151 = vector.multi_reduction <add>, %147, %cst_89 [1] : vector<8x8xf32> to vector<8xf32>
    %152 = vector.shape_cast %151 : vector<8xf32> to vector<8x1xf32>
    %153 = arith.addf %150, %152 : vector<8x1xf32>
    %c3_90 = arith.constant 3 : index
    %c0_91 = arith.constant 0 : index
    %c0_92 = arith.constant 0 : index
    %154 = vector.load %arg16[%c3_90, %c0_91, %c0_92] : memref<16x8x1xf32, #tpu.memory_space<vmem>>, vector<1x8x1xf32>
    %155 = vector.shape_cast %154 : vector<1x8x1xf32> to vector<8x1xf32>
    %156 = vector.shape_cast %153 : vector<8x1xf32> to vector<1x8x1xf32>
    tpu.vector_store %arg16[%c3_90, %c0_91, %c0_92], %156 {strides = array<i32>} : memref<16x8x1xf32, #tpu.memory_space<vmem>>, vector<1x8x1xf32>,
    %c3_93 = arith.constant 3 : index
    %c0_94 = arith.constant 0 : index
    %c0_95 = arith.constant 0 : index
    %157 = vector.load %arg17[%c3_93, %c0_94, %c0_95] : memref<16x8x4xf32, #tpu.memory_space<vmem>>, vector<1x8x4xf32>
    %158 = vector.shape_cast %157 : vector<1x8x4xf32> to vector<8x4xf32>
    %159 = vector.broadcast %144 : vector<8x1xf32> to vector<8x4xf32>
    %160 = arith.mulf %159, %158 : vector<8x4xf32>
    %161 = arith.truncf %147 : vector<8x8xf32> to vector<8x8xbf16>
    %cst_96 = arith.constant dense<0.000000e+00> : vector<8x4xf32>
    %162 = tpu.matmul %161, %134, %cst_96 {dimension_numbers = #tpu.dot_dimension_numbers<[1], [0], [0], [1], [0, 0, 1, 1], [], []>} : vector<8x8xbf16>, vector<8x4xbf16>, vector<8x4xf32> -> vector<8x4xf32>
    %163 = arith.addf %160, %162 : vector<8x4xf32>
    %c3_97 = arith.constant 3 : index
    %c0_98 = arith.constant 0 : index
    %c0_99 = arith.constant 0 : index
    %164 = vector.load %arg17[%c3_97, %c0_98, %c0_99] : memref<16x8x4xf32, #tpu.memory_space<vmem>>, vector<1x8x4xf32>
    %165 = vector.shape_cast %164 : vector<1x8x4xf32> to vector<8x4xf32>
    %166 = vector.shape_cast %163 : vector<8x4xf32> to vector<1x8x4xf32>
    tpu.vector_store %arg17[%c3_97, %c0_98, %c0_99], %166 {strides = array<i32>} : memref<16x8x4xf32, #tpu.memory_space<vmem>>, vector<1x8x4xf32>,
    %c3_100 = arith.constant 3 : index
    %c0_101 = arith.constant 0 : index
    %c0_102 = arith.constant 0 : index
    %167 = vector.load %arg15[%c3_100, %c0_101, %c0_102] : memref<16x8x1xf32, #tpu.memory_space<vmem>>, vector<1x8x1xf32>
    %168 = vector.shape_cast %167 : vector<1x8x1xf32> to vector<8x1xf32>
    %169 = vector.shape_cast %142 : vector<8x1xf32> to vector<1x8x1xf32>
    tpu.vector_store %arg15[%c3_100, %c0_101, %c0_102], %169 {strides = array<i32>} : memref<16x8x1xf32, #tpu.memory_space<vmem>>, vector<1x8x1xf32>,
    %170 = vector.extract_strided_slice %17 {offsets = [0, 16], sizes = [8, 4], strides = [1, 1]} : vector<16x32xbf16> to vector<8x4xbf16>
    %171 = vector.extract_strided_slice %10 {offsets = [0, 16], sizes = [8, 4], strides = [1, 1]} : vector<16x32xbf16> to vector<8x4xbf16>
    %172 = vector.extract_strided_slice %16 {offsets = [0, 16], sizes = [8, 4], strides = [1, 1]} : vector<16x32xbf16> to vector<8x4xbf16>
    %cst_103 = arith.constant dense<0.000000e+00> : vector<8x8xf32>
    %173 = tpu.matmul %170, %171, %cst_103 {dimension_numbers = #tpu.dot_dimension_numbers<[1], [1], [0], [0], [0, 0, 1, 0], [], []>} : vector<8x4xbf16>, vector<8x4xbf16>, vector<8x8xf32> -> vector<8x8xf32>
    %cst_104 = arith.constant 5.000000e-01 : f32
    %174 = vector.broadcast %cst_104 : f32 to vector<8x8xf32>
    %175 = arith.mulf %173, %174 : vector<8x8xf32>
    %c4 = arith.constant 4 : index
    %c0_105 = arith.constant 0 : index
    %c0_106 = arith.constant 0 : index
    %176 = vector.load %arg15[%c4, %c0_105, %c0_106] : memref<16x8x1xf32, #tpu.memory_space<vmem>>, vector<1x8x1xf32>
    %177 = vector.shape_cast %176 : vector<1x8x1xf32> to vector<8x1xf32>
    %cst_107 = arith.constant dense<0xFF800000> : vector<8xf32>
    %178 = vector.multi_reduction <maximumf>, %175, %cst_107 [1] : vector<8x8xf32> to vector<8xf32>
    %179 = vector.shape_cast %178 : vector<8xf32> to vector<8x1xf32>
    %180 = arith.maximumf %177, %179 : vector<8x1xf32>
    %181 = arith.subf %177, %180 : vector<8x1xf32>
    %182 = math.exp %181 : vector<8x1xf32>
    %183 = vector.broadcast %180 : vector<8x1xf32> to vector<8x8xf32>
    %184 = arith.subf %175, %183 : vector<8x8xf32>
    %185 = math.exp %184 : vector<8x8xf32>
    %c4_108 = arith.constant 4 : index
    %c0_109 = arith.constant 0 : index
    %c0_110 = arith.constant 0 : index
    %186 = vector.load %arg16[%c4_108, %c0_109, %c0_110] : memref<16x8x1xf32, #tpu.memory_space<vmem>>, vector<1x8x1xf32>
    %187 = vector.shape_cast %186 : vector<1x8x1xf32> to vector<8x1xf32>
    %188 = arith.mulf %182, %187 : vector<8x1xf32>
    %cst_111 = arith.constant dense<0.000000e+00> : vector<8xf32>
    %189 = vector.multi_reduction <add>, %185, %cst_111 [1] : vector<8x8xf32> to vector<8xf32>
    %190 = vector.shape_cast %189 : vector<8xf32> to vector<8x1xf32>
    %191 = arith.addf %188, %190 : vector<8x1xf32>
    %c4_112 = arith.constant 4 : index
    %c0_113 = arith.constant 0 : index
    %c0_114 = arith.constant 0 : index
    %192 = vector.load %arg16[%c4_112, %c0_113, %c0_114] : memref<16x8x1xf32, #tpu.memory_space<vmem>>, vector<1x8x1xf32>
    %193 = vector.shape_cast %192 : vector<1x8x1xf32> to vector<8x1xf32>
    %194 = vector.shape_cast %191 : vector<8x1xf32> to vector<1x8x1xf32>
    tpu.vector_store %arg16[%c4_112, %c0_113, %c0_114], %194 {strides = array<i32>} : memref<16x8x1xf32, #tpu.memory_space<vmem>>, vector<1x8x1xf32>,
    %c4_115 = arith.constant 4 : index
    %c0_116 = arith.constant 0 : index
    %c0_117 = arith.constant 0 : index
    %195 = vector.load %arg17[%c4_115, %c0_116, %c0_117] : memref<16x8x4xf32, #tpu.memory_space<vmem>>, vector<1x8x4xf32>
    %196 = vector.shape_cast %195 : vector<1x8x4xf32> to vector<8x4xf32>
    %197 = vector.broadcast %182 : vector<8x1xf32> to vector<8x4xf32>
    %198 = arith.mulf %197, %196 : vector<8x4xf32>
    %199 = arith.truncf %185 : vector<8x8xf32> to vector<8x8xbf16>
    %cst_118 = arith.constant dense<0.000000e+00> : vector<8x4xf32>
    %200 = tpu.matmul %199, %172, %cst_118 {dimension_numbers = #tpu.dot_dimension_numbers<[1], [0], [0], [1], [0, 0, 1, 1], [], []>} : vector<8x8xbf16>, vector<8x4xbf16>, vector<8x4xf32> -> vector<8x4xf32>
    %201 = arith.addf %198, %200 : vector<8x4xf32>
    %c4_119 = arith.constant 4 : index
    %c0_120 = arith.constant 0 : index
    %c0_121 = arith.constant 0 : index
    %202 = vector.load %arg17[%c4_119, %c0_120, %c0_121] : memref<16x8x4xf32, #tpu.memory_space<vmem>>, vector<1x8x4xf32>
    %203 = vector.shape_cast %202 : vector<1x8x4xf32> to vector<8x4xf32>
    %204 = vector.shape_cast %201 : vector<8x4xf32> to vector<1x8x4xf32>
    tpu.vector_store %arg17[%c4_119, %c0_120, %c0_121], %204 {strides = array<i32>} : memref<16x8x4xf32, #tpu.memory_space<vmem>>, vector<1x8x4xf32>,
    %c4_122 = arith.constant 4 : index
    %c0_123 = arith.constant 0 : index
    %c0_124 = arith.constant 0 : index
    %205 = vector.load %arg15[%c4_122, %c0_123, %c0_124] : memref<16x8x1xf32, #tpu.memory_space<vmem>>, vector<1x8x1xf32>
    %206 = vector.shape_cast %205 : vector<1x8x1xf32> to vector<8x1xf32>
    %207 = vector.shape_cast %180 : vector<8x1xf32> to vector<1x8x1xf32>
    tpu.vector_store %arg15[%c4_122, %c0_123, %c0_124], %207 {strides = array<i32>} : memref<16x8x1xf32, #tpu.memory_space<vmem>>, vector<1x8x1xf32>,
    %208 = vector.extract_strided_slice %17 {offsets = [0, 20], sizes = [8, 4], strides = [1, 1]} : vector<16x32xbf16> to vector<8x4xbf16>
    %209 = vector.extract_strided_slice %10 {offsets = [0, 20], sizes = [8, 4], strides = [1, 1]} : vector<16x32xbf16> to vector<8x4xbf16>
    %210 = vector.extract_strided_slice %16 {offsets = [0, 20], sizes = [8, 4], strides = [1, 1]} : vector<16x32xbf16> to vector<8x4xbf16>
    %cst_125 = arith.constant dense<0.000000e+00> : vector<8x8xf32>
    %211 = tpu.matmul %208, %209, %cst_125 {dimension_numbers = #tpu.dot_dimension_numbers<[1], [1], [0], [0], [0, 0, 1, 0], [], []>} : vector<8x4xbf16>, vector<8x4xbf16>, vector<8x8xf32> -> vector<8x8xf32>
    %cst_126 = arith.constant 5.000000e-01 : f32
    %212 = vector.broadcast %cst_126 : f32 to vector<8x8xf32>
    %213 = arith.mulf %211, %212 : vector<8x8xf32>
    %c5 = arith.constant 5 : index
    %c0_127 = arith.constant 0 : index
    %c0_128 = arith.constant 0 : index
    %214 = vector.load %arg15[%c5, %c0_127, %c0_128] : memref<16x8x1xf32, #tpu.memory_space<vmem>>, vector<1x8x1xf32>
    %215 = vector.shape_cast %214 : vector<1x8x1xf32> to vector<8x1xf32>
    %cst_129 = arith.constant dense<0xFF800000> : vector<8xf32>
    %216 = vector.multi_reduction <maximumf>, %213, %cst_129 [1] : vector<8x8xf32> to vector<8xf32>
    %217 = vector.shape_cast %216 : vector<8xf32> to vector<8x1xf32>
    %218 = arith.maximumf %215, %217 : vector<8x1xf32>
    %219 = arith.subf %215, %218 : vector<8x1xf32>
    %220 = math.exp %219 : vector<8x1xf32>
    %221 = vector.broadcast %218 : vector<8x1xf32> to vector<8x8xf32>
    %222 = arith.subf %213, %221 : vector<8x8xf32>
    %223 = math.exp %222 : vector<8x8xf32>
    %c5_130 = arith.constant 5 : index
    %c0_131 = arith.constant 0 : index
    %c0_132 = arith.constant 0 : index
    %224 = vector.load %arg16[%c5_130, %c0_131, %c0_132] : memref<16x8x1xf32, #tpu.memory_space<vmem>>, vector<1x8x1xf32>
    %225 = vector.shape_cast %224 : vector<1x8x1xf32> to vector<8x1xf32>
    %226 = arith.mulf %220, %225 : vector<8x1xf32>
    %cst_133 = arith.constant dense<0.000000e+00> : vector<8xf32>
    %227 = vector.multi_reduction <add>, %223, %cst_133 [1] : vector<8x8xf32> to vector<8xf32>
    %228 = vector.shape_cast %227 : vector<8xf32> to vector<8x1xf32>
    %229 = arith.addf %226, %228 : vector<8x1xf32>
    %c5_134 = arith.constant 5 : index
    %c0_135 = arith.constant 0 : index
    %c0_136 = arith.constant 0 : index
    %230 = vector.load %arg16[%c5_134, %c0_135, %c0_136] : memref<16x8x1xf32, #tpu.memory_space<vmem>>, vector<1x8x1xf32>
    %231 = vector.shape_cast %230 : vector<1x8x1xf32> to vector<8x1xf32>
    %232 = vector.shape_cast %229 : vector<8x1xf32> to vector<1x8x1xf32>
    tpu.vector_store %arg16[%c5_134, %c0_135, %c0_136], %232 {strides = array<i32>} : memref<16x8x1xf32, #tpu.memory_space<vmem>>, vector<1x8x1xf32>,
    %c5_137 = arith.constant 5 : index
    %c0_138 = arith.constant 0 : index
    %c0_139 = arith.constant 0 : index
    %233 = vector.load %arg17[%c5_137, %c0_138, %c0_139] : memref<16x8x4xf32, #tpu.memory_space<vmem>>, vector<1x8x4xf32>
    %234 = vector.shape_cast %233 : vector<1x8x4xf32> to vector<8x4xf32>
    %235 = vector.broadcast %220 : vector<8x1xf32> to vector<8x4xf32>
    %236 = arith.mulf %235, %234 : vector<8x4xf32>
    %237 = arith.truncf %223 : vector<8x8xf32> to vector<8x8xbf16>
    %cst_140 = arith.constant dense<0.000000e+00> : vector<8x4xf32>
    %238 = tpu.matmul %237, %210, %cst_140 {dimension_numbers = #tpu.dot_dimension_numbers<[1], [0], [0], [1], [0, 0, 1, 1], [], []>} : vector<8x8xbf16>, vector<8x4xbf16>, vector<8x4xf32> -> vector<8x4xf32>
    %239 = arith.addf %236, %238 : vector<8x4xf32>
    %c5_141 = arith.constant 5 : index
    %c0_142 = arith.constant 0 : index
    %c0_143 = arith.constant 0 : index
    %240 = vector.load %arg17[%c5_141, %c0_142, %c0_143] : memref<16x8x4xf32, #tpu.memory_space<vmem>>, vector<1x8x4xf32>
    %241 = vector.shape_cast %240 : vector<1x8x4xf32> to vector<8x4xf32>
    %242 = vector.shape_cast %239 : vector<8x4xf32> to vector<1x8x4xf32>
    tpu.vector_store %arg17[%c5_141, %c0_142, %c0_143], %242 {strides = array<i32>} : memref<16x8x4xf32, #tpu.memory_space<vmem>>, vector<1x8x4xf32>,
    %c5_144 = arith.constant 5 : index
    %c0_145 = arith.constant 0 : index
    %c0_146 = arith.constant 0 : index
    %243 = vector.load %arg15[%c5_144, %c0_145, %c0_146] : memref<16x8x1xf32, #tpu.memory_space<vmem>>, vector<1x8x1xf32>
    %244 = vector.shape_cast %243 : vector<1x8x1xf32> to vector<8x1xf32>
    %245 = vector.shape_cast %218 : vector<8x1xf32> to vector<1x8x1xf32>
    tpu.vector_store %arg15[%c5_144, %c0_145, %c0_146], %245 {strides = array<i32>} : memref<16x8x1xf32, #tpu.memory_space<vmem>>, vector<1x8x1xf32>,
    %246 = vector.extract_strided_slice %17 {offsets = [0, 24], sizes = [8, 4], strides = [1, 1]} : vector<16x32xbf16> to vector<8x4xbf16>
    %247 = vector.extract_strided_slice %10 {offsets = [0, 24], sizes = [8, 4], strides = [1, 1]} : vector<16x32xbf16> to vector<8x4xbf16>
    %248 = vector.extract_strided_slice %16 {offsets = [0, 24], sizes = [8, 4], strides = [1, 1]} : vector<16x32xbf16> to vector<8x4xbf16>
    %cst_147 = arith.constant dense<0.000000e+00> : vector<8x8xf32>
    %249 = tpu.matmul %246, %247, %cst_147 {dimension_numbers = #tpu.dot_dimension_numbers<[1], [1], [0], [0], [0, 0, 1, 0], [], []>} : vector<8x4xbf16>, vector<8x4xbf16>, vector<8x8xf32> -> vector<8x8xf32>
    %cst_148 = arith.constant 5.000000e-01 : f32
    %250 = vector.broadcast %cst_148 : f32 to vector<8x8xf32>
    %251 = arith.mulf %249, %250 : vector<8x8xf32>
    %c6 = arith.constant 6 : index
    %c0_149 = arith.constant 0 : index
    %c0_150 = arith.constant 0 : index
    %252 = vector.load %arg15[%c6, %c0_149, %c0_150] : memref<16x8x1xf32, #tpu.memory_space<vmem>>, vector<1x8x1xf32>
    %253 = vector.shape_cast %252 : vector<1x8x1xf32> to vector<8x1xf32>
    %cst_151 = arith.constant dense<0xFF800000> : vector<8xf32>
    %254 = vector.multi_reduction <maximumf>, %251, %cst_151 [1] : vector<8x8xf32> to vector<8xf32>
    %255 = vector.shape_cast %254 : vector<8xf32> to vector<8x1xf32>
    %256 = arith.maximumf %253, %255 : vector<8x1xf32>
    %257 = arith.subf %253, %256 : vector<8x1xf32>
    %258 = math.exp %257 : vector<8x1xf32>
    %259 = vector.broadcast %256 : vector<8x1xf32> to vector<8x8xf32>
    %260 = arith.subf %251, %259 : vector<8x8xf32>
    %261 = math.exp %260 : vector<8x8xf32>
    %c6_152 = arith.constant 6 : index
    %c0_153 = arith.constant 0 : index
    %c0_154 = arith.constant 0 : index
    %262 = vector.load %arg16[%c6_152, %c0_153, %c0_154] : memref<16x8x1xf32, #tpu.memory_space<vmem>>, vector<1x8x1xf32>
    %263 = vector.shape_cast %262 : vector<1x8x1xf32> to vector<8x1xf32>
    %264 = arith.mulf %258, %263 : vector<8x1xf32>
    %cst_155 = arith.constant dense<0.000000e+00> : vector<8xf32>
    %265 = vector.multi_reduction <add>, %261, %cst_155 [1] : vector<8x8xf32> to vector<8xf32>
    %266 = vector.shape_cast %265 : vector<8xf32> to vector<8x1xf32>
    %267 = arith.addf %264, %266 : vector<8x1xf32>
    %c6_156 = arith.constant 6 : index
    %c0_157 = arith.constant 0 : index
    %c0_158 = arith.constant 0 : index
    %268 = vector.load %arg16[%c6_156, %c0_157, %c0_158] : memref<16x8x1xf32, #tpu.memory_space<vmem>>, vector<1x8x1xf32>
    %269 = vector.shape_cast %268 : vector<1x8x1xf32> to vector<8x1xf32>
    %270 = vector.shape_cast %267 : vector<8x1xf32> to vector<1x8x1xf32>
    tpu.vector_store %arg16[%c6_156, %c0_157, %c0_158], %270 {strides = array<i32>} : memref<16x8x1xf32, #tpu.memory_space<vmem>>, vector<1x8x1xf32>,
    %c6_159 = arith.constant 6 : index
    %c0_160 = arith.constant 0 : index
    %c0_161 = arith.constant 0 : index
    %271 = vector.load %arg17[%c6_159, %c0_160, %c0_161] : memref<16x8x4xf32, #tpu.memory_space<vmem>>, vector<1x8x4xf32>
    %272 = vector.shape_cast %271 : vector<1x8x4xf32> to vector<8x4xf32>
    %273 = vector.broadcast %258 : vector<8x1xf32> to vector<8x4xf32>
    %274 = arith.mulf %273, %272 : vector<8x4xf32>
    %275 = arith.truncf %261 : vector<8x8xf32> to vector<8x8xbf16>
    %cst_162 = arith.constant dense<0.000000e+00> : vector<8x4xf32>
    %276 = tpu.matmul %275, %248, %cst_162 {dimension_numbers = #tpu.dot_dimension_numbers<[1], [0], [0], [1], [0, 0, 1, 1], [], []>} : vector<8x8xbf16>, vector<8x4xbf16>, vector<8x4xf32> -> vector<8x4xf32>
    %277 = arith.addf %274, %276 : vector<8x4xf32>
    %c6_163 = arith.constant 6 : index
    %c0_164 = arith.constant 0 : index
    %c0_165 = arith.constant 0 : index
    %278 = vector.load %arg17[%c6_163, %c0_164, %c0_165] : memref<16x8x4xf32, #tpu.memory_space<vmem>>, vector<1x8x4xf32>
    %279 = vector.shape_cast %278 : vector<1x8x4xf32> to vector<8x4xf32>
    %280 = vector.shape_cast %277 : vector<8x4xf32> to vector<1x8x4xf32>
    tpu.vector_store %arg17[%c6_163, %c0_164, %c0_165], %280 {strides = array<i32>} : memref<16x8x4xf32, #tpu.memory_space<vmem>>, vector<1x8x4xf32>,
    %c6_166 = arith.constant 6 : index
    %c0_167 = arith.constant 0 : index
    %c0_168 = arith.constant 0 : index
    %281 = vector.load %arg15[%c6_166, %c0_167, %c0_168] : memref<16x8x1xf32, #tpu.memory_space<vmem>>, vector<1x8x1xf32>
    %282 = vector.shape_cast %281 : vector<1x8x1xf32> to vector<8x1xf32>
    %283 = vector.shape_cast %256 : vector<8x1xf32> to vector<1x8x1xf32>
    tpu.vector_store %arg15[%c6_166, %c0_167, %c0_168], %283 {strides = array<i32>} : memref<16x8x1xf32, #tpu.memory_space<vmem>>, vector<1x8x1xf32>,
    %284 = vector.extract_strided_slice %17 {offsets = [0, 28], sizes = [8, 4], strides = [1, 1]} : vector<16x32xbf16> to vector<8x4xbf16>
    %285 = vector.extract_strided_slice %10 {offsets = [0, 28], sizes = [8, 4], strides = [1, 1]} : vector<16x32xbf16> to vector<8x4xbf16>
    %286 = vector.extract_strided_slice %16 {offsets = [0, 28], sizes = [8, 4], strides = [1, 1]} : vector<16x32xbf16> to vector<8x4xbf16>
    %cst_169 = arith.constant dense<0.000000e+00> : vector<8x8xf32>
    %287 = tpu.matmul %284, %285, %cst_169 {dimension_numbers = #tpu.dot_dimension_numbers<[1], [1], [0], [0], [0, 0, 1, 0], [], []>} : vector<8x4xbf16>, vector<8x4xbf16>, vector<8x8xf32> -> vector<8x8xf32>
    %cst_170 = arith.constant 5.000000e-01 : f32
    %288 = vector.broadcast %cst_170 : f32 to vector<8x8xf32>
    %289 = arith.mulf %287, %288 : vector<8x8xf32>
    %c7 = arith.constant 7 : index
    %c0_171 = arith.constant 0 : index
    %c0_172 = arith.constant 0 : index
    %290 = vector.load %arg15[%c7, %c0_171, %c0_172] : memref<16x8x1xf32, #tpu.memory_space<vmem>>, vector<1x8x1xf32>
    %291 = vector.shape_cast %290 : vector<1x8x1xf32> to vector<8x1xf32>
    %cst_173 = arith.constant dense<0xFF800000> : vector<8xf32>
    %292 = vector.multi_reduction <maximumf>, %289, %cst_173 [1] : vector<8x8xf32> to vector<8xf32>
    %293 = vector.shape_cast %292 : vector<8xf32> to vector<8x1xf32>
    %294 = arith.maximumf %291, %293 : vector<8x1xf32>
    %295 = arith.subf %291, %294 : vector<8x1xf32>
    %296 = math.exp %295 : vector<8x1xf32>
    %297 = vector.broadcast %294 : vector<8x1xf32> to vector<8x8xf32>
    %298 = arith.subf %289, %297 : vector<8x8xf32>
    %299 = math.exp %298 : vector<8x8xf32>
    %c7_174 = arith.constant 7 : index
    %c0_175 = arith.constant 0 : index
    %c0_176 = arith.constant 0 : index
    %300 = vector.load %arg16[%c7_174, %c0_175, %c0_176] : memref<16x8x1xf32, #tpu.memory_space<vmem>>, vector<1x8x1xf32>
    %301 = vector.shape_cast %300 : vector<1x8x1xf32> to vector<8x1xf32>
    %302 = arith.mulf %296, %301 : vector<8x1xf32>
    %cst_177 = arith.constant dense<0.000000e+00> : vector<8xf32>
    %303 = vector.multi_reduction <add>, %299, %cst_177 [1] : vector<8x8xf32> to vector<8xf32>
    %304 = vector.shape_cast %303 : vector<8xf32> to vector<8x1xf32>
    %305 = arith.addf %302, %304 : vector<8x1xf32>
    %c7_178 = arith.constant 7 : index
    %c0_179 = arith.constant 0 : index
    %c0_180 = arith.constant 0 : index
    %306 = vector.load %arg16[%c7_178, %c0_179, %c0_180] : memref<16x8x1xf32, #tpu.memory_space<vmem>>, vector<1x8x1xf32>
    %307 = vector.shape_cast %306 : vector<1x8x1xf32> to vector<8x1xf32>
    %308 = vector.shape_cast %305 : vector<8x1xf32> to vector<1x8x1xf32>
    tpu.vector_store %arg16[%c7_178, %c0_179, %c0_180], %308 {strides = array<i32>} : memref<16x8x1xf32, #tpu.memory_space<vmem>>, vector<1x8x1xf32>,
    %c7_181 = arith.constant 7 : index
    %c0_182 = arith.constant 0 : index
    %c0_183 = arith.constant 0 : index
    %309 = vector.load %arg17[%c7_181, %c0_182, %c0_183] : memref<16x8x4xf32, #tpu.memory_space<vmem>>, vector<1x8x4xf32>
    %310 = vector.shape_cast %309 : vector<1x8x4xf32> to vector<8x4xf32>
    %311 = vector.broadcast %296 : vector<8x1xf32> to vector<8x4xf32>
    %312 = arith.mulf %311, %310 : vector<8x4xf32>
    %313 = arith.truncf %299 : vector<8x8xf32> to vector<8x8xbf16>
    %cst_184 = arith.constant dense<0.000000e+00> : vector<8x4xf32>
    %314 = tpu.matmul %313, %286, %cst_184 {dimension_numbers = #tpu.dot_dimension_numbers<[1], [0], [0], [1], [0, 0, 1, 1], [], []>} : vector<8x8xbf16>, vector<8x4xbf16>, vector<8x4xf32> -> vector<8x4xf32>
    %315 = arith.addf %312, %314 : vector<8x4xf32>
    %c7_185 = arith.constant 7 : index
    %c0_186 = arith.constant 0 : index
    %c0_187 = arith.constant 0 : index
    %316 = vector.load %arg17[%c7_185, %c0_186, %c0_187] : memref<16x8x4xf32, #tpu.memory_space<vmem>>, vector<1x8x4xf32>
    %317 = vector.shape_cast %316 : vector<1x8x4xf32> to vector<8x4xf32>
    %318 = vector.shape_cast %315 : vector<8x4xf32> to vector<1x8x4xf32>
    tpu.vector_store %arg17[%c7_185, %c0_186, %c0_187], %318 {strides = array<i32>} : memref<16x8x4xf32, #tpu.memory_space<vmem>>, vector<1x8x4xf32>,
    %c7_188 = arith.constant 7 : index
    %c0_189 = arith.constant 0 : index
    %c0_190 = arith.constant 0 : index
    %319 = vector.load %arg15[%c7_188, %c0_189, %c0_190] : memref<16x8x1xf32, #tpu.memory_space<vmem>>, vector<1x8x1xf32>
    %320 = vector.shape_cast %319 : vector<1x8x1xf32> to vector<8x1xf32>
    %321 = vector.shape_cast %294 : vector<8x1xf32> to vector<1x8x1xf32>
    tpu.vector_store %arg15[%c7_188, %c0_189, %c0_190], %321 {strides = array<i32>} : memref<16x8x1xf32, #tpu.memory_space<vmem>>, vector<1x8x1xf32>,
    %322 = vector.extract_strided_slice %17 {offsets = [8, 0], sizes = [8, 4], strides = [1, 1]} : vector<16x32xbf16> to vector<8x4xbf16>
    %323 = vector.extract_strided_slice %10 {offsets = [8, 0], sizes = [8, 4], strides = [1, 1]} : vector<16x32xbf16> to vector<8x4xbf16>
    %324 = vector.extract_strided_slice %16 {offsets = [8, 0], sizes = [8, 4], strides = [1, 1]} : vector<16x32xbf16> to vector<8x4xbf16>
    %cst_191 = arith.constant dense<0.000000e+00> : vector<8x8xf32>
    %325 = tpu.matmul %322, %323, %cst_191 {dimension_numbers = #tpu.dot_dimension_numbers<[1], [1], [0], [0], [0, 0, 1, 0], [], []>} : vector<8x4xbf16>, vector<8x4xbf16>, vector<8x8xf32> -> vector<8x8xf32>
    %cst_192 = arith.constant 5.000000e-01 : f32
    %326 = vector.broadcast %cst_192 : f32 to vector<8x8xf32>
    %327 = arith.mulf %325, %326 : vector<8x8xf32>
    %c8 = arith.constant 8 : index
    %c0_193 = arith.constant 0 : index
    %c0_194 = arith.constant 0 : index
    %328 = vector.load %arg15[%c8, %c0_193, %c0_194] : memref<16x8x1xf32, #tpu.memory_space<vmem>>, vector<1x8x1xf32>
    %329 = vector.shape_cast %328 : vector<1x8x1xf32> to vector<8x1xf32>
    %cst_195 = arith.constant dense<0xFF800000> : vector<8xf32>
    %330 = vector.multi_reduction <maximumf>, %327, %cst_195 [1] : vector<8x8xf32> to vector<8xf32>
    %331 = vector.shape_cast %330 : vector<8xf32> to vector<8x1xf32>
    %332 = arith.maximumf %329, %331 : vector<8x1xf32>
    %333 = arith.subf %329, %332 : vector<8x1xf32>
    %334 = math.exp %333 : vector<8x1xf32>
    %335 = vector.broadcast %332 : vector<8x1xf32> to vector<8x8xf32>
    %336 = arith.subf %327, %335 : vector<8x8xf32>
    %337 = math.exp %336 : vector<8x8xf32>
    %c8_196 = arith.constant 8 : index
    %c0_197 = arith.constant 0 : index
    %c0_198 = arith.constant 0 : index
    %338 = vector.load %arg16[%c8_196, %c0_197, %c0_198] : memref<16x8x1xf32, #tpu.memory_space<vmem>>, vector<1x8x1xf32>
    %339 = vector.shape_cast %338 : vector<1x8x1xf32> to vector<8x1xf32>
    %340 = arith.mulf %334, %339 : vector<8x1xf32>
    %cst_199 = arith.constant dense<0.000000e+00> : vector<8xf32>
    %341 = vector.multi_reduction <add>, %337, %cst_199 [1] : vector<8x8xf32> to vector<8xf32>
    %342 = vector.shape_cast %341 : vector<8xf32> to vector<8x1xf32>
    %343 = arith.addf %340, %342 : vector<8x1xf32>
    %c8_200 = arith.constant 8 : index
    %c0_201 = arith.constant 0 : index
    %c0_202 = arith.constant 0 : index
    %344 = vector.load %arg16[%c8_200, %c0_201, %c0_202] : memref<16x8x1xf32, #tpu.memory_space<vmem>>, vector<1x8x1xf32>
    %345 = vector.shape_cast %344 : vector<1x8x1xf32> to vector<8x1xf32>
    %346 = vector.shape_cast %343 : vector<8x1xf32> to vector<1x8x1xf32>
    tpu.vector_store %arg16[%c8_200, %c0_201, %c0_202], %346 {strides = array<i32>} : memref<16x8x1xf32, #tpu.memory_space<vmem>>, vector<1x8x1xf32>,
    %c8_203 = arith.constant 8 : index
    %c0_204 = arith.constant 0 : index
    %c0_205 = arith.constant 0 : index
    %347 = vector.load %arg17[%c8_203, %c0_204, %c0_205] : memref<16x8x4xf32, #tpu.memory_space<vmem>>, vector<1x8x4xf32>
    %348 = vector.shape_cast %347 : vector<1x8x4xf32> to vector<8x4xf32>
    %349 = vector.broadcast %334 : vector<8x1xf32> to vector<8x4xf32>
    %350 = arith.mulf %349, %348 : vector<8x4xf32>
    %351 = arith.truncf %337 : vector<8x8xf32> to vector<8x8xbf16>
    %cst_206 = arith.constant dense<0.000000e+00> : vector<8x4xf32>
    %352 = tpu.matmul %351, %324, %cst_206 {dimension_numbers = #tpu.dot_dimension_numbers<[1], [0], [0], [1], [0, 0, 1, 1], [], []>} : vector<8x8xbf16>, vector<8x4xbf16>, vector<8x4xf32> -> vector<8x4xf32>
    %353 = arith.addf %350, %352 : vector<8x4xf32>
    %c8_207 = arith.constant 8 : index
    %c0_208 = arith.constant 0 : index
    %c0_209 = arith.constant 0 : index
    %354 = vector.load %arg17[%c8_207, %c0_208, %c0_209] : memref<16x8x4xf32, #tpu.memory_space<vmem>>, vector<1x8x4xf32>
    %355 = vector.shape_cast %354 : vector<1x8x4xf32> to vector<8x4xf32>
    %356 = vector.shape_cast %353 : vector<8x4xf32> to vector<1x8x4xf32>
    tpu.vector_store %arg17[%c8_207, %c0_208, %c0_209], %356 {strides = array<i32>} : memref<16x8x4xf32, #tpu.memory_space<vmem>>, vector<1x8x4xf32>,
    %c8_210 = arith.constant 8 : index
    %c0_211 = arith.constant 0 : index
    %c0_212 = arith.constant 0 : index
    %357 = vector.load %arg15[%c8_210, %c0_211, %c0_212] : memref<16x8x1xf32, #tpu.memory_space<vmem>>, vector<1x8x1xf32>
    %358 = vector.shape_cast %357 : vector<1x8x1xf32> to vector<8x1xf32>
    %359 = vector.shape_cast %332 : vector<8x1xf32> to vector<1x8x1xf32>
    tpu.vector_store %arg15[%c8_210, %c0_211, %c0_212], %359 {strides = array<i32>} : memref<16x8x1xf32, #tpu.memory_space<vmem>>, vector<1x8x1xf32>,
    %360 = vector.extract_strided_slice %17 {offsets = [8, 4], sizes = [8, 4], strides = [1, 1]} : vector<16x32xbf16> to vector<8x4xbf16>
    %361 = vector.extract_strided_slice %10 {offsets = [8, 4], sizes = [8, 4], strides = [1, 1]} : vector<16x32xbf16> to vector<8x4xbf16>
    %362 = vector.extract_strided_slice %16 {offsets = [8, 4], sizes = [8, 4], strides = [1, 1]} : vector<16x32xbf16> to vector<8x4xbf16>
    %cst_213 = arith.constant dense<0.000000e+00> : vector<8x8xf32>
    %363 = tpu.matmul %360, %361, %cst_213 {dimension_numbers = #tpu.dot_dimension_numbers<[1], [1], [0], [0], [0, 0, 1, 0], [], []>} : vector<8x4xbf16>, vector<8x4xbf16>, vector<8x8xf32> -> vector<8x8xf32>
    %cst_214 = arith.constant 5.000000e-01 : f32
    %364 = vector.broadcast %cst_214 : f32 to vector<8x8xf32>
    %365 = arith.mulf %363, %364 : vector<8x8xf32>
    %c9 = arith.constant 9 : index
    %c0_215 = arith.constant 0 : index
    %c0_216 = arith.constant 0 : index
    %366 = vector.load %arg15[%c9, %c0_215, %c0_216] : memref<16x8x1xf32, #tpu.memory_space<vmem>>, vector<1x8x1xf32>
    %367 = vector.shape_cast %366 : vector<1x8x1xf32> to vector<8x1xf32>
    %cst_217 = arith.constant dense<0xFF800000> : vector<8xf32>
    %368 = vector.multi_reduction <maximumf>, %365, %cst_217 [1] : vector<8x8xf32> to vector<8xf32>
    %369 = vector.shape_cast %368 : vector<8xf32> to vector<8x1xf32>
    %370 = arith.maximumf %367, %369 : vector<8x1xf32>
    %371 = arith.subf %367, %370 : vector<8x1xf32>
    %372 = math.exp %371 : vector<8x1xf32>
    %373 = vector.broadcast %370 : vector<8x1xf32> to vector<8x8xf32>
    %374 = arith.subf %365, %373 : vector<8x8xf32>
    %375 = math.exp %374 : vector<8x8xf32>
    %c9_218 = arith.constant 9 : index
    %c0_219 = arith.constant 0 : index
    %c0_220 = arith.constant 0 : index
    %376 = vector.load %arg16[%c9_218, %c0_219, %c0_220] : memref<16x8x1xf32, #tpu.memory_space<vmem>>, vector<1x8x1xf32>
    %377 = vector.shape_cast %376 : vector<1x8x1xf32> to vector<8x1xf32>
    %378 = arith.mulf %372, %377 : vector<8x1xf32>
    %cst_221 = arith.constant dense<0.000000e+00> : vector<8xf32>
    %379 = vector.multi_reduction <add>, %375, %cst_221 [1] : vector<8x8xf32> to vector<8xf32>
    %380 = vector.shape_cast %379 : vector<8xf32> to vector<8x1xf32>
    %381 = arith.addf %378, %380 : vector<8x1xf32>
    %c9_222 = arith.constant 9 : index
    %c0_223 = arith.constant 0 : index
    %c0_224 = arith.constant 0 : index
    %382 = vector.load %arg16[%c9_222, %c0_223, %c0_224] : memref<16x8x1xf32, #tpu.memory_space<vmem>>, vector<1x8x1xf32>
    %383 = vector.shape_cast %382 : vector<1x8x1xf32> to vector<8x1xf32>
    %384 = vector.shape_cast %381 : vector<8x1xf32> to vector<1x8x1xf32>
    tpu.vector_store %arg16[%c9_222, %c0_223, %c0_224], %384 {strides = array<i32>} : memref<16x8x1xf32, #tpu.memory_space<vmem>>, vector<1x8x1xf32>,
    %c9_225 = arith.constant 9 : index
    %c0_226 = arith.constant 0 : index
    %c0_227 = arith.constant 0 : index
    %385 = vector.load %arg17[%c9_225, %c0_226, %c0_227] : memref<16x8x4xf32, #tpu.memory_space<vmem>>, vector<1x8x4xf32>
    %386 = vector.shape_cast %385 : vector<1x8x4xf32> to vector<8x4xf32>
    %387 = vector.broadcast %372 : vector<8x1xf32> to vector<8x4xf32>
    %388 = arith.mulf %387, %386 : vector<8x4xf32>
    %389 = arith.truncf %375 : vector<8x8xf32> to vector<8x8xbf16>
    %cst_228 = arith.constant dense<0.000000e+00> : vector<8x4xf32>
    %390 = tpu.matmul %389, %362, %cst_228 {dimension_numbers = #tpu.dot_dimension_numbers<[1], [0], [0], [1], [0, 0, 1, 1], [], []>} : vector<8x8xbf16>, vector<8x4xbf16>, vector<8x4xf32> -> vector<8x4xf32>
    %391 = arith.addf %388, %390 : vector<8x4xf32>
    %c9_229 = arith.constant 9 : index
    %c0_230 = arith.constant 0 : index
    %c0_231 = arith.constant 0 : index
    %392 = vector.load %arg17[%c9_229, %c0_230, %c0_231] : memref<16x8x4xf32, #tpu.memory_space<vmem>>, vector<1x8x4xf32>
    %393 = vector.shape_cast %392 : vector<1x8x4xf32> to vector<8x4xf32>
    %394 = vector.shape_cast %391 : vector<8x4xf32> to vector<1x8x4xf32>
    tpu.vector_store %arg17[%c9_229, %c0_230, %c0_231], %394 {strides = array<i32>} : memref<16x8x4xf32, #tpu.memory_space<vmem>>, vector<1x8x4xf32>,
    %c9_232 = arith.constant 9 : index
    %c0_233 = arith.constant 0 : index
    %c0_234 = arith.constant 0 : index
    %395 = vector.load %arg15[%c9_232, %c0_233, %c0_234] : memref<16x8x1xf32, #tpu.memory_space<vmem>>, vector<1x8x1xf32>
    %396 = vector.shape_cast %395 : vector<1x8x1xf32> to vector<8x1xf32>
    %397 = vector.shape_cast %370 : vector<8x1xf32> to vector<1x8x1xf32>
    tpu.vector_store %arg15[%c9_232, %c0_233, %c0_234], %397 {strides = array<i32>} : memref<16x8x1xf32, #tpu.memory_space<vmem>>, vector<1x8x1xf32>,
    %398 = vector.extract_strided_slice %17 {offsets = [8, 8], sizes = [8, 4], strides = [1, 1]} : vector<16x32xbf16> to vector<8x4xbf16>
    %399 = vector.extract_strided_slice %10 {offsets = [8, 8], sizes = [8, 4], strides = [1, 1]} : vector<16x32xbf16> to vector<8x4xbf16>
    %400 = vector.extract_strided_slice %16 {offsets = [8, 8], sizes = [8, 4], strides = [1, 1]} : vector<16x32xbf16> to vector<8x4xbf16>
    %cst_235 = arith.constant dense<0.000000e+00> : vector<8x8xf32>
    %401 = tpu.matmul %398, %399, %cst_235 {dimension_numbers = #tpu.dot_dimension_numbers<[1], [1], [0], [0], [0, 0, 1, 0], [], []>} : vector<8x4xbf16>, vector<8x4xbf16>, vector<8x8xf32> -> vector<8x8xf32>
    %cst_236 = arith.constant 5.000000e-01 : f32
    %402 = vector.broadcast %cst_236 : f32 to vector<8x8xf32>
    %403 = arith.mulf %401, %402 : vector<8x8xf32>
    %c10 = arith.constant 10 : index
    %c0_237 = arith.constant 0 : index
    %c0_238 = arith.constant 0 : index
    %404 = vector.load %arg15[%c10, %c0_237, %c0_238] : memref<16x8x1xf32, #tpu.memory_space<vmem>>, vector<1x8x1xf32>
    %405 = vector.shape_cast %404 : vector<1x8x1xf32> to vector<8x1xf32>
    %cst_239 = arith.constant dense<0xFF800000> : vector<8xf32>
    %406 = vector.multi_reduction <maximumf>, %403, %cst_239 [1] : vector<8x8xf32> to vector<8xf32>
    %407 = vector.shape_cast %406 : vector<8xf32> to vector<8x1xf32>
    %408 = arith.maximumf %405, %407 : vector<8x1xf32>
    %409 = arith.subf %405, %408 : vector<8x1xf32>
    %410 = math.exp %409 : vector<8x1xf32>
    %411 = vector.broadcast %408 : vector<8x1xf32> to vector<8x8xf32>
    %412 = arith.subf %403, %411 : vector<8x8xf32>
    %413 = math.exp %412 : vector<8x8xf32>
    %c10_240 = arith.constant 10 : index
    %c0_241 = arith.constant 0 : index
    %c0_242 = arith.constant 0 : index
    %414 = vector.load %arg16[%c10_240, %c0_241, %c0_242] : memref<16x8x1xf32, #tpu.memory_space<vmem>>, vector<1x8x1xf32>
    %415 = vector.shape_cast %414 : vector<1x8x1xf32> to vector<8x1xf32>
    %416 = arith.mulf %410, %415 : vector<8x1xf32>
    %cst_243 = arith.constant dense<0.000000e+00> : vector<8xf32>
    %417 = vector.multi_reduction <add>, %413, %cst_243 [1] : vector<8x8xf32> to vector<8xf32>
    %418 = vector.shape_cast %417 : vector<8xf32> to vector<8x1xf32>
    %419 = arith.addf %416, %418 : vector<8x1xf32>
    %c10_244 = arith.constant 10 : index
    %c0_245 = arith.constant 0 : index
    %c0_246 = arith.constant 0 : index
    %420 = vector.load %arg16[%c10_244, %c0_245, %c0_246] : memref<16x8x1xf32, #tpu.memory_space<vmem>>, vector<1x8x1xf32>
    %421 = vector.shape_cast %420 : vector<1x8x1xf32> to vector<8x1xf32>
    %422 = vector.shape_cast %419 : vector<8x1xf32> to vector<1x8x1xf32>
    tpu.vector_store %arg16[%c10_244, %c0_245, %c0_246], %422 {strides = array<i32>} : memref<16x8x1xf32, #tpu.memory_space<vmem>>, vector<1x8x1xf32>,
    %c10_247 = arith.constant 10 : index
    %c0_248 = arith.constant 0 : index
    %c0_249 = arith.constant 0 : index
    %423 = vector.load %arg17[%c10_247, %c0_248, %c0_249] : memref<16x8x4xf32, #tpu.memory_space<vmem>>, vector<1x8x4xf32>
    %424 = vector.shape_cast %423 : vector<1x8x4xf32> to vector<8x4xf32>
    %425 = vector.broadcast %410 : vector<8x1xf32> to vector<8x4xf32>
    %426 = arith.mulf %425, %424 : vector<8x4xf32>
    %427 = arith.truncf %413 : vector<8x8xf32> to vector<8x8xbf16>
    %cst_250 = arith.constant dense<0.000000e+00> : vector<8x4xf32>
    %428 = tpu.matmul %427, %400, %cst_250 {dimension_numbers = #tpu.dot_dimension_numbers<[1], [0], [0], [1], [0, 0, 1, 1], [], []>} : vector<8x8xbf16>, vector<8x4xbf16>, vector<8x4xf32> -> vector<8x4xf32>
    %429 = arith.addf %426, %428 : vector<8x4xf32>
    %c10_251 = arith.constant 10 : index
    %c0_252 = arith.constant 0 : index
    %c0_253 = arith.constant 0 : index
    %430 = vector.load %arg17[%c10_251, %c0_252, %c0_253] : memref<16x8x4xf32, #tpu.memory_space<vmem>>, vector<1x8x4xf32>
    %431 = vector.shape_cast %430 : vector<1x8x4xf32> to vector<8x4xf32>
    %432 = vector.shape_cast %429 : vector<8x4xf32> to vector<1x8x4xf32>
    tpu.vector_store %arg17[%c10_251, %c0_252, %c0_253], %432 {strides = array<i32>} : memref<16x8x4xf32, #tpu.memory_space<vmem>>, vector<1x8x4xf32>,
    %c10_254 = arith.constant 10 : index
    %c0_255 = arith.constant 0 : index
    %c0_256 = arith.constant 0 : index
    %433 = vector.load %arg15[%c10_254, %c0_255, %c0_256] : memref<16x8x1xf32, #tpu.memory_space<vmem>>, vector<1x8x1xf32>
    %434 = vector.shape_cast %433 : vector<1x8x1xf32> to vector<8x1xf32>
    %435 = vector.shape_cast %408 : vector<8x1xf32> to vector<1x8x1xf32>
    tpu.vector_store %arg15[%c10_254, %c0_255, %c0_256], %435 {strides = array<i32>} : memref<16x8x1xf32, #tpu.memory_space<vmem>>, vector<1x8x1xf32>,
    %436 = vector.extract_strided_slice %17 {offsets = [8, 12], sizes = [8, 4], strides = [1, 1]} : vector<16x32xbf16> to vector<8x4xbf16>
    %437 = vector.extract_strided_slice %10 {offsets = [8, 12], sizes = [8, 4], strides = [1, 1]} : vector<16x32xbf16> to vector<8x4xbf16>
    %438 = vector.extract_strided_slice %16 {offsets = [8, 12], sizes = [8, 4], strides = [1, 1]} : vector<16x32xbf16> to vector<8x4xbf16>
    %cst_257 = arith.constant dense<0.000000e+00> : vector<8x8xf32>
    %439 = tpu.matmul %436, %437, %cst_257 {dimension_numbers = #tpu.dot_dimension_numbers<[1], [1], [0], [0], [0, 0, 1, 0], [], []>} : vector<8x4xbf16>, vector<8x4xbf16>, vector<8x8xf32> -> vector<8x8xf32>
    %cst_258 = arith.constant 5.000000e-01 : f32
    %440 = vector.broadcast %cst_258 : f32 to vector<8x8xf32>
    %441 = arith.mulf %439, %440 : vector<8x8xf32>
    %c11 = arith.constant 11 : index
    %c0_259 = arith.constant 0 : index
    %c0_260 = arith.constant 0 : index
    %442 = vector.load %arg15[%c11, %c0_259, %c0_260] : memref<16x8x1xf32, #tpu.memory_space<vmem>>, vector<1x8x1xf32>
    %443 = vector.shape_cast %442 : vector<1x8x1xf32> to vector<8x1xf32>
    %cst_261 = arith.constant dense<0xFF800000> : vector<8xf32>
    %444 = vector.multi_reduction <maximumf>, %441, %cst_261 [1] : vector<8x8xf32> to vector<8xf32>
    %445 = vector.shape_cast %444 : vector<8xf32> to vector<8x1xf32>
    %446 = arith.maximumf %443, %445 : vector<8x1xf32>
    %447 = arith.subf %443, %446 : vector<8x1xf32>
    %448 = math.exp %447 : vector<8x1xf32>
    %449 = vector.broadcast %446 : vector<8x1xf32> to vector<8x8xf32>
    %450 = arith.subf %441, %449 : vector<8x8xf32>
    %451 = math.exp %450 : vector<8x8xf32>
    %c11_262 = arith.constant 11 : index
    %c0_263 = arith.constant 0 : index
    %c0_264 = arith.constant 0 : index
    %452 = vector.load %arg16[%c11_262, %c0_263, %c0_264] : memref<16x8x1xf32, #tpu.memory_space<vmem>>, vector<1x8x1xf32>
    %453 = vector.shape_cast %452 : vector<1x8x1xf32> to vector<8x1xf32>
    %454 = arith.mulf %448, %453 : vector<8x1xf32>
    %cst_265 = arith.constant dense<0.000000e+00> : vector<8xf32>
    %455 = vector.multi_reduction <add>, %451, %cst_265 [1] : vector<8x8xf32> to vector<8xf32>
    %456 = vector.shape_cast %455 : vector<8xf32> to vector<8x1xf32>
    %457 = arith.addf %454, %456 : vector<8x1xf32>
    %c11_266 = arith.constant 11 : index
    %c0_267 = arith.constant 0 : index
    %c0_268 = arith.constant 0 : index
    %458 = vector.load %arg16[%c11_266, %c0_267, %c0_268] : memref<16x8x1xf32, #tpu.memory_space<vmem>>, vector<1x8x1xf32>
    %459 = vector.shape_cast %458 : vector<1x8x1xf32> to vector<8x1xf32>
    %460 = vector.shape_cast %457 : vector<8x1xf32> to vector<1x8x1xf32>
    tpu.vector_store %arg16[%c11_266, %c0_267, %c0_268], %460 {strides = array<i32>} : memref<16x8x1xf32, #tpu.memory_space<vmem>>, vector<1x8x1xf32>,
    %c11_269 = arith.constant 11 : index
    %c0_270 = arith.constant 0 : index
    %c0_271 = arith.constant 0 : index
    %461 = vector.load %arg17[%c11_269, %c0_270, %c0_271] : memref<16x8x4xf32, #tpu.memory_space<vmem>>, vector<1x8x4xf32>
    %462 = vector.shape_cast %461 : vector<1x8x4xf32> to vector<8x4xf32>
    %463 = vector.broadcast %448 : vector<8x1xf32> to vector<8x4xf32>
    %464 = arith.mulf %463, %462 : vector<8x4xf32>
    %465 = arith.truncf %451 : vector<8x8xf32> to vector<8x8xbf16>
    %cst_272 = arith.constant dense<0.000000e+00> : vector<8x4xf32>
    %466 = tpu.matmul %465, %438, %cst_272 {dimension_numbers = #tpu.dot_dimension_numbers<[1], [0], [0], [1], [0, 0, 1, 1], [], []>} : vector<8x8xbf16>, vector<8x4xbf16>, vector<8x4xf32> -> vector<8x4xf32>
    %467 = arith.addf %464, %466 : vector<8x4xf32>
    %c11_273 = arith.constant 11 : index
    %c0_274 = arith.constant 0 : index
    %c0_275 = arith.constant 0 : index
    %468 = vector.load %arg17[%c11_273, %c0_274, %c0_275] : memref<16x8x4xf32, #tpu.memory_space<vmem>>, vector<1x8x4xf32>
    %469 = vector.shape_cast %468 : vector<1x8x4xf32> to vector<8x4xf32>
    %470 = vector.shape_cast %467 : vector<8x4xf32> to vector<1x8x4xf32>
    tpu.vector_store %arg17[%c11_273, %c0_274, %c0_275], %470 {strides = array<i32>} : memref<16x8x4xf32, #tpu.memory_space<vmem>>, vector<1x8x4xf32>,
    %c11_276 = arith.constant 11 : index
    %c0_277 = arith.constant 0 : index
    %c0_278 = arith.constant 0 : index
    %471 = vector.load %arg15[%c11_276, %c0_277, %c0_278] : memref<16x8x1xf32, #tpu.memory_space<vmem>>, vector<1x8x1xf32>
    %472 = vector.shape_cast %471 : vector<1x8x1xf32> to vector<8x1xf32>
    %473 = vector.shape_cast %446 : vector<8x1xf32> to vector<1x8x1xf32>
    tpu.vector_store %arg15[%c11_276, %c0_277, %c0_278], %473 {strides = array<i32>} : memref<16x8x1xf32, #tpu.memory_space<vmem>>, vector<1x8x1xf32>,
    %474 = vector.extract_strided_slice %17 {offsets = [8, 16], sizes = [8, 4], strides = [1, 1]} : vector<16x32xbf16> to vector<8x4xbf16>
    %475 = vector.extract_strided_slice %10 {offsets = [8, 16], sizes = [8, 4], strides = [1, 1]} : vector<16x32xbf16> to vector<8x4xbf16>
    %476 = vector.extract_strided_slice %16 {offsets = [8, 16], sizes = [8, 4], strides = [1, 1]} : vector<16x32xbf16> to vector<8x4xbf16>
    %cst_279 = arith.constant dense<0.000000e+00> : vector<8x8xf32>
    %477 = tpu.matmul %474, %475, %cst_279 {dimension_numbers = #tpu.dot_dimension_numbers<[1], [1], [0], [0], [0, 0, 1, 0], [], []>} : vector<8x4xbf16>, vector<8x4xbf16>, vector<8x8xf32> -> vector<8x8xf32>
    %cst_280 = arith.constant 5.000000e-01 : f32
    %478 = vector.broadcast %cst_280 : f32 to vector<8x8xf32>
    %479 = arith.mulf %477, %478 : vector<8x8xf32>
    %c12 = arith.constant 12 : index
    %c0_281 = arith.constant 0 : index
    %c0_282 = arith.constant 0 : index
    %480 = vector.load %arg15[%c12, %c0_281, %c0_282] : memref<16x8x1xf32, #tpu.memory_space<vmem>>, vector<1x8x1xf32>
    %481 = vector.shape_cast %480 : vector<1x8x1xf32> to vector<8x1xf32>
    %cst_283 = arith.constant dense<0xFF800000> : vector<8xf32>
    %482 = vector.multi_reduction <maximumf>, %479, %cst_283 [1] : vector<8x8xf32> to vector<8xf32>
    %483 = vector.shape_cast %482 : vector<8xf32> to vector<8x1xf32>
    %484 = arith.maximumf %481, %483 : vector<8x1xf32>
    %485 = arith.subf %481, %484 : vector<8x1xf32>
    %486 = math.exp %485 : vector<8x1xf32>
    %487 = vector.broadcast %484 : vector<8x1xf32> to vector<8x8xf32>
    %488 = arith.subf %479, %487 : vector<8x8xf32>
    %489 = math.exp %488 : vector<8x8xf32>
    %c12_284 = arith.constant 12 : index
    %c0_285 = arith.constant 0 : index
    %c0_286 = arith.constant 0 : index
    %490 = vector.load %arg16[%c12_284, %c0_285, %c0_286] : memref<16x8x1xf32, #tpu.memory_space<vmem>>, vector<1x8x1xf32>
    %491 = vector.shape_cast %490 : vector<1x8x1xf32> to vector<8x1xf32>
    %492 = arith.mulf %486, %491 : vector<8x1xf32>
    %cst_287 = arith.constant dense<0.000000e+00> : vector<8xf32>
    %493 = vector.multi_reduction <add>, %489, %cst_287 [1] : vector<8x8xf32> to vector<8xf32>
    %494 = vector.shape_cast %493 : vector<8xf32> to vector<8x1xf32>
    %495 = arith.addf %492, %494 : vector<8x1xf32>
    %c12_288 = arith.constant 12 : index
    %c0_289 = arith.constant 0 : index
    %c0_290 = arith.constant 0 : index
    %496 = vector.load %arg16[%c12_288, %c0_289, %c0_290] : memref<16x8x1xf32, #tpu.memory_space<vmem>>, vector<1x8x1xf32>
    %497 = vector.shape_cast %496 : vector<1x8x1xf32> to vector<8x1xf32>
    %498 = vector.shape_cast %495 : vector<8x1xf32> to vector<1x8x1xf32>
    tpu.vector_store %arg16[%c12_288, %c0_289, %c0_290], %498 {strides = array<i32>} : memref<16x8x1xf32, #tpu.memory_space<vmem>>, vector<1x8x1xf32>,
    %c12_291 = arith.constant 12 : index
    %c0_292 = arith.constant 0 : index
    %c0_293 = arith.constant 0 : index
    %499 = vector.load %arg17[%c12_291, %c0_292, %c0_293] : memref<16x8x4xf32, #tpu.memory_space<vmem>>, vector<1x8x4xf32>
    %500 = vector.shape_cast %499 : vector<1x8x4xf32> to vector<8x4xf32>
    %501 = vector.broadcast %486 : vector<8x1xf32> to vector<8x4xf32>
    %502 = arith.mulf %501, %500 : vector<8x4xf32>
    %503 = arith.truncf %489 : vector<8x8xf32> to vector<8x8xbf16>
    %cst_294 = arith.constant dense<0.000000e+00> : vector<8x4xf32>
    %504 = tpu.matmul %503, %476, %cst_294 {dimension_numbers = #tpu.dot_dimension_numbers<[1], [0], [0], [1], [0, 0, 1, 1], [], []>} : vector<8x8xbf16>, vector<8x4xbf16>, vector<8x4xf32> -> vector<8x4xf32>
    %505 = arith.addf %502, %504 : vector<8x4xf32>
    %c12_295 = arith.constant 12 : index
    %c0_296 = arith.constant 0 : index
    %c0_297 = arith.constant 0 : index
    %506 = vector.load %arg17[%c12_295, %c0_296, %c0_297] : memref<16x8x4xf32, #tpu.memory_space<vmem>>, vector<1x8x4xf32>
    %507 = vector.shape_cast %506 : vector<1x8x4xf32> to vector<8x4xf32>
    %508 = vector.shape_cast %505 : vector<8x4xf32> to vector<1x8x4xf32>
    tpu.vector_store %arg17[%c12_295, %c0_296, %c0_297], %508 {strides = array<i32>} : memref<16x8x4xf32, #tpu.memory_space<vmem>>, vector<1x8x4xf32>,
    %c12_298 = arith.constant 12 : index
    %c0_299 = arith.constant 0 : index
    %c0_300 = arith.constant 0 : index
    %509 = vector.load %arg15[%c12_298, %c0_299, %c0_300] : memref<16x8x1xf32, #tpu.memory_space<vmem>>, vector<1x8x1xf32>
    %510 = vector.shape_cast %509 : vector<1x8x1xf32> to vector<8x1xf32>
    %511 = vector.shape_cast %484 : vector<8x1xf32> to vector<1x8x1xf32>
    tpu.vector_store %arg15[%c12_298, %c0_299, %c0_300], %511 {strides = array<i32>} : memref<16x8x1xf32, #tpu.memory_space<vmem>>, vector<1x8x1xf32>,
    %512 = vector.extract_strided_slice %17 {offsets = [8, 20], sizes = [8, 4], strides = [1, 1]} : vector<16x32xbf16> to vector<8x4xbf16>
    %513 = vector.extract_strided_slice %10 {offsets = [8, 20], sizes = [8, 4], strides = [1, 1]} : vector<16x32xbf16> to vector<8x4xbf16>
    %514 = vector.extract_strided_slice %16 {offsets = [8, 20], sizes = [8, 4], strides = [1, 1]} : vector<16x32xbf16> to vector<8x4xbf16>
    %cst_301 = arith.constant dense<0.000000e+00> : vector<8x8xf32>
    %515 = tpu.matmul %512, %513, %cst_301 {dimension_numbers = #tpu.dot_dimension_numbers<[1], [1], [0], [0], [0, 0, 1, 0], [], []>} : vector<8x4xbf16>, vector<8x4xbf16>, vector<8x8xf32> -> vector<8x8xf32>
    %cst_302 = arith.constant 5.000000e-01 : f32
    %516 = vector.broadcast %cst_302 : f32 to vector<8x8xf32>
    %517 = arith.mulf %515, %516 : vector<8x8xf32>
    %c13 = arith.constant 13 : index
    %c0_303 = arith.constant 0 : index
    %c0_304 = arith.constant 0 : index
    %518 = vector.load %arg15[%c13, %c0_303, %c0_304] : memref<16x8x1xf32, #tpu.memory_space<vmem>>, vector<1x8x1xf32>
    %519 = vector.shape_cast %518 : vector<1x8x1xf32> to vector<8x1xf32>
    %cst_305 = arith.constant dense<0xFF800000> : vector<8xf32>
    %520 = vector.multi_reduction <maximumf>, %517, %cst_305 [1] : vector<8x8xf32> to vector<8xf32>
    %521 = vector.shape_cast %520 : vector<8xf32> to vector<8x1xf32>
    %522 = arith.maximumf %519, %521 : vector<8x1xf32>
    %523 = arith.subf %519, %522 : vector<8x1xf32>
    %524 = math.exp %523 : vector<8x1xf32>
    %525 = vector.broadcast %522 : vector<8x1xf32> to vector<8x8xf32>
    %526 = arith.subf %517, %525 : vector<8x8xf32>
    %527 = math.exp %526 : vector<8x8xf32>
    %c13_306 = arith.constant 13 : index
    %c0_307 = arith.constant 0 : index
    %c0_308 = arith.constant 0 : index
    %528 = vector.load %arg16[%c13_306, %c0_307, %c0_308] : memref<16x8x1xf32, #tpu.memory_space<vmem>>, vector<1x8x1xf32>
    %529 = vector.shape_cast %528 : vector<1x8x1xf32> to vector<8x1xf32>
    %530 = arith.mulf %524, %529 : vector<8x1xf32>
    %cst_309 = arith.constant dense<0.000000e+00> : vector<8xf32>
    %531 = vector.multi_reduction <add>, %527, %cst_309 [1] : vector<8x8xf32> to vector<8xf32>
    %532 = vector.shape_cast %531 : vector<8xf32> to vector<8x1xf32>
    %533 = arith.addf %530, %532 : vector<8x1xf32>
    %c13_310 = arith.constant 13 : index
    %c0_311 = arith.constant 0 : index
    %c0_312 = arith.constant 0 : index
    %534 = vector.load %arg16[%c13_310, %c0_311, %c0_312] : memref<16x8x1xf32, #tpu.memory_space<vmem>>, vector<1x8x1xf32>
    %535 = vector.shape_cast %534 : vector<1x8x1xf32> to vector<8x1xf32>
    %536 = vector.shape_cast %533 : vector<8x1xf32> to vector<1x8x1xf32>
    tpu.vector_store %arg16[%c13_310, %c0_311, %c0_312], %536 {strides = array<i32>} : memref<16x8x1xf32, #tpu.memory_space<vmem>>, vector<1x8x1xf32>,
    %c13_313 = arith.constant 13 : index
    %c0_314 = arith.constant 0 : index
    %c0_315 = arith.constant 0 : index
    %537 = vector.load %arg17[%c13_313, %c0_314, %c0_315] : memref<16x8x4xf32, #tpu.memory_space<vmem>>, vector<1x8x4xf32>
    %538 = vector.shape_cast %537 : vector<1x8x4xf32> to vector<8x4xf32>
    %539 = vector.broadcast %524 : vector<8x1xf32> to vector<8x4xf32>
    %540 = arith.mulf %539, %538 : vector<8x4xf32>
    %541 = arith.truncf %527 : vector<8x8xf32> to vector<8x8xbf16>
    %cst_316 = arith.constant dense<0.000000e+00> : vector<8x4xf32>
    %542 = tpu.matmul %541, %514, %cst_316 {dimension_numbers = #tpu.dot_dimension_numbers<[1], [0], [0], [1], [0, 0, 1, 1], [], []>} : vector<8x8xbf16>, vector<8x4xbf16>, vector<8x4xf32> -> vector<8x4xf32>
    %543 = arith.addf %540, %542 : vector<8x4xf32>
    %c13_317 = arith.constant 13 : index
    %c0_318 = arith.constant 0 : index
    %c0_319 = arith.constant 0 : index
    %544 = vector.load %arg17[%c13_317, %c0_318, %c0_319] : memref<16x8x4xf32, #tpu.memory_space<vmem>>, vector<1x8x4xf32>
    %545 = vector.shape_cast %544 : vector<1x8x4xf32> to vector<8x4xf32>
    %546 = vector.shape_cast %543 : vector<8x4xf32> to vector<1x8x4xf32>
    tpu.vector_store %arg17[%c13_317, %c0_318, %c0_319], %546 {strides = array<i32>} : memref<16x8x4xf32, #tpu.memory_space<vmem>>, vector<1x8x4xf32>,
    %c13_320 = arith.constant 13 : index
    %c0_321 = arith.constant 0 : index
    %c0_322 = arith.constant 0 : index
    %547 = vector.load %arg15[%c13_320, %c0_321, %c0_322] : memref<16x8x1xf32, #tpu.memory_space<vmem>>, vector<1x8x1xf32>
    %548 = vector.shape_cast %547 : vector<1x8x1xf32> to vector<8x1xf32>
    %549 = vector.shape_cast %522 : vector<8x1xf32> to vector<1x8x1xf32>
    tpu.vector_store %arg15[%c13_320, %c0_321, %c0_322], %549 {strides = array<i32>} : memref<16x8x1xf32, #tpu.memory_space<vmem>>, vector<1x8x1xf32>,
    %550 = vector.extract_strided_slice %17 {offsets = [8, 24], sizes = [8, 4], strides = [1, 1]} : vector<16x32xbf16> to vector<8x4xbf16>
    %551 = vector.extract_strided_slice %10 {offsets = [8, 24], sizes = [8, 4], strides = [1, 1]} : vector<16x32xbf16> to vector<8x4xbf16>
    %552 = vector.extract_strided_slice %16 {offsets = [8, 24], sizes = [8, 4], strides = [1, 1]} : vector<16x32xbf16> to vector<8x4xbf16>
    %cst_323 = arith.constant dense<0.000000e+00> : vector<8x8xf32>
    %553 = tpu.matmul %550, %551, %cst_323 {dimension_numbers = #tpu.dot_dimension_numbers<[1], [1], [0], [0], [0, 0, 1, 0], [], []>} : vector<8x4xbf16>, vector<8x4xbf16>, vector<8x8xf32> -> vector<8x8xf32>
    %cst_324 = arith.constant 5.000000e-01 : f32
    %554 = vector.broadcast %cst_324 : f32 to vector<8x8xf32>
    %555 = arith.mulf %553, %554 : vector<8x8xf32>
    %c14 = arith.constant 14 : index
    %c0_325 = arith.constant 0 : index
    %c0_326 = arith.constant 0 : index
    %556 = vector.load %arg15[%c14, %c0_325, %c0_326] : memref<16x8x1xf32, #tpu.memory_space<vmem>>, vector<1x8x1xf32>
    %557 = vector.shape_cast %556 : vector<1x8x1xf32> to vector<8x1xf32>
    %cst_327 = arith.constant dense<0xFF800000> : vector<8xf32>
    %558 = vector.multi_reduction <maximumf>, %555, %cst_327 [1] : vector<8x8xf32> to vector<8xf32>
    %559 = vector.shape_cast %558 : vector<8xf32> to vector<8x1xf32>
    %560 = arith.maximumf %557, %559 : vector<8x1xf32>
    %561 = arith.subf %557, %560 : vector<8x1xf32>
    %562 = math.exp %561 : vector<8x1xf32>
    %563 = vector.broadcast %560 : vector<8x1xf32> to vector<8x8xf32>
    %564 = arith.subf %555, %563 : vector<8x8xf32>
    %565 = math.exp %564 : vector<8x8xf32>
    %c14_328 = arith.constant 14 : index
    %c0_329 = arith.constant 0 : index
    %c0_330 = arith.constant 0 : index
    %566 = vector.load %arg16[%c14_328, %c0_329, %c0_330] : memref<16x8x1xf32, #tpu.memory_space<vmem>>, vector<1x8x1xf32>
    %567 = vector.shape_cast %566 : vector<1x8x1xf32> to vector<8x1xf32>
    %568 = arith.mulf %562, %567 : vector<8x1xf32>
    %cst_331 = arith.constant dense<0.000000e+00> : vector<8xf32>
    %569 = vector.multi_reduction <add>, %565, %cst_331 [1] : vector<8x8xf32> to vector<8xf32>
    %570 = vector.shape_cast %569 : vector<8xf32> to vector<8x1xf32>
    %571 = arith.addf %568, %570 : vector<8x1xf32>
    %c14_332 = arith.constant 14 : index
    %c0_333 = arith.constant 0 : index
    %c0_334 = arith.constant 0 : index
    %572 = vector.load %arg16[%c14_332, %c0_333, %c0_334] : memref<16x8x1xf32, #tpu.memory_space<vmem>>, vector<1x8x1xf32>
    %573 = vector.shape_cast %572 : vector<1x8x1xf32> to vector<8x1xf32>
    %574 = vector.shape_cast %571 : vector<8x1xf32> to vector<1x8x1xf32>
    tpu.vector_store %arg16[%c14_332, %c0_333, %c0_334], %574 {strides = array<i32>} : memref<16x8x1xf32, #tpu.memory_space<vmem>>, vector<1x8x1xf32>,
    %c14_335 = arith.constant 14 : index
    %c0_336 = arith.constant 0 : index
    %c0_337 = arith.constant 0 : index
    %575 = vector.load %arg17[%c14_335, %c0_336, %c0_337] : memref<16x8x4xf32, #tpu.memory_space<vmem>>, vector<1x8x4xf32>
    %576 = vector.shape_cast %575 : vector<1x8x4xf32> to vector<8x4xf32>
    %577 = vector.broadcast %562 : vector<8x1xf32> to vector<8x4xf32>
    %578 = arith.mulf %577, %576 : vector<8x4xf32>
    %579 = arith.truncf %565 : vector<8x8xf32> to vector<8x8xbf16>
    %cst_338 = arith.constant dense<0.000000e+00> : vector<8x4xf32>
    %580 = tpu.matmul %579, %552, %cst_338 {dimension_numbers = #tpu.dot_dimension_numbers<[1], [0], [0], [1], [0, 0, 1, 1], [], []>} : vector<8x8xbf16>, vector<8x4xbf16>, vector<8x4xf32> -> vector<8x4xf32>
    %581 = arith.addf %578, %580 : vector<8x4xf32>
    %c14_339 = arith.constant 14 : index
    %c0_340 = arith.constant 0 : index
    %c0_341 = arith.constant 0 : index
    %582 = vector.load %arg17[%c14_339, %c0_340, %c0_341] : memref<16x8x4xf32, #tpu.memory_space<vmem>>, vector<1x8x4xf32>
    %583 = vector.shape_cast %582 : vector<1x8x4xf32> to vector<8x4xf32>
    %584 = vector.shape_cast %581 : vector<8x4xf32> to vector<1x8x4xf32>
    tpu.vector_store %arg17[%c14_339, %c0_340, %c0_341], %584 {strides = array<i32>} : memref<16x8x4xf32, #tpu.memory_space<vmem>>, vector<1x8x4xf32>,
    %c14_342 = arith.constant 14 : index
    %c0_343 = arith.constant 0 : index
    %c0_344 = arith.constant 0 : index
    %585 = vector.load %arg15[%c14_342, %c0_343, %c0_344] : memref<16x8x1xf32, #tpu.memory_space<vmem>>, vector<1x8x1xf32>
    %586 = vector.shape_cast %585 : vector<1x8x1xf32> to vector<8x1xf32>
    %587 = vector.shape_cast %560 : vector<8x1xf32> to vector<1x8x1xf32>
    tpu.vector_store %arg15[%c14_342, %c0_343, %c0_344], %587 {strides = array<i32>} : memref<16x8x1xf32, #tpu.memory_space<vmem>>, vector<1x8x1xf32>,
    %588 = vector.extract_strided_slice %17 {offsets = [8, 28], sizes = [8, 4], strides = [1, 1]} : vector<16x32xbf16> to vector<8x4xbf16>
    %589 = vector.extract_strided_slice %10 {offsets = [8, 28], sizes = [8, 4], strides = [1, 1]} : vector<16x32xbf16> to vector<8x4xbf16>
    %590 = vector.extract_strided_slice %16 {offsets = [8, 28], sizes = [8, 4], strides = [1, 1]} : vector<16x32xbf16> to vector<8x4xbf16>
    %cst_345 = arith.constant dense<0.000000e+00> : vector<8x8xf32>
    %591 = tpu.matmul %588, %589, %cst_345 {dimension_numbers = #tpu.dot_dimension_numbers<[1], [1], [0], [0], [0, 0, 1, 0], [], []>} : vector<8x4xbf16>, vector<8x4xbf16>, vector<8x8xf32> -> vector<8x8xf32>
    %cst_346 = arith.constant 5.000000e-01 : f32
    %592 = vector.broadcast %cst_346 : f32 to vector<8x8xf32>
    %593 = arith.mulf %591, %592 : vector<8x8xf32>
    %c15 = arith.constant 15 : index
    %c0_347 = arith.constant 0 : index
    %c0_348 = arith.constant 0 : index
    %594 = vector.load %arg15[%c15, %c0_347, %c0_348] : memref<16x8x1xf32, #tpu.memory_space<vmem>>, vector<1x8x1xf32>
    %595 = vector.shape_cast %594 : vector<1x8x1xf32> to vector<8x1xf32>
    %cst_349 = arith.constant dense<0xFF800000> : vector<8xf32>
    %596 = vector.multi_reduction <maximumf>, %593, %cst_349 [1] : vector<8x8xf32> to vector<8xf32>
    %597 = vector.shape_cast %596 : vector<8xf32> to vector<8x1xf32>
    %598 = arith.maximumf %595, %597 : vector<8x1xf32>
    %599 = arith.subf %595, %598 : vector<8x1xf32>
    %600 = math.exp %599 : vector<8x1xf32>
    %601 = vector.broadcast %598 : vector<8x1xf32> to vector<8x8xf32>
    %602 = arith.subf %593, %601 : vector<8x8xf32>
    %603 = math.exp %602 : vector<8x8xf32>
    %c15_350 = arith.constant 15 : index
    %c0_351 = arith.constant 0 : index
    %c0_352 = arith.constant 0 : index
    %604 = vector.load %arg16[%c15_350, %c0_351, %c0_352] : memref<16x8x1xf32, #tpu.memory_space<vmem>>, vector<1x8x1xf32>
    %605 = vector.shape_cast %604 : vector<1x8x1xf32> to vector<8x1xf32>
    %606 = arith.mulf %600, %605 : vector<8x1xf32>
    %cst_353 = arith.constant dense<0.000000e+00> : vector<8xf32>
    %607 = vector.multi_reduction <add>, %603, %cst_353 [1] : vector<8x8xf32> to vector<8xf32>
    %608 = vector.shape_cast %607 : vector<8xf32> to vector<8x1xf32>
    %609 = arith.addf %606, %608 : vector<8x1xf32>
    %c15_354 = arith.constant 15 : index
    %c0_355 = arith.constant 0 : index
    %c0_356 = arith.constant 0 : index
    %610 = vector.load %arg16[%c15_354, %c0_355, %c0_356] : memref<16x8x1xf32, #tpu.memory_space<vmem>>, vector<1x8x1xf32>
    %611 = vector.shape_cast %610 : vector<1x8x1xf32> to vector<8x1xf32>
    %612 = vector.shape_cast %609 : vector<8x1xf32> to vector<1x8x1xf32>
    tpu.vector_store %arg16[%c15_354, %c0_355, %c0_356], %612 {strides = array<i32>} : memref<16x8x1xf32, #tpu.memory_space<vmem>>, vector<1x8x1xf32>,
    %c15_357 = arith.constant 15 : index
    %c0_358 = arith.constant 0 : index
    %c0_359 = arith.constant 0 : index
    %613 = vector.load %arg17[%c15_357, %c0_358, %c0_359] : memref<16x8x4xf32, #tpu.memory_space<vmem>>, vector<1x8x4xf32>
    %614 = vector.shape_cast %613 : vector<1x8x4xf32> to vector<8x4xf32>
    %615 = vector.broadcast %600 : vector<8x1xf32> to vector<8x4xf32>
    %616 = arith.mulf %615, %614 : vector<8x4xf32>
    %617 = arith.truncf %603 : vector<8x8xf32> to vector<8x8xbf16>
    %cst_360 = arith.constant dense<0.000000e+00> : vector<8x4xf32>
    %618 = tpu.matmul %617, %590, %cst_360 {dimension_numbers = #tpu.dot_dimension_numbers<[1], [0], [0], [1], [0, 0, 1, 1], [], []>} : vector<8x8xbf16>, vector<8x4xbf16>, vector<8x4xf32> -> vector<8x4xf32>
    %619 = arith.addf %616, %618 : vector<8x4xf32>
    %c15_361 = arith.constant 15 : index
    %c0_362 = arith.constant 0 : index
    %c0_363 = arith.constant 0 : index
    %620 = vector.load %arg17[%c15_361, %c0_362, %c0_363] : memref<16x8x4xf32, #tpu.memory_space<vmem>>, vector<1x8x4xf32>
    %621 = vector.shape_cast %620 : vector<1x8x4xf32> to vector<8x4xf32>
    %622 = vector.shape_cast %619 : vector<8x4xf32> to vector<1x8x4xf32>
    tpu.vector_store %arg17[%c15_361, %c0_362, %c0_363], %622 {strides = array<i32>} : memref<16x8x4xf32, #tpu.memory_space<vmem>>, vector<1x8x4xf32>,
    %c15_364 = arith.constant 15 : index
    %c0_365 = arith.constant 0 : index
    %c0_366 = arith.constant 0 : index
    %623 = vector.load %arg15[%c15_364, %c0_365, %c0_366] : memref<16x8x1xf32, #tpu.memory_space<vmem>>, vector<1x8x1xf32>
    %624 = vector.shape_cast %623 : vector<1x8x1xf32> to vector<8x1xf32>
    %625 = vector.shape_cast %598 : vector<8x1xf32> to vector<1x8x1xf32>
    tpu.vector_store %arg15[%c15_364, %c0_365, %c0_366], %625 {strides = array<i32>} : memref<16x8x1xf32, #tpu.memory_space<vmem>>, vector<1x8x1xf32>,
    %c0_i32_367 = arith.constant 0 : i32
    %626 = arith.cmpi eq, %arg2, %c0_i32_367 : i32
    %627 = arith.extui %626 : i1 to i32
    %c0_i32_368 = arith.constant 0 : i32
    %628 = arith.cmpi ne, %627, %c0_i32_368 : i32
    scf.if %628 {
      %c0_369 = arith.constant 0 : index
      %c0_370 = arith.constant 0 : index
      %629 = vector.load %arg12[%c0_369, %c0_370] : memref<1x32xf32, #tpu.memory_space<vmem>>, vector<1x32xf32>
      %c0_371 = arith.constant 0 : index
      %c0_372 = arith.constant 0 : index
      %630 = vector.load %arg11[%c0_371, %c0_372] : memref<32x32xbf16, #tpu.memory_space<vmem>>, vector<32x32xbf16>
      %cst_373 = arith.constant 0.000000e+00 : f32
      %631 = vector.broadcast %cst_373 : f32 to vector<8x32xf32>
      %c0_374 = arith.constant 0 : index
      %c0_375 = arith.constant 0 : index
      %c0_376 = arith.constant 0 : index
      %632 = vector.load %arg16[%c0_374, %c0_375, %c0_376] : memref<16x8x1xf32, #tpu.memory_space<vmem>>, vector<1x8x1xf32>
      %633 = vector.shape_cast %632 : vector<1x8x1xf32> to vector<8x1xf32>
      %634 = tpu.reciprocal %633 {approx = true} : vector<8x1xf32> -> vector<8x1xf32>
      %c0_377 = arith.constant 0 : index
      %c0_378 = arith.constant 0 : index
      %c0_379 = arith.constant 0 : index
      %635 = vector.load %arg17[%c0_377, %c0_378, %c0_379] : memref<16x8x4xf32, #tpu.memory_space<vmem>>, vector<1x8x4xf32>
      %636 = vector.shape_cast %635 : vector<1x8x4xf32> to vector<8x4xf32>
      %637 = vector.broadcast %634 : vector<8x1xf32> to vector<8x4xf32>
      %638 = arith.mulf %636, %637 : vector<8x4xf32>
      %639 = arith.truncf %638 : vector<8x4xf32> to vector<8x4xbf16>
      %640 = vector.extract_strided_slice %630 {offsets = [0, 0], sizes = [4, 32], strides = [1, 1]} : vector<32x32xbf16> to vector<4x32xbf16>
      %cst_380 = arith.constant dense<0.000000e+00> : vector<8x32xf32>
      %641 = tpu.matmul %639, %640, %cst_380 {dimension_numbers = #tpu.dot_dimension_numbers<[1], [0], [0], [1], [0, 0, 1, 1], [], []>} : vector<8x4xbf16>, vector<4x32xbf16>, vector<8x32xf32> -> vector<8x32xf32>
      %642 = arith.addf %631, %641 : vector<8x32xf32>
      %c1_381 = arith.constant 1 : index
      %c0_382 = arith.constant 0 : index
      %c0_383 = arith.constant 0 : index
      %643 = vector.load %arg16[%c1_381, %c0_382, %c0_383] : memref<16x8x1xf32, #tpu.memory_space<vmem>>, vector<1x8x1xf32>
      %644 = vector.shape_cast %643 : vector<1x8x1xf32> to vector<8x1xf32>
      %645 = tpu.reciprocal %644 {approx = true} : vector<8x1xf32> -> vector<8x1xf32>
      %c1_384 = arith.constant 1 : index
      %c0_385 = arith.constant 0 : index
      %c0_386 = arith.constant 0 : index
      %646 = vector.load %arg17[%c1_384, %c0_385, %c0_386] : memref<16x8x4xf32, #tpu.memory_space<vmem>>, vector<1x8x4xf32>
      %647 = vector.shape_cast %646 : vector<1x8x4xf32> to vector<8x4xf32>
      %648 = vector.broadcast %645 : vector<8x1xf32> to vector<8x4xf32>
      %649 = arith.mulf %647, %648 : vector<8x4xf32>
      %650 = arith.truncf %649 : vector<8x4xf32> to vector<8x4xbf16>
      %651 = vector.extract_strided_slice %630 {offsets = [4, 0], sizes = [4, 32], strides = [1, 1]} : vector<32x32xbf16> to vector<4x32xbf16>
      %cst_387 = arith.constant dense<0.000000e+00> : vector<8x32xf32>
      %652 = tpu.matmul %650, %651, %cst_387 {dimension_numbers = #tpu.dot_dimension_numbers<[1], [0], [0], [1], [0, 0, 1, 1], [], []>} : vector<8x4xbf16>, vector<4x32xbf16>, vector<8x32xf32> -> vector<8x32xf32>
      %653 = arith.addf %642, %652 : vector<8x32xf32>
      %c2_388 = arith.constant 2 : index
      %c0_389 = arith.constant 0 : index
      %c0_390 = arith.constant 0 : index
      %654 = vector.load %arg16[%c2_388, %c0_389, %c0_390] : memref<16x8x1xf32, #tpu.memory_space<vmem>>, vector<1x8x1xf32>
      %655 = vector.shape_cast %654 : vector<1x8x1xf32> to vector<8x1xf32>
      %656 = tpu.reciprocal %655 {approx = true} : vector<8x1xf32> -> vector<8x1xf32>
      %c2_391 = arith.constant 2 : index
      %c0_392 = arith.constant 0 : index
      %c0_393 = arith.constant 0 : index
      %657 = vector.load %arg17[%c2_391, %c0_392, %c0_393] : memref<16x8x4xf32, #tpu.memory_space<vmem>>, vector<1x8x4xf32>
      %658 = vector.shape_cast %657 : vector<1x8x4xf32> to vector<8x4xf32>
      %659 = vector.broadcast %656 : vector<8x1xf32> to vector<8x4xf32>
      %660 = arith.mulf %658, %659 : vector<8x4xf32>
      %661 = arith.truncf %660 : vector<8x4xf32> to vector<8x4xbf16>
      %662 = vector.extract_strided_slice %630 {offsets = [8, 0], sizes = [4, 32], strides = [1, 1]} : vector<32x32xbf16> to vector<4x32xbf16>
      %cst_394 = arith.constant dense<0.000000e+00> : vector<8x32xf32>
      %663 = tpu.matmul %661, %662, %cst_394 {dimension_numbers = #tpu.dot_dimension_numbers<[1], [0], [0], [1], [0, 0, 1, 1], [], []>} : vector<8x4xbf16>, vector<4x32xbf16>, vector<8x32xf32> -> vector<8x32xf32>
      %664 = arith.addf %653, %663 : vector<8x32xf32>
      %c3_395 = arith.constant 3 : index
      %c0_396 = arith.constant 0 : index
      %c0_397 = arith.constant 0 : index
      %665 = vector.load %arg16[%c3_395, %c0_396, %c0_397] : memref<16x8x1xf32, #tpu.memory_space<vmem>>, vector<1x8x1xf32>
      %666 = vector.shape_cast %665 : vector<1x8x1xf32> to vector<8x1xf32>
      %667 = tpu.reciprocal %666 {approx = true} : vector<8x1xf32> -> vector<8x1xf32>
      %c3_398 = arith.constant 3 : index
      %c0_399 = arith.constant 0 : index
      %c0_400 = arith.constant 0 : index
      %668 = vector.load %arg17[%c3_398, %c0_399, %c0_400] : memref<16x8x4xf32, #tpu.memory_space<vmem>>, vector<1x8x4xf32>
      %669 = vector.shape_cast %668 : vector<1x8x4xf32> to vector<8x4xf32>
      %670 = vector.broadcast %667 : vector<8x1xf32> to vector<8x4xf32>
      %671 = arith.mulf %669, %670 : vector<8x4xf32>
      %672 = arith.truncf %671 : vector<8x4xf32> to vector<8x4xbf16>
      %673 = vector.extract_strided_slice %630 {offsets = [12, 0], sizes = [4, 32], strides = [1, 1]} : vector<32x32xbf16> to vector<4x32xbf16>
      %cst_401 = arith.constant dense<0.000000e+00> : vector<8x32xf32>
      %674 = tpu.matmul %672, %673, %cst_401 {dimension_numbers = #tpu.dot_dimension_numbers<[1], [0], [0], [1], [0, 0, 1, 1], [], []>} : vector<8x4xbf16>, vector<4x32xbf16>, vector<8x32xf32> -> vector<8x32xf32>
      %675 = arith.addf %664, %674 : vector<8x32xf32>
      %c4_402 = arith.constant 4 : index
      %c0_403 = arith.constant 0 : index
      %c0_404 = arith.constant 0 : index
      %676 = vector.load %arg16[%c4_402, %c0_403, %c0_404] : memref<16x8x1xf32, #tpu.memory_space<vmem>>, vector<1x8x1xf32>
      %677 = vector.shape_cast %676 : vector<1x8x1xf32> to vector<8x1xf32>
      %678 = tpu.reciprocal %677 {approx = true} : vector<8x1xf32> -> vector<8x1xf32>
      %c4_405 = arith.constant 4 : index
      %c0_406 = arith.constant 0 : index
      %c0_407 = arith.constant 0 : index
      %679 = vector.load %arg17[%c4_405, %c0_406, %c0_407] : memref<16x8x4xf32, #tpu.memory_space<vmem>>, vector<1x8x4xf32>
      %680 = vector.shape_cast %679 : vector<1x8x4xf32> to vector<8x4xf32>
      %681 = vector.broadcast %678 : vector<8x1xf32> to vector<8x4xf32>
      %682 = arith.mulf %680, %681 : vector<8x4xf32>
      %683 = arith.truncf %682 : vector<8x4xf32> to vector<8x4xbf16>
      %684 = vector.extract_strided_slice %630 {offsets = [16, 0], sizes = [4, 32], strides = [1, 1]} : vector<32x32xbf16> to vector<4x32xbf16>
      %cst_408 = arith.constant dense<0.000000e+00> : vector<8x32xf32>
      %685 = tpu.matmul %683, %684, %cst_408 {dimension_numbers = #tpu.dot_dimension_numbers<[1], [0], [0], [1], [0, 0, 1, 1], [], []>} : vector<8x4xbf16>, vector<4x32xbf16>, vector<8x32xf32> -> vector<8x32xf32>
      %686 = arith.addf %675, %685 : vector<8x32xf32>
      %c5_409 = arith.constant 5 : index
      %c0_410 = arith.constant 0 : index
      %c0_411 = arith.constant 0 : index
      %687 = vector.load %arg16[%c5_409, %c0_410, %c0_411] : memref<16x8x1xf32, #tpu.memory_space<vmem>>, vector<1x8x1xf32>
      %688 = vector.shape_cast %687 : vector<1x8x1xf32> to vector<8x1xf32>
      %689 = tpu.reciprocal %688 {approx = true} : vector<8x1xf32> -> vector<8x1xf32>
      %c5_412 = arith.constant 5 : index
      %c0_413 = arith.constant 0 : index
      %c0_414 = arith.constant 0 : index
      %690 = vector.load %arg17[%c5_412, %c0_413, %c0_414] : memref<16x8x4xf32, #tpu.memory_space<vmem>>, vector<1x8x4xf32>
      %691 = vector.shape_cast %690 : vector<1x8x4xf32> to vector<8x4xf32>
      %692 = vector.broadcast %689 : vector<8x1xf32> to vector<8x4xf32>
      %693 = arith.mulf %691, %692 : vector<8x4xf32>
      %694 = arith.truncf %693 : vector<8x4xf32> to vector<8x4xbf16>
      %695 = vector.extract_strided_slice %630 {offsets = [20, 0], sizes = [4, 32], strides = [1, 1]} : vector<32x32xbf16> to vector<4x32xbf16>
      %cst_415 = arith.constant dense<0.000000e+00> : vector<8x32xf32>
      %696 = tpu.matmul %694, %695, %cst_415 {dimension_numbers = #tpu.dot_dimension_numbers<[1], [0], [0], [1], [0, 0, 1, 1], [], []>} : vector<8x4xbf16>, vector<4x32xbf16>, vector<8x32xf32> -> vector<8x32xf32>
      %697 = arith.addf %686, %696 : vector<8x32xf32>
      %c6_416 = arith.constant 6 : index
      %c0_417 = arith.constant 0 : index
      %c0_418 = arith.constant 0 : index
      %698 = vector.load %arg16[%c6_416, %c0_417, %c0_418] : memref<16x8x1xf32, #tpu.memory_space<vmem>>, vector<1x8x1xf32>
      %699 = vector.shape_cast %698 : vector<1x8x1xf32> to vector<8x1xf32>
      %700 = tpu.reciprocal %699 {approx = true} : vector<8x1xf32> -> vector<8x1xf32>
      %c6_419 = arith.constant 6 : index
      %c0_420 = arith.constant 0 : index
      %c0_421 = arith.constant 0 : index
      %701 = vector.load %arg17[%c6_419, %c0_420, %c0_421] : memref<16x8x4xf32, #tpu.memory_space<vmem>>, vector<1x8x4xf32>
      %702 = vector.shape_cast %701 : vector<1x8x4xf32> to vector<8x4xf32>
      %703 = vector.broadcast %700 : vector<8x1xf32> to vector<8x4xf32>
      %704 = arith.mulf %702, %703 : vector<8x4xf32>
      %705 = arith.truncf %704 : vector<8x4xf32> to vector<8x4xbf16>
      %706 = vector.extract_strided_slice %630 {offsets = [24, 0], sizes = [4, 32], strides = [1, 1]} : vector<32x32xbf16> to vector<4x32xbf16>
      %cst_422 = arith.constant dense<0.000000e+00> : vector<8x32xf32>
      %707 = tpu.matmul %705, %706, %cst_422 {dimension_numbers = #tpu.dot_dimension_numbers<[1], [0], [0], [1], [0, 0, 1, 1], [], []>} : vector<8x4xbf16>, vector<4x32xbf16>, vector<8x32xf32> -> vector<8x32xf32>
      %708 = arith.addf %697, %707 : vector<8x32xf32>
      %c7_423 = arith.constant 7 : index
      %c0_424 = arith.constant 0 : index
      %c0_425 = arith.constant 0 : index
      %709 = vector.load %arg16[%c7_423, %c0_424, %c0_425] : memref<16x8x1xf32, #tpu.memory_space<vmem>>, vector<1x8x1xf32>
      %710 = vector.shape_cast %709 : vector<1x8x1xf32> to vector<8x1xf32>
      %711 = tpu.reciprocal %710 {approx = true} : vector<8x1xf32> -> vector<8x1xf32>
      %c7_426 = arith.constant 7 : index
      %c0_427 = arith.constant 0 : index
      %c0_428 = arith.constant 0 : index
      %712 = vector.load %arg17[%c7_426, %c0_427, %c0_428] : memref<16x8x4xf32, #tpu.memory_space<vmem>>, vector<1x8x4xf32>
      %713 = vector.shape_cast %712 : vector<1x8x4xf32> to vector<8x4xf32>
      %714 = vector.broadcast %711 : vector<8x1xf32> to vector<8x4xf32>
      %715 = arith.mulf %713, %714 : vector<8x4xf32>
      %716 = arith.truncf %715 : vector<8x4xf32> to vector<8x4xbf16>
      %717 = vector.extract_strided_slice %630 {offsets = [28, 0], sizes = [4, 32], strides = [1, 1]} : vector<32x32xbf16> to vector<4x32xbf16>
      %cst_429 = arith.constant dense<0.000000e+00> : vector<8x32xf32>
      %718 = tpu.matmul %716, %717, %cst_429 {dimension_numbers = #tpu.dot_dimension_numbers<[1], [0], [0], [1], [0, 0, 1, 1], [], []>} : vector<8x4xbf16>, vector<4x32xbf16>, vector<8x32xf32> -> vector<8x32xf32>
      %719 = arith.addf %708, %718 : vector<8x32xf32>
      %720 = vector.broadcast %629 : vector<1x32xf32> to vector<8x32xf32>
      %721 = arith.addf %719, %720 : vector<8x32xf32>
      %c0_430 = arith.constant 0 : index
      %c0_431 = arith.constant 0 : index
      %c0_432 = arith.constant 0 : index
      %722 = vector.load %arg13[%c0_430, %c0_431, %c0_432] : memref<2x8x32xf32, #tpu.memory_space<vmem>>, vector<1x8x32xf32>
      %723 = vector.shape_cast %722 : vector<1x8x32xf32> to vector<8x32xf32>
      %724 = vector.shape_cast %721 : vector<8x32xf32> to vector<1x8x32xf32>
      tpu.vector_store %arg13[%c0_430, %c0_431, %c0_432], %724 {strides = array<i32>} : memref<2x8x32xf32, #tpu.memory_space<vmem>>, vector<1x8x32xf32>,
      %cst_433 = arith.constant 0.000000e+00 : f32
      %725 = vector.broadcast %cst_433 : f32 to vector<8x32xf32>
      %c8_434 = arith.constant 8 : index
      %c0_435 = arith.constant 0 : index
      %c0_436 = arith.constant 0 : index
      %726 = vector.load %arg16[%c8_434, %c0_435, %c0_436] : memref<16x8x1xf32, #tpu.memory_space<vmem>>, vector<1x8x1xf32>
      %727 = vector.shape_cast %726 : vector<1x8x1xf32> to vector<8x1xf32>
      %728 = tpu.reciprocal %727 {approx = true} : vector<8x1xf32> -> vector<8x1xf32>
      %c8_437 = arith.constant 8 : index
      %c0_438 = arith.constant 0 : index
      %c0_439 = arith.constant 0 : index
      %729 = vector.load %arg17[%c8_437, %c0_438, %c0_439] : memref<16x8x4xf32, #tpu.memory_space<vmem>>, vector<1x8x4xf32>
      %730 = vector.shape_cast %729 : vector<1x8x4xf32> to vector<8x4xf32>
      %731 = vector.broadcast %728 : vector<8x1xf32> to vector<8x4xf32>
      %732 = arith.mulf %730, %731 : vector<8x4xf32>
      %733 = arith.truncf %732 : vector<8x4xf32> to vector<8x4xbf16>
      %734 = vector.extract_strided_slice %630 {offsets = [0, 0], sizes = [4, 32], strides = [1, 1]} : vector<32x32xbf16> to vector<4x32xbf16>
      %cst_440 = arith.constant dense<0.000000e+00> : vector<8x32xf32>
      %735 = tpu.matmul %733, %734, %cst_440 {dimension_numbers = #tpu.dot_dimension_numbers<[1], [0], [0], [1], [0, 0, 1, 1], [], []>} : vector<8x4xbf16>, vector<4x32xbf16>, vector<8x32xf32> -> vector<8x32xf32>
      %736 = arith.addf %725, %735 : vector<8x32xf32>
      %c9_441 = arith.constant 9 : index
      %c0_442 = arith.constant 0 : index
      %c0_443 = arith.constant 0 : index
      %737 = vector.load %arg16[%c9_441, %c0_442, %c0_443] : memref<16x8x1xf32, #tpu.memory_space<vmem>>, vector<1x8x1xf32>
      %738 = vector.shape_cast %737 : vector<1x8x1xf32> to vector<8x1xf32>
      %739 = tpu.reciprocal %738 {approx = true} : vector<8x1xf32> -> vector<8x1xf32>
      %c9_444 = arith.constant 9 : index
      %c0_445 = arith.constant 0 : index
      %c0_446 = arith.constant 0 : index
      %740 = vector.load %arg17[%c9_444, %c0_445, %c0_446] : memref<16x8x4xf32, #tpu.memory_space<vmem>>, vector<1x8x4xf32>
      %741 = vector.shape_cast %740 : vector<1x8x4xf32> to vector<8x4xf32>
      %742 = vector.broadcast %739 : vector<8x1xf32> to vector<8x4xf32>
      %743 = arith.mulf %741, %742 : vector<8x4xf32>
      %744 = arith.truncf %743 : vector<8x4xf32> to vector<8x4xbf16>
      %745 = vector.extract_strided_slice %630 {offsets = [4, 0], sizes = [4, 32], strides = [1, 1]} : vector<32x32xbf16> to vector<4x32xbf16>
      %cst_447 = arith.constant dense<0.000000e+00> : vector<8x32xf32>
      %746 = tpu.matmul %744, %745, %cst_447 {dimension_numbers = #tpu.dot_dimension_numbers<[1], [0], [0], [1], [0, 0, 1, 1], [], []>} : vector<8x4xbf16>, vector<4x32xbf16>, vector<8x32xf32> -> vector<8x32xf32>
      %747 = arith.addf %736, %746 : vector<8x32xf32>
      %c10_448 = arith.constant 10 : index
      %c0_449 = arith.constant 0 : index
      %c0_450 = arith.constant 0 : index
      %748 = vector.load %arg16[%c10_448, %c0_449, %c0_450] : memref<16x8x1xf32, #tpu.memory_space<vmem>>, vector<1x8x1xf32>
      %749 = vector.shape_cast %748 : vector<1x8x1xf32> to vector<8x1xf32>
      %750 = tpu.reciprocal %749 {approx = true} : vector<8x1xf32> -> vector<8x1xf32>
      %c10_451 = arith.constant 10 : index
      %c0_452 = arith.constant 0 : index
      %c0_453 = arith.constant 0 : index
      %751 = vector.load %arg17[%c10_451, %c0_452, %c0_453] : memref<16x8x4xf32, #tpu.memory_space<vmem>>, vector<1x8x4xf32>
      %752 = vector.shape_cast %751 : vector<1x8x4xf32> to vector<8x4xf32>
      %753 = vector.broadcast %750 : vector<8x1xf32> to vector<8x4xf32>
      %754 = arith.mulf %752, %753 : vector<8x4xf32>
      %755 = arith.truncf %754 : vector<8x4xf32> to vector<8x4xbf16>
      %756 = vector.extract_strided_slice %630 {offsets = [8, 0], sizes = [4, 32], strides = [1, 1]} : vector<32x32xbf16> to vector<4x32xbf16>
      %cst_454 = arith.constant dense<0.000000e+00> : vector<8x32xf32>
      %757 = tpu.matmul %755, %756, %cst_454 {dimension_numbers = #tpu.dot_dimension_numbers<[1], [0], [0], [1], [0, 0, 1, 1], [], []>} : vector<8x4xbf16>, vector<4x32xbf16>, vector<8x32xf32> -> vector<8x32xf32>
      %758 = arith.addf %747, %757 : vector<8x32xf32>
      %c11_455 = arith.constant 11 : index
      %c0_456 = arith.constant 0 : index
      %c0_457 = arith.constant 0 : index
      %759 = vector.load %arg16[%c11_455, %c0_456, %c0_457] : memref<16x8x1xf32, #tpu.memory_space<vmem>>, vector<1x8x1xf32>
      %760 = vector.shape_cast %759 : vector<1x8x1xf32> to vector<8x1xf32>
      %761 = tpu.reciprocal %760 {approx = true} : vector<8x1xf32> -> vector<8x1xf32>
      %c11_458 = arith.constant 11 : index
      %c0_459 = arith.constant 0 : index
      %c0_460 = arith.constant 0 : index
      %762 = vector.load %arg17[%c11_458, %c0_459, %c0_460] : memref<16x8x4xf32, #tpu.memory_space<vmem>>, vector<1x8x4xf32>
      %763 = vector.shape_cast %762 : vector<1x8x4xf32> to vector<8x4xf32>
      %764 = vector.broadcast %761 : vector<8x1xf32> to vector<8x4xf32>
      %765 = arith.mulf %763, %764 : vector<8x4xf32>
      %766 = arith.truncf %765 : vector<8x4xf32> to vector<8x4xbf16>
      %767 = vector.extract_strided_slice %630 {offsets = [12, 0], sizes = [4, 32], strides = [1, 1]} : vector<32x32xbf16> to vector<4x32xbf16>
      %cst_461 = arith.constant dense<0.000000e+00> : vector<8x32xf32>
      %768 = tpu.matmul %766, %767, %cst_461 {dimension_numbers = #tpu.dot_dimension_numbers<[1], [0], [0], [1], [0, 0, 1, 1], [], []>} : vector<8x4xbf16>, vector<4x32xbf16>, vector<8x32xf32> -> vector<8x32xf32>
      %769 = arith.addf %758, %768 : vector<8x32xf32>
      %c12_462 = arith.constant 12 : index
      %c0_463 = arith.constant 0 : index
      %c0_464 = arith.constant 0 : index
      %770 = vector.load %arg16[%c12_462, %c0_463, %c0_464] : memref<16x8x1xf32, #tpu.memory_space<vmem>>, vector<1x8x1xf32>
      %771 = vector.shape_cast %770 : vector<1x8x1xf32> to vector<8x1xf32>
      %772 = tpu.reciprocal %771 {approx = true} : vector<8x1xf32> -> vector<8x1xf32>
      %c12_465 = arith.constant 12 : index
      %c0_466 = arith.constant 0 : index
      %c0_467 = arith.constant 0 : index
      %773 = vector.load %arg17[%c12_465, %c0_466, %c0_467] : memref<16x8x4xf32, #tpu.memory_space<vmem>>, vector<1x8x4xf32>
      %774 = vector.shape_cast %773 : vector<1x8x4xf32> to vector<8x4xf32>
      %775 = vector.broadcast %772 : vector<8x1xf32> to vector<8x4xf32>
      %776 = arith.mulf %774, %775 : vector<8x4xf32>
      %777 = arith.truncf %776 : vector<8x4xf32> to vector<8x4xbf16>
      %778 = vector.extract_strided_slice %630 {offsets = [16, 0], sizes = [4, 32], strides = [1, 1]} : vector<32x32xbf16> to vector<4x32xbf16>
      %cst_468 = arith.constant dense<0.000000e+00> : vector<8x32xf32>
      %779 = tpu.matmul %777, %778, %cst_468 {dimension_numbers = #tpu.dot_dimension_numbers<[1], [0], [0], [1], [0, 0, 1, 1], [], []>} : vector<8x4xbf16>, vector<4x32xbf16>, vector<8x32xf32> -> vector<8x32xf32>
      %780 = arith.addf %769, %779 : vector<8x32xf32>
      %c13_469 = arith.constant 13 : index
      %c0_470 = arith.constant 0 : index
      %c0_471 = arith.constant 0 : index
      %781 = vector.load %arg16[%c13_469, %c0_470, %c0_471] : memref<16x8x1xf32, #tpu.memory_space<vmem>>, vector<1x8x1xf32>
      %782 = vector.shape_cast %781 : vector<1x8x1xf32> to vector<8x1xf32>
      %783 = tpu.reciprocal %782 {approx = true} : vector<8x1xf32> -> vector<8x1xf32>
      %c13_472 = arith.constant 13 : index
      %c0_473 = arith.constant 0 : index
      %c0_474 = arith.constant 0 : index
      %784 = vector.load %arg17[%c13_472, %c0_473, %c0_474] : memref<16x8x4xf32, #tpu.memory_space<vmem>>, vector<1x8x4xf32>
      %785 = vector.shape_cast %784 : vector<1x8x4xf32> to vector<8x4xf32>
      %786 = vector.broadcast %783 : vector<8x1xf32> to vector<8x4xf32>
      %787 = arith.mulf %785, %786 : vector<8x4xf32>
      %788 = arith.truncf %787 : vector<8x4xf32> to vector<8x4xbf16>
      %789 = vector.extract_strided_slice %630 {offsets = [20, 0], sizes = [4, 32], strides = [1, 1]} : vector<32x32xbf16> to vector<4x32xbf16>
      %cst_475 = arith.constant dense<0.000000e+00> : vector<8x32xf32>
      %790 = tpu.matmul %788, %789, %cst_475 {dimension_numbers = #tpu.dot_dimension_numbers<[1], [0], [0], [1], [0, 0, 1, 1], [], []>} : vector<8x4xbf16>, vector<4x32xbf16>, vector<8x32xf32> -> vector<8x32xf32>
      %791 = arith.addf %780, %790 : vector<8x32xf32>
      %c14_476 = arith.constant 14 : index
      %c0_477 = arith.constant 0 : index
      %c0_478 = arith.constant 0 : index
      %792 = vector.load %arg16[%c14_476, %c0_477, %c0_478] : memref<16x8x1xf32, #tpu.memory_space<vmem>>, vector<1x8x1xf32>
      %793 = vector.shape_cast %792 : vector<1x8x1xf32> to vector<8x1xf32>
      %794 = tpu.reciprocal %793 {approx = true} : vector<8x1xf32> -> vector<8x1xf32>
      %c14_479 = arith.constant 14 : index
      %c0_480 = arith.constant 0 : index
      %c0_481 = arith.constant 0 : index
      %795 = vector.load %arg17[%c14_479, %c0_480, %c0_481] : memref<16x8x4xf32, #tpu.memory_space<vmem>>, vector<1x8x4xf32>
      %796 = vector.shape_cast %795 : vector<1x8x4xf32> to vector<8x4xf32>
      %797 = vector.broadcast %794 : vector<8x1xf32> to vector<8x4xf32>
      %798 = arith.mulf %796, %797 : vector<8x4xf32>
      %799 = arith.truncf %798 : vector<8x4xf32> to vector<8x4xbf16>
      %800 = vector.extract_strided_slice %630 {offsets = [24, 0], sizes = [4, 32], strides = [1, 1]} : vector<32x32xbf16> to vector<4x32xbf16>
      %cst_482 = arith.constant dense<0.000000e+00> : vector<8x32xf32>
      %801 = tpu.matmul %799, %800, %cst_482 {dimension_numbers = #tpu.dot_dimension_numbers<[1], [0], [0], [1], [0, 0, 1, 1], [], []>} : vector<8x4xbf16>, vector<4x32xbf16>, vector<8x32xf32> -> vector<8x32xf32>
      %802 = arith.addf %791, %801 : vector<8x32xf32>
      %c15_483 = arith.constant 15 : index
      %c0_484 = arith.constant 0 : index
      %c0_485 = arith.constant 0 : index
      %803 = vector.load %arg16[%c15_483, %c0_484, %c0_485] : memref<16x8x1xf32, #tpu.memory_space<vmem>>, vector<1x8x1xf32>
      %804 = vector.shape_cast %803 : vector<1x8x1xf32> to vector<8x1xf32>
      %805 = tpu.reciprocal %804 {approx = true} : vector<8x1xf32> -> vector<8x1xf32>
      %c15_486 = arith.constant 15 : index
      %c0_487 = arith.constant 0 : index
      %c0_488 = arith.constant 0 : index
      %806 = vector.load %arg17[%c15_486, %c0_487, %c0_488] : memref<16x8x4xf32, #tpu.memory_space<vmem>>, vector<1x8x4xf32>
      %807 = vector.shape_cast %806 : vector<1x8x4xf32> to vector<8x4xf32>
      %808 = vector.broadcast %805 : vector<8x1xf32> to vector<8x4xf32>
      %809 = arith.mulf %807, %808 : vector<8x4xf32>
      %810 = arith.truncf %809 : vector<8x4xf32> to vector<8x4xbf16>
      %811 = vector.extract_strided_slice %630 {offsets = [28, 0], sizes = [4, 32], strides = [1, 1]} : vector<32x32xbf16> to vector<4x32xbf16>
      %cst_489 = arith.constant dense<0.000000e+00> : vector<8x32xf32>
      %812 = tpu.matmul %810, %811, %cst_489 {dimension_numbers = #tpu.dot_dimension_numbers<[1], [0], [0], [1], [0, 0, 1, 1], [], []>} : vector<8x4xbf16>, vector<4x32xbf16>, vector<8x32xf32> -> vector<8x32xf32>
      %813 = arith.addf %802, %812 : vector<8x32xf32>
      %814 = vector.broadcast %629 : vector<1x32xf32> to vector<8x32xf32>
      %815 = arith.addf %813, %814 : vector<8x32xf32>
      %c1_490 = arith.constant 1 : index
      %c0_491 = arith.constant 0 : index
      %c0_492 = arith.constant 0 : index
      %816 = vector.load %arg13[%c1_490, %c0_491, %c0_492] : memref<2x8x32xf32, #tpu.memory_space<vmem>>, vector<1x8x32xf32>
      %817 = vector.shape_cast %816 : vector<1x8x32xf32> to vector<8x32xf32>
      %818 = vector.shape_cast %815 : vector<8x32xf32> to vector<1x8x32xf32>
      tpu.vector_store %arg13[%c1_490, %c0_491, %c0_492], %818 {strides = array<i32>} : memref<2x8x32xf32, #tpu.memory_space<vmem>>, vector<1x8x32xf32>,
    } else {
    }
    return
  }
  func.func @transform_0(%arg0: i32, %arg1: i32, %arg2: i32) -> (i32, i32, i32) {
    %c0_i32 = arith.constant 0 : i32
    %c0_i32_0 = arith.constant 0 : i32
    return %arg0, %arg1, %c0_i32 : i32, i32, i32
  }
  func.func @transform_1(%arg0: i32, %arg1: i32, %arg2: i32) -> (i32, i32, i32) {
    %c0_i32 = arith.constant 0 : i32
    %c0_i32_0 = arith.constant 0 : i32
    return %arg0, %arg2, %c0_i32 : i32, i32, i32
  }
  func.func @transform_2(%arg0: i32, %arg1: i32, %arg2: i32) -> (i32, i32) {
    %c0_i32 = arith.constant 0 : i32
    %c0_i32_0 = arith.constant 0 : i32
    %c0_i32_1 = arith.constant 0 : i32
    return %c0_i32, %c0_i32_0 : i32, i32
  }
  func.func @transform_3(%arg0: i32, %arg1: i32, %arg2: i32) -> (i32, i32) {
    %c0_i32 = arith.constant 0 : i32
    %c0_i32_0 = arith.constant 0 : i32
    %c0_i32_1 = arith.constant 0 : i32
    return %c0_i32, %c0_i32_0 : i32, i32
  }
  func.func @transform_4(%arg0: i32, %arg1: i32, %arg2: i32) -> (i32, i32) {
    %c0_i32 = arith.constant 0 : i32
    %c0_i32_0 = arith.constant 0 : i32
    %c0_i32_1 = arith.constant 0 : i32
    return %c0_i32, %c0_i32_0 : i32, i32
  }
  func.func @transform_5(%arg0: i32, %arg1: i32, %arg2: i32) -> (i32, i32) {
    %c0_i32 = arith.constant 0 : i32
    %c0_i32_0 = arith.constant 0 : i32
    %c0_i32_1 = arith.constant 0 : i32
    return %c0_i32, %c0_i32_0 : i32, i32
  }
  func.func @transform_6(%arg0: i32, %arg1: i32, %arg2: i32) -> (i32, i32) {
    %c0_i32 = arith.constant 0 : i32
    %c0_i32_0 = arith.constant 0 : i32
    %c0_i32_1 = arith.constant 0 : i32
    return %c0_i32, %c0_i32_0 : i32, i32
  }
  func.func @transform_7(%arg0: i32, %arg1: i32, %arg2: i32) -> (i32, i32) {
    %c0_i32 = arith.constant 0 : i32
    %c0_i32_0 = arith.constant 0 : i32
    %c0_i32_1 = arith.constant 0 : i32
    return %c0_i32, %c0_i32_0 : i32, i32
  }
  func.func @transform_8(%arg0: i32, %arg1: i32, %arg2: i32) -> (i32, i32) {
    %c0_i32 = arith.constant 0 : i32
    %c0_i32_0 = arith.constant 0 : i32
    %c0_i32_1 = arith.constant 0 : i32
    return %c0_i32, %c0_i32_0 : i32, i32
  }
  func.func @transform_9(%arg0: i32, %arg1: i32, %arg2: i32) -> (i32, i32) {
    %c0_i32 = arith.constant 0 : i32
    %c0_i32_0 = arith.constant 0 : i32
    %c0_i32_1 = arith.constant 0 : i32
    return %c0_i32, %c0_i32_0 : i32, i32
  }
  func.func @transform_10(%arg0: i32, %arg1: i32, %arg2: i32) -> (i32, i32, i32) {
    %c0_i32 = arith.constant 0 : i32
    %c0_i32_0 = arith.constant 0 : i32
    return %arg0, %arg1, %c0_i32 : i32, i32, i32
  }
}

</mosaic_0001>

<llo_original>
// kernel: tpu_custom_call.1
$region0: #{tpu_custom_call.1}
  #allocation0 [shape = 'u32[]', space=smem, size = 0x4, offset = 0x4, fixed_abs, tag = 'smem constant byte address 0x4 - core index']
  #allocation1 [shape = 'u32[144,128]{1,0:T(1,128)}', space=vmem, size = 0x12000, scoped, tag = 'internal scratch']
  #allocation2 [shape = 'bf16[16,32]{1,0:T(16,128)(2,1)}', space=vmem, size = 0x1000, scoped, tag = 'scratch operand']
  #allocation3 [shape = 'f32[16,8,1]{2,1,0:T(8,128)}', space=vmem, size = 0x10000, scoped, tag = 'scratch operand']
  #allocation4 [shape = 'f32[16,8,1]{2,1,0:T(8,128)}', space=vmem, size = 0x10000, scoped, tag = 'scratch operand']
  #allocation5 [shape = 'f32[16,8,4]{2,1,0:T(8,128)}', space=vmem, size = 0x10000, scoped, tag = 'scratch operand']
  %s0 = inlined_call_operand.hbm [shape: bf16[2,8,32], index: 0, kind: input, shape index: {}]
  %s1 = inlined_call_operand.hbm [shape: bf16[2,8,32], index: 1, kind: input, shape index: {}]
  %s2 = inlined_call_operand.hbm [shape: bf16[32,32], index: 2, kind: input, shape index: {}]
  %s3 = inlined_call_operand.vmem [shape: f32[1,32], index: 3, kind: input, shape index: {}]
  %s4 = inlined_call_operand.hbm [shape: bf16[32,32], index: 4, kind: input, shape index: {}]
  %s5 = inlined_call_operand.vmem [shape: f32[1,32], index: 5, kind: input, shape index: {}]
  %s6 = inlined_call_operand.vmem [shape: bf16[32,32], index: 6, kind: input, shape index: {}]
  %s7 = inlined_call_operand.vmem [shape: f32[1,32], index: 7, kind: input, shape index: {}]
  %s8 = inlined_call_operand.hbm [shape: bf16[32,32], index: 8, kind: input, shape index: {}]
  %s9 = inlined_call_operand.vmem [shape: f32[1,32], index: 9, kind: input, shape index: {}]
  %s10 = inlined_call_operand.hbm [shape: f32[2,8,32], index: 10, kind: output, shape index: {}]
  %s11 = sld [smem:[#allocation0]]
  $region78: #{tpu_custom_call.1} parent=0
    _
  %s13 = ssub.s32 1, %s11
  %s14 = scalar_select 0, %s13, %s11
  $region1: #{tpu_custom_call.1} parent=0
    #allocation6 [shape = 'u8[4096]{0}', space=vmem, size = 0x1000, scoped, tag = 'input window, operand 0, single buffered']
    #allocation7 [shape = 's32[1]{0}', space=sflag, size = 0x4, scoped, tag = 'scoped memory for tpu_custom_call.1']
    #allocation8 [shape = 's32[1]{0}', space=sflag, size = 0x4, scoped, tag = 'scoped memory for tpu_custom_call.1']
    #allocation9 [shape = 'u8[4096]{0}', space=vmem, size = 0x1000, scoped, tag = 'input window, operand 1, single buffered']
    #allocation10 [shape = 's32[1]{0}', space=sflag, size = 0x4, scoped, tag = 'scoped memory for tpu_custom_call.1']
    #allocation11 [shape = 'u8[8192]{0}', space=vmem, size = 0x2000, scoped, tag = 'input window, operand 2, single buffered']
    #allocation12 [shape = 'u8[8192]{0}', space=vmem, size = 0x2000, scoped, tag = 'input window, operand 4, single buffered']
    #allocation13 [shape = 's32[1]{0}', space=sflag, size = 0x4, scoped, tag = 'scoped memory for tpu_custom_call.1']
    #allocation14 [shape = 'u8[8192]{0}', space=vmem, size = 0x2000, scoped, tag = 'input window, operand 8, single buffered']
    #allocation15 [shape = 'u8[8192]{0}', space=vmem, size = 0x2000, scoped, tag = 'output window, operand 0, single buffered']
    %15 = vsyncpa [#allocation7], 0
    %16 = vsyncpa [#allocation10], 0
    %17 = vsyncpa [#allocation13], 0
    %18 = vsyncpa [#allocation8], 0
    // Predicated region
    $region2: #{tpu_custom_call.1} parent=1 // pred_check
      _
    $region3: #{tpu_custom_call.1} parent=1 // pred_check_branch
      %20 = sbr.rel (0) target = $region5
    $region4: #{tpu_custom_call.1} parent=1 // pred_region
      %s22 = ssub.s32 128, 128
      %23 = vsyncadd [#allocation7], %s22
      %s24 = sshll.u32 [#allocation6], 4
      %s25 = int_to_ptr.vmem [resolvable:$true] %s24
      %30 = dma.hbm_to_vmem [thread:$0]  %s0, 128, %s25, [#allocation7], 64, 64, 4
    $region5: #{tpu_custom_call.1} parent=1 // pred_fallthru
      _
    // Predicated region
    $region6: #{tpu_custom_call.1} parent=1 // pred_check
      _
    $region7: #{tpu_custom_call.1} parent=1 // pred_check_branch
      %32 = sbr.rel (0) target = $region9
    $region8: #{tpu_custom_call.1} parent=1 // pred_region
      %s34 = ssub.s32 128, 128
      %35 = vsyncadd [#allocation10], %s34
      %s36 = sshll.u32 [#allocation9], 4
      %s37 = int_to_ptr.vmem [resolvable:$true] %s36
      %42 = dma.hbm_to_vmem [thread:$0]  %s1, 128, %s37, [#allocation10], 64, 64, 4
    $region9: #{tpu_custom_call.1} parent=1 // pred_fallthru
      _
    // Predicated region
    $region10: #{tpu_custom_call.1} parent=1 // pred_check
      _
    $region11: #{tpu_custom_call.1} parent=1 // pred_check_branch
      %44 = sbr.rel (0) target = $region13
    $region12: #{tpu_custom_call.1} parent=1 // pred_region
      %s46 = ssub.s32 256, 256
      %47 = vsyncadd [#allocation10], %s46
      %s48 = sshll.u32 [#allocation11], 4
      %s49 = int_to_ptr.vmem [resolvable:$true] %s48
      %54 = dma.hbm_to_vmem [thread:$0]  %s2, 256, %s49, [#allocation10], 64, 64, 4
    $region13: #{tpu_custom_call.1} parent=1 // pred_fallthru
      _
    // Predicated region
    $region14: #{tpu_custom_call.1} parent=1 // pred_check
      _
    $region15: #{tpu_custom_call.1} parent=1 // pred_check_branch
      %56 = sbr.rel (0) target = $region17
    $region16: #{tpu_custom_call.1} parent=1 // pred_region
      _
    $region17: #{tpu_custom_call.1} parent=1 // pred_fallthru
      _
    // Predicated region
    $region18: #{tpu_custom_call.1} parent=1 // pred_check
      _
    $region19: #{tpu_custom_call.1} parent=1 // pred_check_branch
      %58 = sbr.rel (0) target = $region21
    $region20: #{tpu_custom_call.1} parent=1 // pred_region
      %s60 = ssub.s32 256, 256
      %61 = vsyncadd [#allocation13], %s60
      %s62 = sshll.u32 [#allocation12], 4
      %s63 = int_to_ptr.vmem [resolvable:$true] %s62
      %68 = dma.hbm_to_vmem [thread:$0]  %s4, 256, %s63, [#allocation13], 64, 64, 4
    $region21: #{tpu_custom_call.1} parent=1 // pred_fallthru
      _
    // Predicated region
    $region22: #{tpu_custom_call.1} parent=1 // pred_check
      _
    $region23: #{tpu_custom_call.1} parent=1 // pred_check_branch
      %70 = sbr.rel (0) target = $region25
    $region24: #{tpu_custom_call.1} parent=1 // pred_region
      _
    $region25: #{tpu_custom_call.1} parent=1 // pred_fallthru
      _
    // Predicated region
    $region26: #{tpu_custom_call.1} parent=1 // pred_check
      _
    $region27: #{tpu_custom_call.1} parent=1 // pred_check_branch
      %72 = sbr.rel (0) target = $region29
    $region28: #{tpu_custom_call.1} parent=1 // pred_region
      _
    $region29: #{tpu_custom_call.1} parent=1 // pred_fallthru
      _
    // Predicated region
    $region30: #{tpu_custom_call.1} parent=1 // pred_check
      _
    $region31: #{tpu_custom_call.1} parent=1 // pred_check_branch
      %74 = sbr.rel (0) target = $region33
    $region32: #{tpu_custom_call.1} parent=1 // pred_region
      _
    $region33: #{tpu_custom_call.1} parent=1 // pred_fallthru
      _
    // Predicated region
    $region34: #{tpu_custom_call.1} parent=1 // pred_check
      _
    $region35: #{tpu_custom_call.1} parent=1 // pred_check_branch
      %76 = sbr.rel (0) target = $region37
    $region36: #{tpu_custom_call.1} parent=1 // pred_region
      %s78 = ssub.s32 256, 256
      %79 = vsyncadd [#allocation13], %s78
      %s80 = sshll.u32 [#allocation14], 4
      %s81 = int_to_ptr.vmem [resolvable:$true] %s80
      %86 = dma.hbm_to_vmem [thread:$0]  %s8, 256, %s81, [#allocation13], 64, 64, 4
    $region37: #{tpu_custom_call.1} parent=1 // pred_fallthru
      _
    // Predicated region
    $region38: #{tpu_custom_call.1} parent=1 // pred_check
      _
    $region39: #{tpu_custom_call.1} parent=1 // pred_check_branch
      %88 = sbr.rel (0) target = $region41
    $region40: #{tpu_custom_call.1} parent=1 // pred_region
      _
    $region41: #{tpu_custom_call.1} parent=1 // pred_fallthru
      _
    // Predicated region
    $region42: #{tpu_custom_call.1} parent=1 // pred_check
      _
    $region43: #{tpu_custom_call.1} parent=1 // pred_check_branch
      %90 = sbr.rel (0) target = $region45
    $region44: #{tpu_custom_call.1} parent=1 // pred_region
      %91 = dma.done [#allocation7], 128
    $region45: #{tpu_custom_call.1} parent=1 // pred_fallthru
      _
    // Predicated region
    $region46: #{tpu_custom_call.1} parent=1 // pred_check
      _
    $region47: #{tpu_custom_call.1} parent=1 // pred_check_branch
      %93 = sbr.rel (0) target = $region49
    $region48: #{tpu_custom_call.1} parent=1 // pred_region
      %94 = dma.done [#allocation10], 128
    $region49: #{tpu_custom_call.1} parent=1 // pred_fallthru
      _
    // Predicated region
    $region50: #{tpu_custom_call.1} parent=1 // pred_check
      _
    $region51: #{tpu_custom_call.1} parent=1 // pred_check_branch
      %96 = sbr.rel (0) target = $region53
    $region52: #{tpu_custom_call.1} parent=1 // pred_region
      %97 = dma.done [#allocation10], 256
    $region53: #{tpu_custom_call.1} parent=1 // pred_fallthru
      _
    // Predicated region
    $region54: #{tpu_custom_call.1} parent=1 // pred_check
      _
    $region55: #{tpu_custom_call.1} parent=1 // pred_check_branch
      %99 = sbr.rel (0) target = $region57
    $region56: #{tpu_custom_call.1} parent=1 // pred_region
      %100 = dma.done [#allocation13], 256
    $region57: #{tpu_custom_call.1} parent=1 // pred_fallthru
      _
    // Predicated region
    $region58: #{tpu_custom_call.1} parent=1 // pred_check
      _
    $region59: #{tpu_custom_call.1} parent=1 // pred_check_branch
      %102 = sbr.rel (0) target = $region61
    $region60: #{tpu_custom_call.1} parent=1 // pred_region
      %103 = dma.done [#allocation13], 256
    $region61: #{tpu_custom_call.1} parent=1 // pred_fallthru
      _
    %p105 = scmp.eq.s32.totalorder 0, 0
    // Predicated region
    $region62: #{tpu_custom_call.1} parent=1 // pred_check
      %p106 = pneg %p105
    $region63: #{tpu_custom_call.1} parent=1 // pred_check_branch
      %108 = sbr.rel (%p106) target = $region65
    $region64: #{tpu_custom_call.1} parent=1 // pred_region
      %vm109 = vcmask 7168
      %110 = vst.msk [vmem:[#allocation3] sm:$0xff] %vm109, -inf
      %111 = vst.msk [vmem:[#allocation3 + $0x8] sm:$0xff] %vm109, -inf
      %112 = vst.msk [vmem:[#allocation3 + $0x10] sm:$0xff] %vm109, -inf
      %113 = vst.msk [vmem:[#allocation3 + $0x18] sm:$0xff] %vm109, -inf
      %114 = vst.msk [vmem:[#allocation3 + $0x20] sm:$0xff] %vm109, -inf
      %115 = vst.msk [vmem:[#allocation3 + $0x28] sm:$0xff] %vm109, -inf
      %116 = vst.msk [vmem:[#allocation3 + $0x30] sm:$0xff] %vm109, -inf
      %117 = vst.msk [vmem:[#allocation3 + $0x38] sm:$0xff] %vm109, -inf
      %118 = vst.msk [vmem:[#allocation3 + $0x40] sm:$0xff] %vm109, -inf
      %119 = vst.msk [vmem:[#allocation3 + $0x48] sm:$0xff] %vm109, -inf
      %120 = vst.msk [vmem:[#allocation3 + $0x50] sm:$0xff] %vm109, -inf
      %121 = vst.msk [vmem:[#allocation3 + $0x58] sm:$0xff] %vm109, -inf
      %122 = vst.msk [vmem:[#allocation3 + $0x60] sm:$0xff] %vm109, -inf
      %123 = vst.msk [vmem:[#allocation3 + $0x68] sm:$0xff] %vm109, -inf
      %124 = vst.msk [vmem:[#allocation3 + $0x70] sm:$0xff] %vm109, -inf
      %125 = vst.msk [vmem:[#allocation3 + $0x78] sm:$0xff] %vm109, -inf
      %126 = vst.msk [vmem:[#allocation4] sm:$0xff] %vm109, 0.0
      %127 = vst.msk [vmem:[#allocation4 + $0x8] sm:$0xff] %vm109, 0.0
      %128 = vst.msk [vmem:[#allocation4 + $0x10] sm:$0xff] %vm109, 0.0
      %129 = vst.msk [vmem:[#allocation4 + $0x18] sm:$0xff] %vm109, 0.0
      %130 = vst.msk [vmem:[#allocation4 + $0x20] sm:$0xff] %vm109, 0.0
      %131 = vst.msk [vmem:[#allocation4 + $0x28] sm:$0xff] %vm109, 0.0
      %132 = vst.msk [vmem:[#allocation4 + $0x30] sm:$0xff] %vm109, 0.0
      %133 = vst.msk [vmem:[#allocation4 + $0x38] sm:$0xff] %vm109, 0.0
      %134 = vst.msk [vmem:[#allocation4 + $0x40] sm:$0xff] %vm109, 0.0
      %135 = vst.msk [vmem:[#allocation4 + $0x48] sm:$0xff] %vm109, 0.0
      %136 = vst.msk [vmem:[#allocation4 + $0x50] sm:$0xff] %vm109, 0.0
      %137 = vst.msk [vmem:[#allocation4 + $0x58] sm:$0xff] %vm109, 0.0
      %138 = vst.msk [vmem:[#allocation4 + $0x60] sm:$0xff] %vm109, 0.0
      %139 = vst.msk [vmem:[#allocation4 + $0x68] sm:$0xff] %vm109, 0.0
      %140 = vst.msk [vmem:[#allocation4 + $0x70] sm:$0xff] %vm109, 0.0
      %141 = vst.msk [vmem:[#allocation4 + $0x78] sm:$0xff] %vm109, 0.0
      %vm142 = vcmask 31744
      %143 = vst.msk [vmem:[#allocation5] sm:$0xff] %vm142, 0.0
      %144 = vst.msk [vmem:[#allocation5 + $0x8] sm:$0xff] %vm142, 0.0
      %145 = vst.msk [vmem:[#allocation5 + $0x10] sm:$0xff] %vm142, 0.0
      %146 = vst.msk [vmem:[#allocation5 + $0x18] sm:$0xff] %vm142, 0.0
      %147 = vst.msk [vmem:[#allocation5 + $0x20] sm:$0xff] %vm142, 0.0
      %148 = vst.msk [vmem:[#allocation5 + $0x28] sm:$0xff] %vm142, 0.0
      %149 = vst.msk [vmem:[#allocation5 + $0x30] sm:$0xff] %vm142, 0.0
      %150 = vst.msk [vmem:[#allocation5 + $0x38] sm:$0xff] %vm142, 0.0
      %151 = vst.msk [vmem:[#allocation5 + $0x40] sm:$0xff] %vm142, 0.0
      %152 = vst.msk [vmem:[#allocation5 + $0x48] sm:$0xff] %vm142, 0.0
      %153 = vst.msk [vmem:[#allocation5 + $0x50] sm:$0xff] %vm142, 0.0
      %154 = vst.msk [vmem:[#allocation5 + $0x58] sm:$0xff] %vm142, 0.0
      %155 = vst.msk [vmem:[#allocation5 + $0x60] sm:$0xff] %vm142, 0.0
      %156 = vst.msk [vmem:[#allocation5 + $0x68] sm:$0xff] %vm142, 0.0
      %157 = vst.msk [vmem:[#allocation5 + $0x70] sm:$0xff] %vm142, 0.0
      %158 = vst.msk [vmem:[#allocation5 + $0x78] sm:$0xff] %vm142, 0.0
      %v159 = vld [vmem:[#allocation6] sm:$0xf]
      %v160 = vld [vmem:[#allocation6 + $0x4] sm:$0xf]
      %v161 = vld [vmem:[#allocation11] sm:$0xf]
      %v162 = vld [vmem:[#allocation11 + $0x4] sm:$0xf]
      %v163 = vld [vmem:[#allocation11 + $0x8] sm:$0xf]
      %v164 = vld [vmem:[#allocation11 + $0xc] sm:$0xf]
      %v165 = vld [vmem:[%s3] sm:$0x1]
      %v167 = vlaneseq
      %v168 = vshrl.u32 %v167, 7
      %v169 = vsub.s32 0, %v168
      %v170 = vrot.slane %v165, %v169
      %v174 = vunpack.c.l.b16 %v159
      %v175 = vunpack.c.l.b16 %v160
      %v176 = vpack.c.b16 %v175, %v174
      %v181 = vunpack.c.l.b16 %v161
      %v182 = vunpack.c.l.b16 %v162
      %v183 = vunpack.c.l.b16 %v163
      %v184 = vunpack.c.l.b16 %v164
      %v185 = vpack.c.b16 %v182, %v181
      %v186 = vpack.c.b16 %v184, %v183
      %vm189 = vcmask 261120
      %v191 = vsel %vm189, %v176, 0
      %193 = vmatprep.subr.bf16.mxu0 0
      %194 = vmatpush1.bf16.msra.mxu0 %v185
      %195 = vmatprep.subr.bf16.mxu0 0
      %196 = vmatpush1.bf16.msra.mxu0 %v186
      %197 = vmatprep.subr.bf16.mxu0 0
      %198 = vmatpush1.bf16.msra.mxu0 0
      %199 = vmatprep.subr.bf16.mxu0 0
      %200 = vmatpush1.bf16.msra.mxu0 0
      %201 = vmatprep.subr.bf16.mxu0 0
      %202 = vmatpush1.bf16.msra.mxu0 0
      %203 = vmatprep.subr.bf16.mxu0 0
      %204 = vmatpush1.bf16.msra.mxu0 0
      %205 = vmatprep.subr.bf16.mxu0 0
      %206 = vmatpush1.bf16.msra.mxu0 0
      %207 = vmatprep.subr.bf16.mxu0 0
      %208 = vmatpush1.bf16.msra.mxu0 0
      %209 = vmatprep.subr.bf16.mxu0 0
      %210 = vmatpush1.bf16.msra.mxu0 0
      %211 = vmatprep.subr.bf16.mxu0 0
      %212 = vmatpush1.bf16.msra.mxu0 0
      %213 = vmatprep.subr.bf16.mxu0 0
      %214 = vmatpush1.bf16.msra.mxu0 0
      %215 = vmatprep.subr.bf16.mxu0 0
      %216 = vmatpush1.bf16.msra.mxu0 0
      %217 = vmatprep.subr.bf16.mxu0 0
      %218 = vmatpush1.bf16.msra.mxu0 0
      %219 = vmatprep.subr.bf16.mxu0 0
      %220 = vmatpush1.bf16.msra.mxu0 0
      %221 = vmatprep.subr.bf16.mxu0 0
      %222 = vmatpush1.bf16.msra.mxu0 0
      %223 = vmatprep.subr.bf16.mxu0 0
      %224 = vmatpush1.bf16.msra.mxu0 0
      %225 = vmatprep.mubr.bf16.mxu0 0
      %226 = vmatmul.mubr.bf16.gmra.mrb[0].mxu0 %v191
      %v227 = vpop.f32.mrb[0].mxu0
      %v228 = vadd.f32 %v170, %v227
      %v229 = vpop.f32.mrb[0].mxu0
      %v230 = vpop.f32.mrb[0].mxu0
      %v231 = vadd.f32 %v170, %v230
      %v232 = vpop.f32.mrb[0].mxu0
      %233 = vdwg.mxu0
      %v234 = vpack.c.bf16 %v231, %v228
      %235 = vst.msk [vmem:[#allocation2] sm:$0xff] %vm189, %v234
    $region65: #{tpu_custom_call.1} parent=1 // pred_fallthru
      _
    %v236 = vld [vmem:[#allocation9] sm:$0xf]
    %v237 = vld [vmem:[#allocation9 + $0x4] sm:$0xf]
    %v238 = vld [vmem:[#allocation12] sm:$0xf]
    %v239 = vld [vmem:[#allocation12 + $0x4] sm:$0xf]
    %v240 = vld [vmem:[#allocation12 + $0x8] sm:$0xf]
    %v241 = vld [vmem:[#allocation12 + $0xc] sm:$0xf]
    %v242 = vld [vmem:[%s5] sm:$0x1]
    %v244 = vlaneseq
    %v245 = vshrl.u32 %v244, 7
    %v246 = vsub.s32 0, %v245
    %v247 = vrot.slane %v242, %v246
    %v251 = vunpack.c.l.b16 %v236
    %v252 = vunpack.c.l.b16 %v237
    %v253 = vpack.c.b16 %v252, %v251
    %v258 = vunpack.c.l.b16 %v238
    %v259 = vunpack.c.l.b16 %v239
    %v260 = vunpack.c.l.b16 %v240
    %v261 = vunpack.c.l.b16 %v241
    %v262 = vpack.c.b16 %v259, %v258
    %v263 = vpack.c.b16 %v261, %v260
    %vm266 = vcmask 261120
    %v268 = vsel %vm266, %v253, 0
    %270 = vmatprep.subr.bf16.mxu0 0
    %271 = vmatpush1.bf16.msra.mxu0 %v262
    %272 = vmatprep.subr.bf16.mxu0 0
    %273 = vmatpush1.bf16.msra.mxu0 %v263
    %274 = vmatprep.subr.bf16.mxu0 0
    %275 = vmatpush1.bf16.msra.mxu0 0
    %276 = vmatprep.subr.bf16.mxu0 0
    %277 = vmatpush1.bf16.msra.mxu0 0
    %278 = vmatprep.subr.bf16.mxu0 0
    %279 = vmatpush1.bf16.msra.mxu0 0
    %280 = vmatprep.subr.bf16.mxu0 0
    %281 = vmatpush1.bf16.msra.mxu0 0
    %282 = vmatprep.subr.bf16.mxu0 0
    %283 = vmatpush1.bf16.msra.mxu0 0
    %284 = vmatprep.subr.bf16.mxu0 0
    %285 = vmatpush1.bf16.msra.mxu0 0
    %286 = vmatprep.subr.bf16.mxu0 0
    %287 = vmatpush1.bf16.msra.mxu0 0
    %288 = vmatprep.subr.bf16.mxu0 0
    %289 = vmatpush1.bf16.msra.mxu0 0
    %290 = vmatprep.subr.bf16.mxu0 0
    %291 = vmatpush1.bf16.msra.mxu0 0
    %292 = vmatprep.subr.bf16.mxu0 0
    %293 = vmatpush1.bf16.msra.mxu0 0
    %294 = vmatprep.subr.bf16.mxu0 0
    %295 = vmatpush1.bf16.msra.mxu0 0
    %296 = vmatprep.subr.bf16.mxu0 0
    %297 = vmatpush1.bf16.msra.mxu0 0
    %298 = vmatprep.subr.bf16.mxu0 0
    %299 = vmatpush1.bf16.msra.mxu0 0
    %300 = vmatprep.subr.bf16.mxu0 0
    %301 = vmatpush1.bf16.msra.mxu0 0
    %302 = vmatprep.mubr.bf16.mxu0 0
    %303 = vmatmul.mubr.bf16.gmra.mrb[0].mxu0 %v268
    %v304 = vpop.f32.mrb[0].mxu0
    %v305 = vadd.f32 %v247, %v304
    %v306 = vpop.f32.mrb[0].mxu0
    %v307 = vpop.f32.mrb[0].mxu0
    %v308 = vadd.f32 %v247, %v307
    %v309 = vpop.f32.mrb[0].mxu0
    %310 = vdwg.mxu0
    %v311 = vpack.c.bf16 %v308, %v305
    %v312 = vld [vmem:[%s6] sm:$0xf]
    %v313 = vld [vmem:[%s6 + $0x4] sm:$0xf]
    %v314 = vld [vmem:[%s6 + $0x8] sm:$0xf]
    %v315 = vld [vmem:[%s6 + $0xc] sm:$0xf]
    %v316 = vld [vmem:[%s7] sm:$0x1]
    %v318 = vlaneseq
    %v319 = vshrl.u32 %v318, 7
    %v320 = vsub.s32 0, %v319
    %v321 = vrot.slane %v316, %v320
    %v327 = vunpack.c.l.b16 %v312
    %v328 = vunpack.c.l.b16 %v313
    %v329 = vunpack.c.l.b16 %v314
    %v330 = vunpack.c.l.b16 %v315
    %v331 = vpack.c.b16 %v328, %v327
    %v332 = vpack.c.b16 %v330, %v329
    %335 = vmatprep.subr.bf16.mxu0 0
    %336 = vmatpush1.bf16.msra.mxu0 %v331
    %337 = vmatprep.subr.bf16.mxu0 0
    %338 = vmatpush1.bf16.msra.mxu0 %v332
    %339 = vmatprep.subr.bf16.mxu0 0
    %340 = vmatpush1.bf16.msra.mxu0 0
    %341 = vmatprep.subr.bf16.mxu0 0
    %342 = vmatpush1.bf16.msra.mxu0 0
    %343 = vmatprep.subr.bf16.mxu0 0
    %344 = vmatpush1.bf16.msra.mxu0 0
    %345 = vmatprep.subr.bf16.mxu0 0
    %346 = vmatpush1.bf16.msra.mxu0 0
    %347 = vmatprep.subr.bf16.mxu0 0
    %348 = vmatpush1.bf16.msra.mxu0 0
    %349 = vmatprep.subr.bf16.mxu0 0
    %350 = vmatpush1.bf16.msra.mxu0 0
    %351 = vmatprep.subr.bf16.mxu0 0
    %352 = vmatpush1.bf16.msra.mxu0 0
    %353 = vmatprep.subr.bf16.mxu0 0
    %354 = vmatpush1.bf16.msra.mxu0 0
    %355 = vmatprep.subr.bf16.mxu0 0
    %356 = vmatpush1.bf16.msra.mxu0 0
    %357 = vmatprep.subr.bf16.mxu0 0
    %358 = vmatpush1.bf16.msra.mxu0 0
    %359 = vmatprep.subr.bf16.mxu0 0
    %360 = vmatpush1.bf16.msra.mxu0 0
    %361 = vmatprep.subr.bf16.mxu0 0
    %362 = vmatpush1.bf16.msra.mxu0 0
    %363 = vmatprep.subr.bf16.mxu0 0
    %364 = vmatpush1.bf16.msra.mxu0 0
    %365 = vmatprep.subr.bf16.mxu0 0
    %366 = vmatpush1.bf16.msra.mxu0 0
    %367 = vmatprep.mubr.bf16.mxu0 0
    %368 = vmatmul.mubr.bf16.gmra.mrb[0].mxu0 %v268
    %v369 = vpop.f32.mrb[0].mxu0
    %v370 = vadd.f32 %v321, %v369
    %v371 = vpop.f32.mrb[0].mxu0
    %v372 = vpop.f32.mrb[0].mxu0
    %v373 = vadd.f32 %v321, %v372
    %v374 = vpop.f32.mrb[0].mxu0
    %375 = vdwg.mxu0
    %v376 = vpack.c.bf16 %v373, %v370
    %v377 = vld [vmem:[#allocation2] sm:$0xff]
    %vm378 = vcmask 31744
    %v380 = vsel %vm378, %v377, 0
    %v383 = vsel %vm378, %v311, 0
    %385 = vmatprep.subr.bf16.mxu0 0
    %386 = vmatpush1.bf16.xpose.msra.mxu0 %v383
    %387 = vmatprep.subr.bf16.mxu0 0
    %388 = vmatpush1.bf16.xpose.msra.mxu0 0
    %389 = vmatprep.subr.bf16.mxu0 0
    %390 = vmatpush1.bf16.xpose.msra.mxu0 0
    %391 = vmatprep.subr.bf16.mxu0 0
    %392 = vmatpush1.bf16.xpose.msra.mxu0 0
    %393 = vmatprep.subr.bf16.mxu0 0
    %394 = vmatpush1.bf16.xpose.msra.mxu0 0
    %395 = vmatprep.subr.bf16.mxu0 0
    %396 = vmatpush1.bf16.xpose.msra.mxu0 0
    %397 = vmatprep.subr.bf16.mxu0 0
    %398 = vmatpush1.bf16.xpose.msra.mxu0 0
    %399 = vmatprep.subr.bf16.mxu0 0
    %400 = vmatpush1.bf16.xpose.msra.mxu0 0
    %401 = vmatprep.subr.bf16.mxu0 0
    %402 = vmatpush1.bf16.xpose.msra.mxu0 0
    %403 = vmatprep.subr.bf16.mxu0 0
    %404 = vmatpush1.bf16.xpose.msra.mxu0 0
    %405 = vmatprep.subr.bf16.mxu0 0
    %406 = vmatpush1.bf16.xpose.msra.mxu0 0
    %407 = vmatprep.subr.bf16.mxu0 0
    %408 = vmatpush1.bf16.xpose.msra.mxu0 0
    %409 = vmatprep.subr.bf16.mxu0 0
    %410 = vmatpush1.bf16.xpose.msra.mxu0 0
    %411 = vmatprep.subr.bf16.mxu0 0
    %412 = vmatpush1.bf16.xpose.msra.mxu0 0
    %413 = vmatprep.subr.bf16.mxu0 0
    %414 = vmatpush1.bf16.xpose.msra.mxu0 0
    %415 = vmatprep.subr.bf16.mxu0 0
    %416 = vmatpush1.bf16.xpose.msra.mxu0 0
    %417 = vmatprep.mubr.bf16.mxu0 0
    %418 = vmatmul.mubr.bf16.gmra.mrb[0].mxu0 %v380
    %v419 = vpop.f32.mrb[0].mxu0
    %v420 = vadd.f32 0.0, %v419
    %v421 = vpop.f32.mrb[0].mxu0
    %v422 = vpop.f32.mrb[0].mxu0
    %v423 = vpop.f32.mrb[0].mxu0
    %424 = vdwg.mxu0
    %v425 = vmul.f32 %v420, 0.5
    %v426 = vld [vmem:[#allocation3] sm:$0xff]
    %vm427 = vcmask 64512
    %v428 = vsel %vm427, %v425, -inf
    %429 = vmax.xlane.f32.xlu0 %v428
    %v430 = vpop.xlane.xlu0 %429
    %v431 = vmax.f32 %v426, %v430
    %v432 = vsub.f32 %v426, %v431
    %v433 = vmul.f32 %v432, 1.442695
    %v434 = vpow.pop %v433
    %436 = vset.pattern.permute.xlu0 0
    %437 = vperm.xlu0 %436, %v431
    %v438 = vpop.permute.xlu0 %437
    %v440 = vsub.f32 %v425, %v438
    %v441 = vmul.f32 %v440, 1.442695
    %v442 = vpow.pop %v441
    %v443 = vld [vmem:[#allocation4] sm:$0xff]
    %v444 = vmul.f32 %v434, %v443
    %v445 = vsel %vm427, %v442, 0.0
    %446 = vadd.xlane.f32.xlu0 %v445
    %v447 = vpop.xlane.xlu0 %446
    %v448 = vadd.f32 %v444, %v447
    %vm449 = vcmask 7168
    %450 = vst.msk [vmem:[#allocation4] sm:$0xff] %vm449, %v448
    %v451 = vld [vmem:[#allocation5] sm:$0xff]
    %453 = vset.pattern.permute.xlu0 0
    %454 = vperm.xlu0 %453, %v434
    %v455 = vpop.permute.xlu0 %454
    %v457 = vmul.f32 %v455, %v451
    %v458 = vpack.c.bf16 %v442, %v442
    %v460 = vsel %vm427, %v458, 0
    %vm462 = vcmask 1043456
    %v464 = vsel %vm462, %v376, 0
    %466 = vmatprep.subr.bf16.mxu0 0
    %467 = vmatpush1.bf16.msra.mxu0 %v464
    %468 = vmatprep.subr.bf16.mxu0 0
    %469 = vmatpush1.bf16.msra.mxu0 0
    %470 = vmatprep.subr.bf16.mxu0 0
    %471 = vmatpush1.bf16.msra.mxu0 0
    %472 = vmatprep.subr.bf16.mxu0 0
    %473 = vmatpush1.bf16.msra.mxu0 0
    %474 = vmatprep.subr.bf16.mxu0 0
    %475 = vmatpush1.bf16.msra.mxu0 0
    %476 = vmatprep.subr.bf16.mxu0 0
    %477 = vmatpush1.bf16.msra.mxu0 0
    %478 = vmatprep.subr.bf16.mxu0 0
    %479 = vmatpush1.bf16.msra.mxu0 0
    %480 = vmatprep.subr.bf16.mxu0 0
    %481 = vmatpush1.bf16.msra.mxu0 0
    %482 = vmatprep.subr.bf16.mxu0 0
    %483 = vmatpush1.bf16.msra.mxu0 0
    %484 = vmatprep.subr.bf16.mxu0 0
    %485 = vmatpush1.bf16.msra.mxu0 0
    %486 = vmatprep.subr.bf16.mxu0 0
    %487 = vmatpush1.bf16.msra.mxu0 0
    %488 = vmatprep.subr.bf16.mxu0 0
    %489 = vmatpush1.bf16.msra.mxu0 0
    %490 = vmatprep.subr.bf16.mxu0 0
    %491 = vmatpush1.bf16.msra.mxu0 0
    %492 = vmatprep.subr.bf16.mxu0 0
    %493 = vmatpush1.bf16.msra.mxu0 0
    %494 = vmatprep.subr.bf16.mxu0 0
    %495 = vmatpush1.bf16.msra.mxu0 0
    %496 = vmatprep.subr.bf16.mxu0 0
    %497 = vmatpush1.bf16.msra.mxu0 0
    %498 = vmatprep.mubr.bf16.mxu0 0
    %499 = vmatmul.mubr.bf16.gmra.mrb[0].mxu0 %v460
    %v500 = vpop.f32.mrb[0].mxu0
    %v501 = vadd.f32 0.0, %v500
    %v502 = vpop.f32.mrb[0].mxu0
    %v503 = vpop.f32.mrb[0].mxu0
    %v504 = vpop.f32.mrb[0].mxu0
    %505 = vdwg.mxu0
    %v506 = vadd.f32 %v457, %v501
    %507 = vst.msk [vmem:[#allocation5] sm:$0xff] %vm378, %v506
    %508 = vst.msk [vmem:[#allocation3] sm:$0xff] %vm449, %v431
    %510 = vrot.lane.b32.xlu0 %v377, 124
    %v511 = vpop.permute.xlu0 %510
    %513 = vrot.lane.b32.xlu0 %v311, 124
    %v514 = vpop.permute.xlu0 %513
    %v516 = vsel %vm378, %v511, 0
    %v519 = vsel %vm378, %v514, 0
    %521 = vmatprep.subr.bf16.mxu0 0
    %522 = vmatpush1.bf16.xpose.msra.mxu0 %v519
    %523 = vmatprep.subr.bf16.mxu0 0
    %524 = vmatpush1.bf16.xpose.msra.mxu0 0
    %525 = vmatprep.subr.bf16.mxu0 0
    %526 = vmatpush1.bf16.xpose.msra.mxu0 0
    %527 = vmatprep.subr.bf16.mxu0 0
    %528 = vmatpush1.bf16.xpose.msra.mxu0 0
    %529 = vmatprep.subr.bf16.mxu0 0
    %530 = vmatpush1.bf16.xpose.msra.mxu0 0
    %531 = vmatprep.subr.bf16.mxu0 0
    %532 = vmatpush1.bf16.xpose.msra.mxu0 0
    %533 = vmatprep.subr.bf16.mxu0 0
    %534 = vmatpush1.bf16.xpose.msra.mxu0 0
    %535 = vmatprep.subr.bf16.mxu0 0
    %536 = vmatpush1.bf16.xpose.msra.mxu0 0
    %537 = vmatprep.subr.bf16.mxu0 0
    %538 = vmatpush1.bf16.xpose.msra.mxu0 0
    %539 = vmatprep.subr.bf16.mxu0 0
    %540 = vmatpush1.bf16.xpose.msra.mxu0 0
    %541 = vmatprep.subr.bf16.mxu0 0
    %542 = vmatpush1.bf16.xpose.msra.mxu0 0
    %543 = vmatprep.subr.bf16.mxu0 0
    %544 = vmatpush1.bf16.xpose.msra.mxu0 0
    %545 = vmatprep.subr.bf16.mxu0 0
    %546 = vmatpush1.bf16.xpose.msra.mxu0 0
    %547 = vmatprep.subr.bf16.mxu0 0
    %548 = vmatpush1.bf16.xpose.msra.mxu0 0
    %549 = vmatprep.subr.bf16.mxu0 0
    %550 = vmatpush1.bf16.xpose.msra.mxu0 0
    %551 = vmatprep.subr.bf16.mxu0 0
    %552 = vmatpush1.bf16.xpose.msra.mxu0 0
    %553 = vmatprep.mubr.bf16.mxu0 0
    %554 = vmatmul.mubr.bf16.gmra.mrb[0].mxu0 %v516
    %v555 = vpop.f32.mrb[0].mxu0
    %v556 = vadd.f32 0.0, %v555
    %v557 = vpop.f32.mrb[0].mxu0
    %v558 = vpop.f32.mrb[0].mxu0
    %v559 = vpop.f32.mrb[0].mxu0
    %560 = vdwg.mxu0
    %v561 = vmul.f32 %v556, 0.5
    %s562 = scalar_lea.vmem [#allocation3], 8
    %v563 = vld [vmem:[%s562] sm:$0xff]
    %v564 = vsel %vm427, %v561, -inf
    %565 = vmax.xlane.f32.xlu0 %v564
    %v566 = vpop.xlane.xlu0 %565
    %v567 = vmax.f32 %v563, %v566
    %v568 = vsub.f32 %v563, %v567
    %v569 = vmul.f32 %v568, 1.442695
    %v570 = vpow.pop %v569
    %572 = vset.pattern.permute.xlu0 0
    %573 = vperm.xlu0 %572, %v567
    %v574 = vpop.permute.xlu0 %573
    %v576 = vsub.f32 %v561, %v574
    %v577 = vmul.f32 %v576, 1.442695
    %v578 = vpow.pop %v577
    %s579 = scalar_lea.vmem [#allocation4], 8
    %v580 = vld [vmem:[%s579] sm:$0xff]
    %v581 = vmul.f32 %v570, %v580
    %v582 = vsel %vm427, %v578, 0.0
    %583 = vadd.xlane.f32.xlu0 %v582
    %v584 = vpop.xlane.xlu0 %583
    %v585 = vadd.f32 %v581, %v584
    %586 = vst.msk [vmem:[%s579] sm:$0xff] %vm449, %v585
    %s587 = scalar_lea.vmem [#allocation5], 8
    %v588 = vld [vmem:[%s587] sm:$0xff]
    %590 = vset.pattern.permute.xlu0 0
    %591 = vperm.xlu0 %590, %v570
    %v592 = vpop.permute.xlu0 %591
    %v594 = vmul.f32 %v592, %v588
    %v595 = vpack.c.bf16 %v578, %v578
    %597 = vrot.lane.b32.xlu0 %v376, 124
    %v598 = vpop.permute.xlu0 %597
    %v600 = vsel %vm427, %v595, 0
    %v603 = vsel %vm462, %v598, 0
    %605 = vmatprep.subr.bf16.mxu0 0
    %606 = vmatpush1.bf16.msra.mxu0 %v603
    %607 = vmatprep.subr.bf16.mxu0 0
    %608 = vmatpush1.bf16.msra.mxu0 0
    %609 = vmatprep.subr.bf16.mxu0 0
    %610 = vmatpush1.bf16.msra.mxu0 0
    %611 = vmatprep.subr.bf16.mxu0 0
    %612 = vmatpush1.bf16.msra.mxu0 0
    %613 = vmatprep.subr.bf16.mxu0 0
    %614 = vmatpush1.bf16.msra.mxu0 0
    %615 = vmatprep.subr.bf16.mxu0 0
    %616 = vmatpush1.bf16.msra.mxu0 0
    %617 = vmatprep.subr.bf16.mxu0 0
    %618 = vmatpush1.bf16.msra.mxu0 0
    %619 = vmatprep.subr.bf16.mxu0 0
    %620 = vmatpush1.bf16.msra.mxu0 0
    %621 = vmatprep.subr.bf16.mxu0 0
    %622 = vmatpush1.bf16.msra.mxu0 0
    %623 = vmatprep.subr.bf16.mxu0 0
    %624 = vmatpush1.bf16.msra.mxu0 0
    %625 = vmatprep.subr.bf16.mxu0 0
    %626 = vmatpush1.bf16.msra.mxu0 0
    %627 = vmatprep.subr.bf16.mxu0 0
    %628 = vmatpush1.bf16.msra.mxu0 0
    %629 = vmatprep.subr.bf16.mxu0 0
    %630 = vmatpush1.bf16.msra.mxu0 0
    %631 = vmatprep.subr.bf16.mxu0 0
    %632 = vmatpush1.bf16.msra.mxu0 0
    %633 = vmatprep.subr.bf16.mxu0 0
    %634 = vmatpush1.bf16.msra.mxu0 0
    %635 = vmatprep.subr.bf16.mxu0 0
    %636 = vmatpush1.bf16.msra.mxu0 0
    %637 = vmatprep.mubr.bf16.mxu0 0
    %638 = vmatmul.mubr.bf16.gmra.mrb[0].mxu0 %v600
    %v639 = vpop.f32.mrb[0].mxu0
    %v640 = vadd.f32 0.0, %v639
    %v641 = vpop.f32.mrb[0].mxu0
    %v642 = vpop.f32.mrb[0].mxu0
    %v643 = vpop.f32.mrb[0].mxu0
    %644 = vdwg.mxu0
    %v645 = vadd.f32 %v594, %v640
    %646 = vst.msk [vmem:[%s587] sm:$0xff] %vm378, %v645
    %647 = vst.msk [vmem:[%s562] sm:$0xff] %vm449, %v567
    %648 = vrot.lane.b32.xlu0 %v377, 120
    %v649 = vpop.permute.xlu0 %648
    %650 = vrot.lane.b32.xlu0 %v311, 120
    %v651 = vpop.permute.xlu0 %650
    %v653 = vsel %vm378, %v649, 0
    %v656 = vsel %vm378, %v651, 0
    %658 = vmatprep.subr.bf16.mxu0 0
    %659 = vmatpush1.bf16.xpose.msra.mxu0 %v656
    %660 = vmatprep.subr.bf16.mxu0 0
    %661 = vmatpush1.bf16.xpose.msra.mxu0 0
    %662 = vmatprep.subr.bf16.mxu0 0
    %663 = vmatpush1.bf16.xpose.msra.mxu0 0
    %664 = vmatprep.subr.bf16.mxu0 0
    %665 = vmatpush1.bf16.xpose.msra.mxu0 0
    %666 = vmatprep.subr.bf16.mxu0 0
    %667 = vmatpush1.bf16.xpose.msra.mxu0 0
    %668 = vmatprep.subr.bf16.mxu0 0
    %669 = vmatpush1.bf16.xpose.msra.mxu0 0
    %670 = vmatprep.subr.bf16.mxu0 0
    %671 = vmatpush1.bf16.xpose.msra.mxu0 0
    %672 = vmatprep.subr.bf16.mxu0 0
    %673 = vmatpush1.bf16.xpose.msra.mxu0 0
    %674 = vmatprep.subr.bf16.mxu0 0
    %675 = vmatpush1.bf16.xpose.msra.mxu0 0
    %676 = vmatprep.subr.bf16.mxu0 0
    %677 = vmatpush1.bf16.xpose.msra.mxu0 0
    %678 = vmatprep.subr.bf16.mxu0 0
    %679 = vmatpush1.bf16.xpose.msra.mxu0 0
    %680 = vmatprep.subr.bf16.mxu0 0
    %681 = vmatpush1.bf16.xpose.msra.mxu0 0
    %682 = vmatprep.subr.bf16.mxu0 0
    %683 = vmatpush1.bf16.xpose.msra.mxu0 0
    %684 = vmatprep.subr.bf16.mxu0 0
    %685 = vmatpush1.bf16.xpose.msra.mxu0 0
    %686 = vmatprep.subr.bf16.mxu0 0
    %687 = vmatpush1.bf16.xpose.msra.mxu0 0
    %688 = vmatprep.subr.bf16.mxu0 0
    %689 = vmatpush1.bf16.xpose.msra.mxu0 0
    %690 = vmatprep.mubr.bf16.mxu0 0
    %691 = vmatmul.mubr.bf16.gmra.mrb[0].mxu0 %v653
    %v692 = vpop.f32.mrb[0].mxu0
    %v693 = vadd.f32 0.0, %v692
    %v694 = vpop.f32.mrb[0].mxu0
    %v695 = vpop.f32.mrb[0].mxu0
    %v696 = vpop.f32.mrb[0].mxu0
    %697 = vdwg.mxu0
    %v698 = vmul.f32 %v693, 0.5
    %s699 = scalar_lea.vmem [#allocation3], 16
    %v700 = vld [vmem:[%s699] sm:$0xff]
    %v701 = vsel %vm427, %v698, -inf
    %702 = vmax.xlane.f32.xlu0 %v701
    %v703 = vpop.xlane.xlu0 %702
    %v704 = vmax.f32 %v700, %v703
    %v705 = vsub.f32 %v700, %v704
    %v706 = vmul.f32 %v705, 1.442695
    %v707 = vpow.pop %v706
    %709 = vset.pattern.permute.xlu0 0
    %710 = vperm.xlu0 %709, %v704
    %v711 = vpop.permute.xlu0 %710
    %v713 = vsub.f32 %v698, %v711
    %v714 = vmul.f32 %v713, 1.442695
    %v715 = vpow.pop %v714
    %s716 = scalar_lea.vmem [#allocation4], 16
    %v717 = vld [vmem:[%s716] sm:$0xff]
    %v718 = vmul.f32 %v707, %v717
    %v719 = vsel %vm427, %v715, 0.0
    %720 = vadd.xlane.f32.xlu0 %v719
    %v721 = vpop.xlane.xlu0 %720
    %v722 = vadd.f32 %v718, %v721
    %723 = vst.msk [vmem:[%s716] sm:$0xff] %vm449, %v722
    %s724 = scalar_lea.vmem [#allocation5], 16
    %v725 = vld [vmem:[%s724] sm:$0xff]
    %727 = vset.pattern.permute.xlu0 0
    %728 = vperm.xlu0 %727, %v707
    %v729 = vpop.permute.xlu0 %728
    %v731 = vmul.f32 %v729, %v725
    %v732 = vpack.c.bf16 %v715, %v715
    %733 = vrot.lane.b32.xlu0 %v376, 120
    %v734 = vpop.permute.xlu0 %733
    %v736 = vsel %vm427, %v732, 0
    %v739 = vsel %vm462, %v734, 0
    %741 = vmatprep.subr.bf16.mxu0 0
    %742 = vmatpush1.bf16.msra.mxu0 %v739
    %743 = vmatprep.subr.bf16.mxu0 0
    %744 = vmatpush1.bf16.msra.mxu0 0
    %745 = vmatprep.subr.bf16.mxu0 0
    %746 = vmatpush1.bf16.msra.mxu0 0
    %747 = vmatprep.subr.bf16.mxu0 0
    %748 = vmatpush1.bf16.msra.mxu0 0
    %749 = vmatprep.subr.bf16.mxu0 0
    %750 = vmatpush1.bf16.msra.mxu0 0
    %751 = vmatprep.subr.bf16.mxu0 0
    %752 = vmatpush1.bf16.msra.mxu0 0
    %753 = vmatprep.subr.bf16.mxu0 0
    %754 = vmatpush1.bf16.msra.mxu0 0
    %755 = vmatprep.subr.bf16.mxu0 0
    %756 = vmatpush1.bf16.msra.mxu0 0
    %757 = vmatprep.subr.bf16.mxu0 0
    %758 = vmatpush1.bf16.msra.mxu0 0
    %759 = vmatprep.subr.bf16.mxu0 0
    %760 = vmatpush1.bf16.msra.mxu0 0
    %761 = vmatprep.subr.bf16.mxu0 0
    %762 = vmatpush1.bf16.msra.mxu0 0
    %763 = vmatprep.subr.bf16.mxu0 0
    %764 = vmatpush1.bf16.msra.mxu0 0
    %765 = vmatprep.subr.bf16.mxu0 0
    %766 = vmatpush1.bf16.msra.mxu0 0
    %767 = vmatprep.subr.bf16.mxu0 0
    %768 = vmatpush1.bf16.msra.mxu0 0
    %769 = vmatprep.subr.bf16.mxu0 0
    %770 = vmatpush1.bf16.msra.mxu0 0
    %771 = vmatprep.subr.bf16.mxu0 0
    %772 = vmatpush1.bf16.msra.mxu0 0
    %773 = vmatprep.mubr.bf16.mxu0 0
    %774 = vmatmul.mubr.bf16.gmra.mrb[0].mxu0 %v736
    %v775 = vpop.f32.mrb[0].mxu0
    %v776 = vadd.f32 0.0, %v775
    %v777 = vpop.f32.mrb[0].mxu0
    %v778 = vpop.f32.mrb[0].mxu0
    %v779 = vpop.f32.mrb[0].mxu0
    %780 = vdwg.mxu0
    %v781 = vadd.f32 %v731, %v776
    %782 = vst.msk [vmem:[%s724] sm:$0xff] %vm378, %v781
    %783 = vst.msk [vmem:[%s699] sm:$0xff] %vm449, %v704
    %784 = vrot.lane.b32.xlu0 %v377, 116
    %v785 = vpop.permute.xlu0 %784
    %786 = vrot.lane.b32.xlu0 %v311, 116
    %v787 = vpop.permute.xlu0 %786
    %v789 = vsel %vm378, %v785, 0
    %v792 = vsel %vm378, %v787, 0
    %794 = vmatprep.subr.bf16.mxu0 0
    %795 = vmatpush1.bf16.xpose.msra.mxu0 %v792
    %796 = vmatprep.subr.bf16.mxu0 0
    %797 = vmatpush1.bf16.xpose.msra.mxu0 0
    %798 = vmatprep.subr.bf16.mxu0 0
    %799 = vmatpush1.bf16.xpose.msra.mxu0 0
    %800 = vmatprep.subr.bf16.mxu0 0
    %801 = vmatpush1.bf16.xpose.msra.mxu0 0
    %802 = vmatprep.subr.bf16.mxu0 0
    %803 = vmatpush1.bf16.xpose.msra.mxu0 0
    %804 = vmatprep.subr.bf16.mxu0 0
    %805 = vmatpush1.bf16.xpose.msra.mxu0 0
    %806 = vmatprep.subr.bf16.mxu0 0
    %807 = vmatpush1.bf16.xpose.msra.mxu0 0
    %808 = vmatprep.subr.bf16.mxu0 0
    %809 = vmatpush1.bf16.xpose.msra.mxu0 0
    %810 = vmatprep.subr.bf16.mxu0 0
    %811 = vmatpush1.bf16.xpose.msra.mxu0 0
    %812 = vmatprep.subr.bf16.mxu0 0
    %813 = vmatpush1.bf16.xpose.msra.mxu0 0
    %814 = vmatprep.subr.bf16.mxu0 0
    %815 = vmatpush1.bf16.xpose.msra.mxu0 0
    %816 = vmatprep.subr.bf16.mxu0 0
    %817 = vmatpush1.bf16.xpose.msra.mxu0 0
    %818 = vmatprep.subr.bf16.mxu0 0
    %819 = vmatpush1.bf16.xpose.msra.mxu0 0
    %820 = vmatprep.subr.bf16.mxu0 0
    %821 = vmatpush1.bf16.xpose.msra.mxu0 0
    %822 = vmatprep.subr.bf16.mxu0 0
    %823 = vmatpush1.bf16.xpose.msra.mxu0 0
    %824 = vmatprep.subr.bf16.mxu0 0
    %825 = vmatpush1.bf16.xpose.msra.mxu0 0
    %826 = vmatprep.mubr.bf16.mxu0 0
    %827 = vmatmul.mubr.bf16.gmra.mrb[0].mxu0 %v789
    %v828 = vpop.f32.mrb[0].mxu0
    %v829 = vadd.f32 0.0, %v828
    %v830 = vpop.f32.mrb[0].mxu0
    %v831 = vpop.f32.mrb[0].mxu0
    %v832 = vpop.f32.mrb[0].mxu0
    %833 = vdwg.mxu0
    %v834 = vmul.f32 %v829, 0.5
    %s835 = scalar_lea.vmem [#allocation3], 24
    %v836 = vld [vmem:[%s835] sm:$0xff]
    %v837 = vsel %vm427, %v834, -inf
    %838 = vmax.xlane.f32.xlu0 %v837
    %v839 = vpop.xlane.xlu0 %838
    %v840 = vmax.f32 %v836, %v839
    %v841 = vsub.f32 %v836, %v840
    %v842 = vmul.f32 %v841, 1.442695
    %v843 = vpow.pop %v842
    %845 = vset.pattern.permute.xlu0 0
    %846 = vperm.xlu0 %845, %v840
    %v847 = vpop.permute.xlu0 %846
    %v849 = vsub.f32 %v834, %v847
    %v850 = vmul.f32 %v849, 1.442695
    %v851 = vpow.pop %v850
    %s852 = scalar_lea.vmem [#allocation4], 24
    %v853 = vld [vmem:[%s852] sm:$0xff]
    %v854 = vmul.f32 %v843, %v853
    %v855 = vsel %vm427, %v851, 0.0
    %856 = vadd.xlane.f32.xlu0 %v855
    %v857 = vpop.xlane.xlu0 %856
    %v858 = vadd.f32 %v854, %v857
    %859 = vst.msk [vmem:[%s852] sm:$0xff] %vm449, %v858
    %s860 = scalar_lea.vmem [#allocation5], 24
    %v861 = vld [vmem:[%s860] sm:$0xff]
    %863 = vset.pattern.permute.xlu0 0
    %864 = vperm.xlu0 %863, %v843
    %v865 = vpop.permute.xlu0 %864
    %v867 = vmul.f32 %v865, %v861
    %v868 = vpack.c.bf16 %v851, %v851
    %869 = vrot.lane.b32.xlu0 %v376, 116
    %v870 = vpop.permute.xlu0 %869
    %v872 = vsel %vm427, %v868, 0
    %v875 = vsel %vm462, %v870, 0
    %877 = vmatprep.subr.bf16.mxu0 0
    %878 = vmatpush1.bf16.msra.mxu0 %v875
    %879 = vmatprep.subr.bf16.mxu0 0
    %880 = vmatpush1.bf16.msra.mxu0 0
    %881 = vmatprep.subr.bf16.mxu0 0
    %882 = vmatpush1.bf16.msra.mxu0 0
    %883 = vmatprep.subr.bf16.mxu0 0
    %884 = vmatpush1.bf16.msra.mxu0 0
    %885 = vmatprep.subr.bf16.mxu0 0
    %886 = vmatpush1.bf16.msra.mxu0 0
    %887 = vmatprep.subr.bf16.mxu0 0
    %888 = vmatpush1.bf16.msra.mxu0 0
    %889 = vmatprep.subr.bf16.mxu0 0
    %890 = vmatpush1.bf16.msra.mxu0 0
    %891 = vmatprep.subr.bf16.mxu0 0
    %892 = vmatpush1.bf16.msra.mxu0 0
    %893 = vmatprep.subr.bf16.mxu0 0
    %894 = vmatpush1.bf16.msra.mxu0 0
    %895 = vmatprep.subr.bf16.mxu0 0
    %896 = vmatpush1.bf16.msra.mxu0 0
    %897 = vmatprep.subr.bf16.mxu0 0
    %898 = vmatpush1.bf16.msra.mxu0 0
    %899 = vmatprep.subr.bf16.mxu0 0
    %900 = vmatpush1.bf16.msra.mxu0 0
    %901 = vmatprep.subr.bf16.mxu0 0
    %902 = vmatpush1.bf16.msra.mxu0 0
    %903 = vmatprep.subr.bf16.mxu0 0
    %904 = vmatpush1.bf16.msra.mxu0 0
    %905 = vmatprep.subr.bf16.mxu0 0
    %906 = vmatpush1.bf16.msra.mxu0 0
    %907 = vmatprep.subr.bf16.mxu0 0
    %908 = vmatpush1.bf16.msra.mxu0 0
    %909 = vmatprep.mubr.bf16.mxu0 0
    %910 = vmatmul.mubr.bf16.gmra.mrb[0].mxu0 %v872
    %v911 = vpop.f32.mrb[0].mxu0
    %v912 = vadd.f32 0.0, %v911
    %v913 = vpop.f32.mrb[0].mxu0
    %v914 = vpop.f32.mrb[0].mxu0
    %v915 = vpop.f32.mrb[0].mxu0
    %916 = vdwg.mxu0
    %v917 = vadd.f32 %v867, %v912
    %918 = vst.msk [vmem:[%s860] sm:$0xff] %vm378, %v917
    %919 = vst.msk [vmem:[%s835] sm:$0xff] %vm449, %v840
    %920 = vrot.lane.b32.xlu0 %v377, 112
    %v921 = vpop.permute.xlu0 %920
    %922 = vrot.lane.b32.xlu0 %v311, 112
    %v923 = vpop.permute.xlu0 %922
    %v925 = vsel %vm378, %v921, 0
    %v928 = vsel %vm378, %v923, 0
    %930 = vmatprep.subr.bf16.mxu0 0
    %931 = vmatpush1.bf16.xpose.msra.mxu0 %v928
    %932 = vmatprep.subr.bf16.mxu0 0
    %933 = vmatpush1.bf16.xpose.msra.mxu0 0
    %934 = vmatprep.subr.bf16.mxu0 0
    %935 = vmatpush1.bf16.xpose.msra.mxu0 0
    %936 = vmatprep.subr.bf16.mxu0 0
    %937 = vmatpush1.bf16.xpose.msra.mxu0 0
    %938 = vmatprep.subr.bf16.mxu0 0
    %939 = vmatpush1.bf16.xpose.msra.mxu0 0
    %940 = vmatprep.subr.bf16.mxu0 0
    %941 = vmatpush1.bf16.xpose.msra.mxu0 0
    %942 = vmatprep.subr.bf16.mxu0 0
    %943 = vmatpush1.bf16.xpose.msra.mxu0 0
    %944 = vmatprep.subr.bf16.mxu0 0
    %945 = vmatpush1.bf16.xpose.msra.mxu0 0
    %946 = vmatprep.subr.bf16.mxu0 0
    %947 = vmatpush1.bf16.xpose.msra.mxu0 0
    %948 = vmatprep.subr.bf16.mxu0 0
    %949 = vmatpush1.bf16.xpose.msra.mxu0 0
    %950 = vmatprep.subr.bf16.mxu0 0
    %951 = vmatpush1.bf16.xpose.msra.mxu0 0
    %952 = vmatprep.subr.bf16.mxu0 0
    %953 = vmatpush1.bf16.xpose.msra.mxu0 0
    %954 = vmatprep.subr.bf16.mxu0 0
    %955 = vmatpush1.bf16.xpose.msra.mxu0 0
    %956 = vmatprep.subr.bf16.mxu0 0
    %957 = vmatpush1.bf16.xpose.msra.mxu0 0
    %958 = vmatprep.subr.bf16.mxu0 0
    %959 = vmatpush1.bf16.xpose.msra.mxu0 0
    %960 = vmatprep.subr.bf16.mxu0 0
    %961 = vmatpush1.bf16.xpose.msra.mxu0 0
    %962 = vmatprep.mubr.bf16.mxu0 0
    %963 = vmatmul.mubr.bf16.gmra.mrb[0].mxu0 %v925
    %v964 = vpop.f32.mrb[0].mxu0
    %v965 = vadd.f32 0.0, %v964
    %v966 = vpop.f32.mrb[0].mxu0
    %v967 = vpop.f32.mrb[0].mxu0
    %v968 = vpop.f32.mrb[0].mxu0
    %969 = vdwg.mxu0
    %v970 = vmul.f32 %v965, 0.5
    %s971 = scalar_lea.vmem [#allocation3], 32
    %v972 = vld [vmem:[%s971] sm:$0xff]
    %v973 = vsel %vm427, %v970, -inf
    %974 = vmax.xlane.f32.xlu0 %v973
    %v975 = vpop.xlane.xlu0 %974
    %v976 = vmax.f32 %v972, %v975
    %v977 = vsub.f32 %v972, %v976
    %v978 = vmul.f32 %v977, 1.442695
    %v979 = vpow.pop %v978
    %981 = vset.pattern.permute.xlu0 0
    %982 = vperm.xlu0 %981, %v976
    %v983 = vpop.permute.xlu0 %982
    %v985 = vsub.f32 %v970, %v983
    %v986 = vmul.f32 %v985, 1.442695
    %v987 = vpow.pop %v986
    %s988 = scalar_lea.vmem [#allocation4], 32
    %v989 = vld [vmem:[%s988] sm:$0xff]
    %v990 = vmul.f32 %v979, %v989
    %v991 = vsel %vm427, %v987, 0.0
    %992 = vadd.xlane.f32.xlu0 %v991
    %v993 = vpop.xlane.xlu0 %992
    %v994 = vadd.f32 %v990, %v993
    %995 = vst.msk [vmem:[%s988] sm:$0xff] %vm449, %v994
    %s996 = scalar_lea.vmem [#allocation5], 32
    %v997 = vld [vmem:[%s996] sm:$0xff]
    %999 = vset.pattern.permute.xlu0 0
    %1000 = vperm.xlu0 %999, %v979
    %v1001 = vpop.permute.xlu0 %1000
    %v1003 = vmul.f32 %v1001, %v997
    %v1004 = vpack.c.bf16 %v987, %v987
    %1005 = vrot.lane.b32.xlu0 %v376, 112
    %v1006 = vpop.permute.xlu0 %1005
    %v1008 = vsel %vm427, %v1004, 0
    %v1011 = vsel %vm462, %v1006, 0
    %1013 = vmatprep.subr.bf16.mxu0 0
    %1014 = vmatpush1.bf16.msra.mxu0 %v1011
    %1015 = vmatprep.subr.bf16.mxu0 0
    %1016 = vmatpush1.bf16.msra.mxu0 0
    %1017 = vmatprep.subr.bf16.mxu0 0
    %1018 = vmatpush1.bf16.msra.mxu0 0
    %1019 = vmatprep.subr.bf16.mxu0 0
    %1020 = vmatpush1.bf16.msra.mxu0 0
    %1021 = vmatprep.subr.bf16.mxu0 0
    %1022 = vmatpush1.bf16.msra.mxu0 0
    %1023 = vmatprep.subr.bf16.mxu0 0
    %1024 = vmatpush1.bf16.msra.mxu0 0
    %1025 = vmatprep.subr.bf16.mxu0 0
    %1026 = vmatpush1.bf16.msra.mxu0 0
    %1027 = vmatprep.subr.bf16.mxu0 0
    %1028 = vmatpush1.bf16.msra.mxu0 0
    %1029 = vmatprep.subr.bf16.mxu0 0
    %1030 = vmatpush1.bf16.msra.mxu0 0
    %1031 = vmatprep.subr.bf16.mxu0 0
    %1032 = vmatpush1.bf16.msra.mxu0 0
    %1033 = vmatprep.subr.bf16.mxu0 0
    %1034 = vmatpush1.bf16.msra.mxu0 0
    %1035 = vmatprep.subr.bf16.mxu0 0
    %1036 = vmatpush1.bf16.msra.mxu0 0
    %1037 = vmatprep.subr.bf16.mxu0 0
    %1038 = vmatpush1.bf16.msra.mxu0 0
    %1039 = vmatprep.subr.bf16.mxu0 0
    %1040 = vmatpush1.bf16.msra.mxu0 0
    %1041 = vmatprep.subr.bf16.mxu0 0
    %1042 = vmatpush1.bf16.msra.mxu0 0
    %1043 = vmatprep.subr.bf16.mxu0 0
    %1044 = vmatpush1.bf16.msra.mxu0 0
    %1045 = vmatprep.mubr.bf16.mxu0 0
    %1046 = vmatmul.mubr.bf16.gmra.mrb[0].mxu0 %v1008
    %v1047 = vpop.f32.mrb[0].mxu0
    %v1048 = vadd.f32 0.0, %v1047
    %v1049 = vpop.f32.mrb[0].mxu0
    %v1050 = vpop.f32.mrb[0].mxu0
    %v1051 = vpop.f32.mrb[0].mxu0
    %1052 = vdwg.mxu0
    %v1053 = vadd.f32 %v1003, %v1048
    %1054 = vst.msk [vmem:[%s996] sm:$0xff] %vm378, %v1053
    %1055 = vst.msk [vmem:[%s971] sm:$0xff] %vm449, %v976
    %1056 = vrot.lane.b32.xlu0 %v377, 108
    %v1057 = vpop.permute.xlu0 %1056
    %1058 = vrot.lane.b32.xlu0 %v311, 108
    %v1059 = vpop.permute.xlu0 %1058
    %v1061 = vsel %vm378, %v1057, 0
    %v1064 = vsel %vm378, %v1059, 0
    %1066 = vmatprep.subr.bf16.mxu0 0
    %1067 = vmatpush1.bf16.xpose.msra.mxu0 %v1064
    %1068 = vmatprep.subr.bf16.mxu0 0
    %1069 = vmatpush1.bf16.xpose.msra.mxu0 0
    %1070 = vmatprep.subr.bf16.mxu0 0
    %1071 = vmatpush1.bf16.xpose.msra.mxu0 0
    %1072 = vmatprep.subr.bf16.mxu0 0
    %1073 = vmatpush1.bf16.xpose.msra.mxu0 0
    %1074 = vmatprep.subr.bf16.mxu0 0
    %1075 = vmatpush1.bf16.xpose.msra.mxu0 0
    %1076 = vmatprep.subr.bf16.mxu0 0
    %1077 = vmatpush1.bf16.xpose.msra.mxu0 0
    %1078 = vmatprep.subr.bf16.mxu0 0
    %1079 = vmatpush1.bf16.xpose.msra.mxu0 0
    %1080 = vmatprep.subr.bf16.mxu0 0
    %1081 = vmatpush1.bf16.xpose.msra.mxu0 0
    %1082 = vmatprep.subr.bf16.mxu0 0
    %1083 = vmatpush1.bf16.xpose.msra.mxu0 0
    %1084 = vmatprep.subr.bf16.mxu0 0
    %1085 = vmatpush1.bf16.xpose.msra.mxu0 0
    %1086 = vmatprep.subr.bf16.mxu0 0
    %1087 = vmatpush1.bf16.xpose.msra.mxu0 0
    %1088 = vmatprep.subr.bf16.mxu0 0
    %1089 = vmatpush1.bf16.xpose.msra.mxu0 0
    %1090 = vmatprep.subr.bf16.mxu0 0
    %1091 = vmatpush1.bf16.xpose.msra.mxu0 0
    %1092 = vmatprep.subr.bf16.mxu0 0
    %1093 = vmatpush1.bf16.xpose.msra.mxu0 0
    %1094 = vmatprep.subr.bf16.mxu0 0
    %1095 = vmatpush1.bf16.xpose.msra.mxu0 0
    %1096 = vmatprep.subr.bf16.mxu0 0
    %1097 = vmatpush1.bf16.xpose.msra.mxu0 0
    %1098 = vmatprep.mubr.bf16.mxu0 0
    %1099 = vmatmul.mubr.bf16.gmra.mrb[0].mxu0 %v1061
    %v1100 = vpop.f32.mrb[0].mxu0
    %v1101 = vadd.f32 0.0, %v1100
    %v1102 = vpop.f32.mrb[0].mxu0
    %v1103 = vpop.f32.mrb[0].mxu0
    %v1104 = vpop.f32.mrb[0].mxu0
    %1105 = vdwg.mxu0
    %v1106 = vmul.f32 %v1101, 0.5
    %s1107 = scalar_lea.vmem [#allocation3], 40
    %v1108 = vld [vmem:[%s1107] sm:$0xff]
    %v1109 = vsel %vm427, %v1106, -inf
    %1110 = vmax.xlane.f32.xlu0 %v1109
    %v1111 = vpop.xlane.xlu0 %1110
    %v1112 = vmax.f32 %v1108, %v1111
    %v1113 = vsub.f32 %v1108, %v1112
    %v1114 = vmul.f32 %v1113, 1.442695
    %v1115 = vpow.pop %v1114
    %1117 = vset.pattern.permute.xlu0 0
    %1118 = vperm.xlu0 %1117, %v1112
    %v1119 = vpop.permute.xlu0 %1118
    %v1121 = vsub.f32 %v1106, %v1119
    %v1122 = vmul.f32 %v1121, 1.442695
    %v1123 = vpow.pop %v1122
    %s1124 = scalar_lea.vmem [#allocation4], 40
    %v1125 = vld [vmem:[%s1124] sm:$0xff]
    %v1126 = vmul.f32 %v1115, %v1125
    %v1127 = vsel %vm427, %v1123, 0.0
    %1128 = vadd.xlane.f32.xlu0 %v1127
    %v1129 = vpop.xlane.xlu0 %1128
    %v1130 = vadd.f32 %v1126, %v1129
    %1131 = vst.msk [vmem:[%s1124] sm:$0xff] %vm449, %v1130
    %s1132 = scalar_lea.vmem [#allocation5], 40
    %v1133 = vld [vmem:[%s1132] sm:$0xff]
    %1135 = vset.pattern.permute.xlu0 0
    %1136 = vperm.xlu0 %1135, %v1115
    %v1137 = vpop.permute.xlu0 %1136
    %v1139 = vmul.f32 %v1137, %v1133
    %v1140 = vpack.c.bf16 %v1123, %v1123
    %1141 = vrot.lane.b32.xlu0 %v376, 108
    %v1142 = vpop.permute.xlu0 %1141
    %v1144 = vsel %vm427, %v1140, 0
    %v1147 = vsel %vm462, %v1142, 0
    %1149 = vmatprep.subr.bf16.mxu0 0
    %1150 = vmatpush1.bf16.msra.mxu0 %v1147
    %1151 = vmatprep.subr.bf16.mxu0 0
    %1152 = vmatpush1.bf16.msra.mxu0 0
    %1153 = vmatprep.subr.bf16.mxu0 0
    %1154 = vmatpush1.bf16.msra.mxu0 0
    %1155 = vmatprep.subr.bf16.mxu0 0
    %1156 = vmatpush1.bf16.msra.mxu0 0
    %1157 = vmatprep.subr.bf16.mxu0 0
    %1158 = vmatpush1.bf16.msra.mxu0 0
    %1159 = vmatprep.subr.bf16.mxu0 0
    %1160 = vmatpush1.bf16.msra.mxu0 0
    %1161 = vmatprep.subr.bf16.mxu0 0
    %1162 = vmatpush1.bf16.msra.mxu0 0
    %1163 = vmatprep.subr.bf16.mxu0 0
    %1164 = vmatpush1.bf16.msra.mxu0 0
    %1165 = vmatprep.subr.bf16.mxu0 0
    %1166 = vmatpush1.bf16.msra.mxu0 0
    %1167 = vmatprep.subr.bf16.mxu0 0
    %1168 = vmatpush1.bf16.msra.mxu0 0
    %1169 = vmatprep.subr.bf16.mxu0 0
    %1170 = vmatpush1.bf16.msra.mxu0 0
    %1171 = vmatprep.subr.bf16.mxu0 0
    %1172 = vmatpush1.bf16.msra.mxu0 0
    %1173 = vmatprep.subr.bf16.mxu0 0
    %1174 = vmatpush1.bf16.msra.mxu0 0
    %1175 = vmatprep.subr.bf16.mxu0 0
    %1176 = vmatpush1.bf16.msra.mxu0 0
    %1177 = vmatprep.subr.bf16.mxu0 0
    %1178 = vmatpush1.bf16.msra.mxu0 0
    %1179 = vmatprep.subr.bf16.mxu0 0
    %1180 = vmatpush1.bf16.msra.mxu0 0
    %1181 = vmatprep.mubr.bf16.mxu0 0
    %1182 = vmatmul.mubr.bf16.gmra.mrb[0].mxu0 %v1144
    %v1183 = vpop.f32.mrb[0].mxu0
    %v1184 = vadd.f32 0.0, %v1183
    %v1185 = vpop.f32.mrb[0].mxu0
    %v1186 = vpop.f32.mrb[0].mxu0
    %v1187 = vpop.f32.mrb[0].mxu0
    %1188 = vdwg.mxu0
    %v1189 = vadd.f32 %v1139, %v1184
    %1190 = vst.msk [vmem:[%s1132] sm:$0xff] %vm378, %v1189
    %1191 = vst.msk [vmem:[%s1107] sm:$0xff] %vm449, %v1112
    %1192 = vrot.lane.b32.xlu0 %v377, 104
    %v1193 = vpop.permute.xlu0 %1192
    %1194 = vrot.lane.b32.xlu0 %v311, 104
    %v1195 = vpop.permute.xlu0 %1194
    %v1197 = vsel %vm378, %v1193, 0
    %v1200 = vsel %vm378, %v1195, 0
    %1202 = vmatprep.subr.bf16.mxu0 0
    %1203 = vmatpush1.bf16.xpose.msra.mxu0 %v1200
    %1204 = vmatprep.subr.bf16.mxu0 0
    %1205 = vmatpush1.bf16.xpose.msra.mxu0 0
    %1206 = vmatprep.subr.bf16.mxu0 0
    %1207 = vmatpush1.bf16.xpose.msra.mxu0 0
    %1208 = vmatprep.subr.bf16.mxu0 0
    %1209 = vmatpush1.bf16.xpose.msra.mxu0 0
    %1210 = vmatprep.subr.bf16.mxu0 0
    %1211 = vmatpush1.bf16.xpose.msra.mxu0 0
    %1212 = vmatprep.subr.bf16.mxu0 0
    %1213 = vmatpush1.bf16.xpose.msra.mxu0 0
    %1214 = vmatprep.subr.bf16.mxu0 0
    %1215 = vmatpush1.bf16.xpose.msra.mxu0 0
    %1216 = vmatprep.subr.bf16.mxu0 0
    %1217 = vmatpush1.bf16.xpose.msra.mxu0 0
    %1218 = vmatprep.subr.bf16.mxu0 0
    %1219 = vmatpush1.bf16.xpose.msra.mxu0 0
    %1220 = vmatprep.subr.bf16.mxu0 0
    %1221 = vmatpush1.bf16.xpose.msra.mxu0 0
    %1222 = vmatprep.subr.bf16.mxu0 0
    %1223 = vmatpush1.bf16.xpose.msra.mxu0 0
    %1224 = vmatprep.subr.bf16.mxu0 0
    %1225 = vmatpush1.bf16.xpose.msra.mxu0 0
    %1226 = vmatprep.subr.bf16.mxu0 0
    %1227 = vmatpush1.bf16.xpose.msra.mxu0 0
    %1228 = vmatprep.subr.bf16.mxu0 0
    %1229 = vmatpush1.bf16.xpose.msra.mxu0 0
    %1230 = vmatprep.subr.bf16.mxu0 0
    %1231 = vmatpush1.bf16.xpose.msra.mxu0 0
    %1232 = vmatprep.subr.bf16.mxu0 0
    %1233 = vmatpush1.bf16.xpose.msra.mxu0 0
    %1234 = vmatprep.mubr.bf16.mxu0 0
    %1235 = vmatmul.mubr.bf16.gmra.mrb[0].mxu0 %v1197
    %v1236 = vpop.f32.mrb[0].mxu0
    %v1237 = vadd.f32 0.0, %v1236
    %v1238 = vpop.f32.mrb[0].mxu0
    %v1239 = vpop.f32.mrb[0].mxu0
    %v1240 = vpop.f32.mrb[0].mxu0
    %1241 = vdwg.mxu0
    %v1242 = vmul.f32 %v1237, 0.5
    %s1243 = scalar_lea.vmem [#allocation3], 48
    %v1244 = vld [vmem:[%s1243] sm:$0xff]
    %v1245 = vsel %vm427, %v1242, -inf
    %1246 = vmax.xlane.f32.xlu0 %v1245
    %v1247 = vpop.xlane.xlu0 %1246
    %v1248 = vmax.f32 %v1244, %v1247
    %v1249 = vsub.f32 %v1244, %v1248
    %v1250 = vmul.f32 %v1249, 1.442695
    %v1251 = vpow.pop %v1250
    %1253 = vset.pattern.permute.xlu0 0
    %1254 = vperm.xlu0 %1253, %v1248
    %v1255 = vpop.permute.xlu0 %1254
    %v1257 = vsub.f32 %v1242, %v1255
    %v1258 = vmul.f32 %v1257, 1.442695
    %v1259 = vpow.pop %v1258
    %s1260 = scalar_lea.vmem [#allocation4], 48
    %v1261 = vld [vmem:[%s1260] sm:$0xff]
    %v1262 = vmul.f32 %v1251, %v1261
    %v1263 = vsel %vm427, %v1259, 0.0
    %1264 = vadd.xlane.f32.xlu0 %v1263
    %v1265 = vpop.xlane.xlu0 %1264
    %v1266 = vadd.f32 %v1262, %v1265
    %1267 = vst.msk [vmem:[%s1260] sm:$0xff] %vm449, %v1266
    %s1268 = scalar_lea.vmem [#allocation5], 48
    %v1269 = vld [vmem:[%s1268] sm:$0xff]
    %1271 = vset.pattern.permute.xlu0 0
    %1272 = vperm.xlu0 %1271, %v1251
    %v1273 = vpop.permute.xlu0 %1272
    %v1275 = vmul.f32 %v1273, %v1269
    %v1276 = vpack.c.bf16 %v1259, %v1259
    %1277 = vrot.lane.b32.xlu0 %v376, 104
    %v1278 = vpop.permute.xlu0 %1277
    %v1280 = vsel %vm427, %v1276, 0
    %v1283 = vsel %vm462, %v1278, 0
    %1285 = vmatprep.subr.bf16.mxu0 0
    %1286 = vmatpush1.bf16.msra.mxu0 %v1283
    %1287 = vmatprep.subr.bf16.mxu0 0
    %1288 = vmatpush1.bf16.msra.mxu0 0
    %1289 = vmatprep.subr.bf16.mxu0 0
    %1290 = vmatpush1.bf16.msra.mxu0 0
    %1291 = vmatprep.subr.bf16.mxu0 0
    %1292 = vmatpush1.bf16.msra.mxu0 0
    %1293 = vmatprep.subr.bf16.mxu0 0
    %1294 = vmatpush1.bf16.msra.mxu0 0
    %1295 = vmatprep.subr.bf16.mxu0 0
    %1296 = vmatpush1.bf16.msra.mxu0 0
    %1297 = vmatprep.subr.bf16.mxu0 0
    %1298 = vmatpush1.bf16.msra.mxu0 0
    %1299 = vmatprep.subr.bf16.mxu0 0
    %1300 = vmatpush1.bf16.msra.mxu0 0
    %1301 = vmatprep.subr.bf16.mxu0 0
    %1302 = vmatpush1.bf16.msra.mxu0 0
    %1303 = vmatprep.subr.bf16.mxu0 0
    %1304 = vmatpush1.bf16.msra.mxu0 0
    %1305 = vmatprep.subr.bf16.mxu0 0
    %1306 = vmatpush1.bf16.msra.mxu0 0
    %1307 = vmatprep.subr.bf16.mxu0 0
    %1308 = vmatpush1.bf16.msra.mxu0 0
    %1309 = vmatprep.subr.bf16.mxu0 0
    %1310 = vmatpush1.bf16.msra.mxu0 0
    %1311 = vmatprep.subr.bf16.mxu0 0
    %1312 = vmatpush1.bf16.msra.mxu0 0
    %1313 = vmatprep.subr.bf16.mxu0 0
    %1314 = vmatpush1.bf16.msra.mxu0 0
    %1315 = vmatprep.subr.bf16.mxu0 0
    %1316 = vmatpush1.bf16.msra.mxu0 0
    %1317 = vmatprep.mubr.bf16.mxu0 0
    %1318 = vmatmul.mubr.bf16.gmra.mrb[0].mxu0 %v1280
    %v1319 = vpop.f32.mrb[0].mxu0
    %v1320 = vadd.f32 0.0, %v1319
    %v1321 = vpop.f32.mrb[0].mxu0
    %v1322 = vpop.f32.mrb[0].mxu0
    %v1323 = vpop.f32.mrb[0].mxu0
    %1324 = vdwg.mxu0
    %v1325 = vadd.f32 %v1275, %v1320
    %1326 = vst.msk [vmem:[%s1268] sm:$0xff] %vm378, %v1325
    %1327 = vst.msk [vmem:[%s1243] sm:$0xff] %vm449, %v1248
    %1328 = vrot.lane.b32.xlu0 %v377, 100
    %v1329 = vpop.permute.xlu0 %1328
    %1330 = vrot.lane.b32.xlu0 %v311, 100
    %v1331 = vpop.permute.xlu0 %1330
    %v1333 = vsel %vm378, %v1329, 0
    %v1336 = vsel %vm378, %v1331, 0
    %1338 = vmatprep.subr.bf16.mxu0 0
    %1339 = vmatpush1.bf16.xpose.msra.mxu0 %v1336
    %1340 = vmatprep.subr.bf16.mxu0 0
    %1341 = vmatpush1.bf16.xpose.msra.mxu0 0
    %1342 = vmatprep.subr.bf16.mxu0 0
    %1343 = vmatpush1.bf16.xpose.msra.mxu0 0
    %1344 = vmatprep.subr.bf16.mxu0 0
    %1345 = vmatpush1.bf16.xpose.msra.mxu0 0
    %1346 = vmatprep.subr.bf16.mxu0 0
    %1347 = vmatpush1.bf16.xpose.msra.mxu0 0
    %1348 = vmatprep.subr.bf16.mxu0 0
    %1349 = vmatpush1.bf16.xpose.msra.mxu0 0
    %1350 = vmatprep.subr.bf16.mxu0 0
    %1351 = vmatpush1.bf16.xpose.msra.mxu0 0
    %1352 = vmatprep.subr.bf16.mxu0 0
    %1353 = vmatpush1.bf16.xpose.msra.mxu0 0
    %1354 = vmatprep.subr.bf16.mxu0 0
    %1355 = vmatpush1.bf16.xpose.msra.mxu0 0
    %1356 = vmatprep.subr.bf16.mxu0 0
    %1357 = vmatpush1.bf16.xpose.msra.mxu0 0
    %1358 = vmatprep.subr.bf16.mxu0 0
    %1359 = vmatpush1.bf16.xpose.msra.mxu0 0
    %1360 = vmatprep.subr.bf16.mxu0 0
    %1361 = vmatpush1.bf16.xpose.msra.mxu0 0
    %1362 = vmatprep.subr.bf16.mxu0 0
    %1363 = vmatpush1.bf16.xpose.msra.mxu0 0
    %1364 = vmatprep.subr.bf16.mxu0 0
    %1365 = vmatpush1.bf16.xpose.msra.mxu0 0
    %1366 = vmatprep.subr.bf16.mxu0 0
    %1367 = vmatpush1.bf16.xpose.msra.mxu0 0
    %1368 = vmatprep.subr.bf16.mxu0 0
    %1369 = vmatpush1.bf16.xpose.msra.mxu0 0
    %1370 = vmatprep.mubr.bf16.mxu0 0
    %1371 = vmatmul.mubr.bf16.gmra.mrb[0].mxu0 %v1333
    %v1372 = vpop.f32.mrb[0].mxu0
    %v1373 = vadd.f32 0.0, %v1372
    %v1374 = vpop.f32.mrb[0].mxu0
    %v1375 = vpop.f32.mrb[0].mxu0
    %v1376 = vpop.f32.mrb[0].mxu0
    %1377 = vdwg.mxu0
    %v1378 = vmul.f32 %v1373, 0.5
    %s1379 = scalar_lea.vmem [#allocation3], 56
    %v1380 = vld [vmem:[%s1379] sm:$0xff]
    %v1381 = vsel %vm427, %v1378, -inf
    %1382 = vmax.xlane.f32.xlu0 %v1381
    %v1383 = vpop.xlane.xlu0 %1382
    %v1384 = vmax.f32 %v1380, %v1383
    %v1385 = vsub.f32 %v1380, %v1384
    %v1386 = vmul.f32 %v1385, 1.442695
    %v1387 = vpow.pop %v1386
    %1389 = vset.pattern.permute.xlu0 0
    %1390 = vperm.xlu0 %1389, %v1384
    %v1391 = vpop.permute.xlu0 %1390
    %v1393 = vsub.f32 %v1378, %v1391
    %v1394 = vmul.f32 %v1393, 1.442695
    %v1395 = vpow.pop %v1394
    %s1396 = scalar_lea.vmem [#allocation4], 56
    %v1397 = vld [vmem:[%s1396] sm:$0xff]
    %v1398 = vmul.f32 %v1387, %v1397
    %v1399 = vsel %vm427, %v1395, 0.0
    %1400 = vadd.xlane.f32.xlu0 %v1399
    %v1401 = vpop.xlane.xlu0 %1400
    %v1402 = vadd.f32 %v1398, %v1401
    %1403 = vst.msk [vmem:[%s1396] sm:$0xff] %vm449, %v1402
    %s1404 = scalar_lea.vmem [#allocation5], 56
    %v1405 = vld [vmem:[%s1404] sm:$0xff]
    %1407 = vset.pattern.permute.xlu0 0
    %1408 = vperm.xlu0 %1407, %v1387
    %v1409 = vpop.permute.xlu0 %1408
    %v1411 = vmul.f32 %v1409, %v1405
    %v1412 = vpack.c.bf16 %v1395, %v1395
    %1413 = vrot.lane.b32.xlu0 %v376, 100
    %v1414 = vpop.permute.xlu0 %1413
    %v1416 = vsel %vm427, %v1412, 0
    %v1419 = vsel %vm462, %v1414, 0
    %1421 = vmatprep.subr.bf16.mxu0 0
    %1422 = vmatpush1.bf16.msra.mxu0 %v1419
    %1423 = vmatprep.subr.bf16.mxu0 0
    %1424 = vmatpush1.bf16.msra.mxu0 0
    %1425 = vmatprep.subr.bf16.mxu0 0
    %1426 = vmatpush1.bf16.msra.mxu0 0
    %1427 = vmatprep.subr.bf16.mxu0 0
    %1428 = vmatpush1.bf16.msra.mxu0 0
    %1429 = vmatprep.subr.bf16.mxu0 0
    %1430 = vmatpush1.bf16.msra.mxu0 0
    %1431 = vmatprep.subr.bf16.mxu0 0
    %1432 = vmatpush1.bf16.msra.mxu0 0
    %1433 = vmatprep.subr.bf16.mxu0 0
    %1434 = vmatpush1.bf16.msra.mxu0 0
    %1435 = vmatprep.subr.bf16.mxu0 0
    %1436 = vmatpush1.bf16.msra.mxu0 0
    %1437 = vmatprep.subr.bf16.mxu0 0
    %1438 = vmatpush1.bf16.msra.mxu0 0
    %1439 = vmatprep.subr.bf16.mxu0 0
    %1440 = vmatpush1.bf16.msra.mxu0 0
    %1441 = vmatprep.subr.bf16.mxu0 0
    %1442 = vmatpush1.bf16.msra.mxu0 0
    %1443 = vmatprep.subr.bf16.mxu0 0
    %1444 = vmatpush1.bf16.msra.mxu0 0
    %1445 = vmatprep.subr.bf16.mxu0 0
    %1446 = vmatpush1.bf16.msra.mxu0 0
    %1447 = vmatprep.subr.bf16.mxu0 0
    %1448 = vmatpush1.bf16.msra.mxu0 0
    %1449 = vmatprep.subr.bf16.mxu0 0
    %1450 = vmatpush1.bf16.msra.mxu0 0
    %1451 = vmatprep.subr.bf16.mxu0 0
    %1452 = vmatpush1.bf16.msra.mxu0 0
    %1453 = vmatprep.mubr.bf16.mxu0 0
    %1454 = vmatmul.mubr.bf16.gmra.mrb[0].mxu0 %v1416
    %v1455 = vpop.f32.mrb[0].mxu0
    %v1456 = vadd.f32 0.0, %v1455
    %v1457 = vpop.f32.mrb[0].mxu0
    %v1458 = vpop.f32.mrb[0].mxu0
    %v1459 = vpop.f32.mrb[0].mxu0
    %1460 = vdwg.mxu0
    %v1461 = vadd.f32 %v1411, %v1456
    %1462 = vst.msk [vmem:[%s1404] sm:$0xff] %vm378, %v1461
    %1463 = vst.msk [vmem:[%s1379] sm:$0xff] %vm449, %v1384
    %v1464 = vrot.slane %v377, 4
    %v1465 = vrot.slane %v311, 4
    %v1467 = vsel %vm378, %v1464, 0
    %v1470 = vsel %vm378, %v1465, 0
    %1472 = vmatprep.subr.bf16.mxu0 0
    %1473 = vmatpush1.bf16.xpose.msra.mxu0 %v1470
    %1474 = vmatprep.subr.bf16.mxu0 0
    %1475 = vmatpush1.bf16.xpose.msra.mxu0 0
    %1476 = vmatprep.subr.bf16.mxu0 0
    %1477 = vmatpush1.bf16.xpose.msra.mxu0 0
    %1478 = vmatprep.subr.bf16.mxu0 0
    %1479 = vmatpush1.bf16.xpose.msra.mxu0 0
    %1480 = vmatprep.subr.bf16.mxu0 0
    %1481 = vmatpush1.bf16.xpose.msra.mxu0 0
    %1482 = vmatprep.subr.bf16.mxu0 0
    %1483 = vmatpush1.bf16.xpose.msra.mxu0 0
    %1484 = vmatprep.subr.bf16.mxu0 0
    %1485 = vmatpush1.bf16.xpose.msra.mxu0 0
    %1486 = vmatprep.subr.bf16.mxu0 0
    %1487 = vmatpush1.bf16.xpose.msra.mxu0 0
    %1488 = vmatprep.subr.bf16.mxu0 0
    %1489 = vmatpush1.bf16.xpose.msra.mxu0 0
    %1490 = vmatprep.subr.bf16.mxu0 0
    %1491 = vmatpush1.bf16.xpose.msra.mxu0 0
    %1492 = vmatprep.subr.bf16.mxu0 0
    %1493 = vmatpush1.bf16.xpose.msra.mxu0 0
    %1494 = vmatprep.subr.bf16.mxu0 0
    %1495 = vmatpush1.bf16.xpose.msra.mxu0 0
    %1496 = vmatprep.subr.bf16.mxu0 0
    %1497 = vmatpush1.bf16.xpose.msra.mxu0 0
    %1498 = vmatprep.subr.bf16.mxu0 0
    %1499 = vmatpush1.bf16.xpose.msra.mxu0 0
    %1500 = vmatprep.subr.bf16.mxu0 0
    %1501 = vmatpush1.bf16.xpose.msra.mxu0 0
    %1502 = vmatprep.subr.bf16.mxu0 0
    %1503 = vmatpush1.bf16.xpose.msra.mxu0 0
    %1504 = vmatprep.mubr.bf16.mxu0 0
    %1505 = vmatmul.mubr.bf16.gmra.mrb[0].mxu0 %v1467
    %v1506 = vpop.f32.mrb[0].mxu0
    %v1507 = vadd.f32 0.0, %v1506
    %v1508 = vpop.f32.mrb[0].mxu0
    %v1509 = vpop.f32.mrb[0].mxu0
    %v1510 = vpop.f32.mrb[0].mxu0
    %1511 = vdwg.mxu0
    %v1512 = vmul.f32 %v1507, 0.5
    %s1513 = scalar_lea.vmem [#allocation3], 64
    %v1514 = vld [vmem:[%s1513] sm:$0xff]
    %v1515 = vsel %vm427, %v1512, -inf
    %1516 = vmax.xlane.f32.xlu0 %v1515
    %v1517 = vpop.xlane.xlu0 %1516
    %v1518 = vmax.f32 %v1514, %v1517
    %v1519 = vsub.f32 %v1514, %v1518
    %v1520 = vmul.f32 %v1519, 1.442695
    %v1521 = vpow.pop %v1520
    %1523 = vset.pattern.permute.xlu0 0
    %1524 = vperm.xlu0 %1523, %v1518
    %v1525 = vpop.permute.xlu0 %1524
    %v1527 = vsub.f32 %v1512, %v1525
    %v1528 = vmul.f32 %v1527, 1.442695
    %v1529 = vpow.pop %v1528
    %s1530 = scalar_lea.vmem [#allocation4], 64
    %v1531 = vld [vmem:[%s1530] sm:$0xff]
    %v1532 = vmul.f32 %v1521, %v1531
    %v1533 = vsel %vm427, %v1529, 0.0
    %1534 = vadd.xlane.f32.xlu0 %v1533
    %v1535 = vpop.xlane.xlu0 %1534
    %v1536 = vadd.f32 %v1532, %v1535
    %1537 = vst.msk [vmem:[%s1530] sm:$0xff] %vm449, %v1536
    %s1538 = scalar_lea.vmem [#allocation5], 64
    %v1539 = vld [vmem:[%s1538] sm:$0xff]
    %1541 = vset.pattern.permute.xlu0 0
    %1542 = vperm.xlu0 %1541, %v1521
    %v1543 = vpop.permute.xlu0 %1542
    %v1545 = vmul.f32 %v1543, %v1539
    %v1546 = vpack.c.bf16 %v1529, %v1529
    %v1547 = vrot.slane %v376, 4
    %v1549 = vsel %vm427, %v1546, 0
    %v1552 = vsel %vm462, %v1547, 0
    %1554 = vmatprep.subr.bf16.mxu0 0
    %1555 = vmatpush1.bf16.msra.mxu0 %v1552
    %1556 = vmatprep.subr.bf16.mxu0 0
    %1557 = vmatpush1.bf16.msra.mxu0 0
    %1558 = vmatprep.subr.bf16.mxu0 0
    %1559 = vmatpush1.bf16.msra.mxu0 0
    %1560 = vmatprep.subr.bf16.mxu0 0
    %1561 = vmatpush1.bf16.msra.mxu0 0
    %1562 = vmatprep.subr.bf16.mxu0 0
    %1563 = vmatpush1.bf16.msra.mxu0 0
    %1564 = vmatprep.subr.bf16.mxu0 0
    %1565 = vmatpush1.bf16.msra.mxu0 0
    %1566 = vmatprep.subr.bf16.mxu0 0
    %1567 = vmatpush1.bf16.msra.mxu0 0
    %1568 = vmatprep.subr.bf16.mxu0 0
    %1569 = vmatpush1.bf16.msra.mxu0 0
    %1570 = vmatprep.subr.bf16.mxu0 0
    %1571 = vmatpush1.bf16.msra.mxu0 0
    %1572 = vmatprep.subr.bf16.mxu0 0
    %1573 = vmatpush1.bf16.msra.mxu0 0
    %1574 = vmatprep.subr.bf16.mxu0 0
    %1575 = vmatpush1.bf16.msra.mxu0 0
    %1576 = vmatprep.subr.bf16.mxu0 0
    %1577 = vmatpush1.bf16.msra.mxu0 0
    %1578 = vmatprep.subr.bf16.mxu0 0
    %1579 = vmatpush1.bf16.msra.mxu0 0
    %1580 = vmatprep.subr.bf16.mxu0 0
    %1581 = vmatpush1.bf16.msra.mxu0 0
    %1582 = vmatprep.subr.bf16.mxu0 0
    %1583 = vmatpush1.bf16.msra.mxu0 0
    %1584 = vmatprep.subr.bf16.mxu0 0
    %1585 = vmatpush1.bf16.msra.mxu0 0
    %1586 = vmatprep.mubr.bf16.mxu0 0
    %1587 = vmatmul.mubr.bf16.gmra.mrb[0].mxu0 %v1549
    %v1588 = vpop.f32.mrb[0].mxu0
    %v1589 = vadd.f32 0.0, %v1588
    %v1590 = vpop.f32.mrb[0].mxu0
    %v1591 = vpop.f32.mrb[0].mxu0
    %v1592 = vpop.f32.mrb[0].mxu0
    %1593 = vdwg.mxu0
    %v1594 = vadd.f32 %v1545, %v1589
    %1595 = vst.msk [vmem:[%s1538] sm:$0xff] %vm378, %v1594
    %1596 = vst.msk [vmem:[%s1513] sm:$0xff] %vm449, %v1518
    %1597 = vrot.lane.b32.xlu0 %v1464, 124
    %v1598 = vpop.permute.xlu0 %1597
    %1599 = vrot.lane.b32.xlu0 %v1465, 124
    %v1600 = vpop.permute.xlu0 %1599
    %v1602 = vsel %vm378, %v1598, 0
    %v1605 = vsel %vm378, %v1600, 0
    %1607 = vmatprep.subr.bf16.mxu0 0
    %1608 = vmatpush1.bf16.xpose.msra.mxu0 %v1605
    %1609 = vmatprep.subr.bf16.mxu0 0
    %1610 = vmatpush1.bf16.xpose.msra.mxu0 0
    %1611 = vmatprep.subr.bf16.mxu0 0
    %1612 = vmatpush1.bf16.xpose.msra.mxu0 0
    %1613 = vmatprep.subr.bf16.mxu0 0
    %1614 = vmatpush1.bf16.xpose.msra.mxu0 0
    %1615 = vmatprep.subr.bf16.mxu0 0
    %1616 = vmatpush1.bf16.xpose.msra.mxu0 0
    %1617 = vmatprep.subr.bf16.mxu0 0
    %1618 = vmatpush1.bf16.xpose.msra.mxu0 0
    %1619 = vmatprep.subr.bf16.mxu0 0
    %1620 = vmatpush1.bf16.xpose.msra.mxu0 0
    %1621 = vmatprep.subr.bf16.mxu0 0
    %1622 = vmatpush1.bf16.xpose.msra.mxu0 0
    %1623 = vmatprep.subr.bf16.mxu0 0
    %1624 = vmatpush1.bf16.xpose.msra.mxu0 0
    %1625 = vmatprep.subr.bf16.mxu0 0
    %1626 = vmatpush1.bf16.xpose.msra.mxu0 0
    %1627 = vmatprep.subr.bf16.mxu0 0
    %1628 = vmatpush1.bf16.xpose.msra.mxu0 0
    %1629 = vmatprep.subr.bf16.mxu0 0
    %1630 = vmatpush1.bf16.xpose.msra.mxu0 0
    %1631 = vmatprep.subr.bf16.mxu0 0
    %1632 = vmatpush1.bf16.xpose.msra.mxu0 0
    %1633 = vmatprep.subr.bf16.mxu0 0
    %1634 = vmatpush1.bf16.xpose.msra.mxu0 0
    %1635 = vmatprep.subr.bf16.mxu0 0
    %1636 = vmatpush1.bf16.xpose.msra.mxu0 0
    %1637 = vmatprep.subr.bf16.mxu0 0
    %1638 = vmatpush1.bf16.xpose.msra.mxu0 0
    %1639 = vmatprep.mubr.bf16.mxu0 0
    %1640 = vmatmul.mubr.bf16.gmra.mrb[0].mxu0 %v1602
    %v1641 = vpop.f32.mrb[0].mxu0
    %v1642 = vadd.f32 0.0, %v1641
    %v1643 = vpop.f32.mrb[0].mxu0
    %v1644 = vpop.f32.mrb[0].mxu0
    %v1645 = vpop.f32.mrb[0].mxu0
    %1646 = vdwg.mxu0
    %v1647 = vmul.f32 %v1642, 0.5
    %s1648 = scalar_lea.vmem [#allocation3], 72
    %v1649 = vld [vmem:[%s1648] sm:$0xff]
    %v1650 = vsel %vm427, %v1647, -inf
    %1651 = vmax.xlane.f32.xlu0 %v1650
    %v1652 = vpop.xlane.xlu0 %1651
    %v1653 = vmax.f32 %v1649, %v1652
    %v1654 = vsub.f32 %v1649, %v1653
    %v1655 = vmul.f32 %v1654, 1.442695
    %v1656 = vpow.pop %v1655
    %1658 = vset.pattern.permute.xlu0 0
    %1659 = vperm.xlu0 %1658, %v1653
    %v1660 = vpop.permute.xlu0 %1659
    %v1662 = vsub.f32 %v1647, %v1660
    %v1663 = vmul.f32 %v1662, 1.442695
    %v1664 = vpow.pop %v1663
    %s1665 = scalar_lea.vmem [#allocation4], 72
    %v1666 = vld [vmem:[%s1665] sm:$0xff]
    %v1667 = vmul.f32 %v1656, %v1666
    %v1668 = vsel %vm427, %v1664, 0.0
    %1669 = vadd.xlane.f32.xlu0 %v1668
    %v1670 = vpop.xlane.xlu0 %1669
    %v1671 = vadd.f32 %v1667, %v1670
    %1672 = vst.msk [vmem:[%s1665] sm:$0xff] %vm449, %v1671
    %s1673 = scalar_lea.vmem [#allocation5], 72
    %v1674 = vld [vmem:[%s1673] sm:$0xff]
    %1676 = vset.pattern.permute.xlu0 0
    %1677 = vperm.xlu0 %1676, %v1656
    %v1678 = vpop.permute.xlu0 %1677
    %v1680 = vmul.f32 %v1678, %v1674
    %v1681 = vpack.c.bf16 %v1664, %v1664
    %1682 = vrot.lane.b32.xlu0 %v1547, 124
    %v1683 = vpop.permute.xlu0 %1682
    %v1685 = vsel %vm427, %v1681, 0
    %v1688 = vsel %vm462, %v1683, 0
    %1690 = vmatprep.subr.bf16.mxu0 0
    %1691 = vmatpush1.bf16.msra.mxu0 %v1688
    %1692 = vmatprep.subr.bf16.mxu0 0
    %1693 = vmatpush1.bf16.msra.mxu0 0
    %1694 = vmatprep.subr.bf16.mxu0 0
    %1695 = vmatpush1.bf16.msra.mxu0 0
    %1696 = vmatprep.subr.bf16.mxu0 0
    %1697 = vmatpush1.bf16.msra.mxu0 0
    %1698 = vmatprep.subr.bf16.mxu0 0
    %1699 = vmatpush1.bf16.msra.mxu0 0
    %1700 = vmatprep.subr.bf16.mxu0 0
    %1701 = vmatpush1.bf16.msra.mxu0 0
    %1702 = vmatprep.subr.bf16.mxu0 0
    %1703 = vmatpush1.bf16.msra.mxu0 0
    %1704 = vmatprep.subr.bf16.mxu0 0
    %1705 = vmatpush1.bf16.msra.mxu0 0
    %1706 = vmatprep.subr.bf16.mxu0 0
    %1707 = vmatpush1.bf16.msra.mxu0 0
    %1708 = vmatprep.subr.bf16.mxu0 0
    %1709 = vmatpush1.bf16.msra.mxu0 0
    %1710 = vmatprep.subr.bf16.mxu0 0
    %1711 = vmatpush1.bf16.msra.mxu0 0
    %1712 = vmatprep.subr.bf16.mxu0 0
    %1713 = vmatpush1.bf16.msra.mxu0 0
    %1714 = vmatprep.subr.bf16.mxu0 0
    %1715 = vmatpush1.bf16.msra.mxu0 0
    %1716 = vmatprep.subr.bf16.mxu0 0
    %1717 = vmatpush1.bf16.msra.mxu0 0
    %1718 = vmatprep.subr.bf16.mxu0 0
    %1719 = vmatpush1.bf16.msra.mxu0 0
    %1720 = vmatprep.subr.bf16.mxu0 0
    %1721 = vmatpush1.bf16.msra.mxu0 0
    %1722 = vmatprep.mubr.bf16.mxu0 0
    %1723 = vmatmul.mubr.bf16.gmra.mrb[0].mxu0 %v1685
    %v1724 = vpop.f32.mrb[0].mxu0
    %v1725 = vadd.f32 0.0, %v1724
    %v1726 = vpop.f32.mrb[0].mxu0
    %v1727 = vpop.f32.mrb[0].mxu0
    %v1728 = vpop.f32.mrb[0].mxu0
    %1729 = vdwg.mxu0
    %v1730 = vadd.f32 %v1680, %v1725
    %1731 = vst.msk [vmem:[%s1673] sm:$0xff] %vm378, %v1730
    %1732 = vst.msk [vmem:[%s1648] sm:$0xff] %vm449, %v1653
    %1733 = vrot.lane.b32.xlu0 %v1464, 120
    %v1734 = vpop.permute.xlu0 %1733
    %1735 = vrot.lane.b32.xlu0 %v1465, 120
    %v1736 = vpop.permute.xlu0 %1735
    %v1738 = vsel %vm378, %v1734, 0
    %v1741 = vsel %vm378, %v1736, 0
    %1743 = vmatprep.subr.bf16.mxu0 0
    %1744 = vmatpush1.bf16.xpose.msra.mxu0 %v1741
    %1745 = vmatprep.subr.bf16.mxu0 0
    %1746 = vmatpush1.bf16.xpose.msra.mxu0 0
    %1747 = vmatprep.subr.bf16.mxu0 0
    %1748 = vmatpush1.bf16.xpose.msra.mxu0 0
    %1749 = vmatprep.subr.bf16.mxu0 0
    %1750 = vmatpush1.bf16.xpose.msra.mxu0 0
    %1751 = vmatprep.subr.bf16.mxu0 0
    %1752 = vmatpush1.bf16.xpose.msra.mxu0 0
    %1753 = vmatprep.subr.bf16.mxu0 0
    %1754 = vmatpush1.bf16.xpose.msra.mxu0 0
    %1755 = vmatprep.subr.bf16.mxu0 0
    %1756 = vmatpush1.bf16.xpose.msra.mxu0 0
    %1757 = vmatprep.subr.bf16.mxu0 0
    %1758 = vmatpush1.bf16.xpose.msra.mxu0 0
    %1759 = vmatprep.subr.bf16.mxu0 0
    %1760 = vmatpush1.bf16.xpose.msra.mxu0 0
    %1761 = vmatprep.subr.bf16.mxu0 0
    %1762 = vmatpush1.bf16.xpose.msra.mxu0 0
    %1763 = vmatprep.subr.bf16.mxu0 0
    %1764 = vmatpush1.bf16.xpose.msra.mxu0 0
    %1765 = vmatprep.subr.bf16.mxu0 0
    %1766 = vmatpush1.bf16.xpose.msra.mxu0 0
    %1767 = vmatprep.subr.bf16.mxu0 0
    %1768 = vmatpush1.bf16.xpose.msra.mxu0 0
    %1769 = vmatprep.subr.bf16.mxu0 0
    %1770 = vmatpush1.bf16.xpose.msra.mxu0 0
    %1771 = vmatprep.subr.bf16.mxu0 0
    %1772 = vmatpush1.bf16.xpose.msra.mxu0 0
    %1773 = vmatprep.subr.bf16.mxu0 0
    %1774 = vmatpush1.bf16.xpose.msra.mxu0 0
    %1775 = vmatprep.mubr.bf16.mxu0 0
    %1776 = vmatmul.mubr.bf16.gmra.mrb[0].mxu0 %v1738
    %v1777 = vpop.f32.mrb[0].mxu0
    %v1778 = vadd.f32 0.0, %v1777
    %v1779 = vpop.f32.mrb[0].mxu0
    %v1780 = vpop.f32.mrb[0].mxu0
    %v1781 = vpop.f32.mrb[0].mxu0
    %1782 = vdwg.mxu0
    %v1783 = vmul.f32 %v1778, 0.5
    %s1784 = scalar_lea.vmem [#allocation3], 80
    %v1785 = vld [vmem:[%s1784] sm:$0xff]
    %v1786 = vsel %vm427, %v1783, -inf
    %1787 = vmax.xlane.f32.xlu0 %v1786
    %v1788 = vpop.xlane.xlu0 %1787
    %v1789 = vmax.f32 %v1785, %v1788
    %v1790 = vsub.f32 %v1785, %v1789
    %v1791 = vmul.f32 %v1790, 1.442695
    %v1792 = vpow.pop %v1791
    %1794 = vset.pattern.permute.xlu0 0
    %1795 = vperm.xlu0 %1794, %v1789
    %v1796 = vpop.permute.xlu0 %1795
    %v1798 = vsub.f32 %v1783, %v1796
    %v1799 = vmul.f32 %v1798, 1.442695
    %v1800 = vpow.pop %v1799
    %s1801 = scalar_lea.vmem [#allocation4], 80
    %v1802 = vld [vmem:[%s1801] sm:$0xff]
    %v1803 = vmul.f32 %v1792, %v1802
    %v1804 = vsel %vm427, %v1800, 0.0
    %1805 = vadd.xlane.f32.xlu0 %v1804
    %v1806 = vpop.xlane.xlu0 %1805
    %v1807 = vadd.f32 %v1803, %v1806
    %1808 = vst.msk [vmem:[%s1801] sm:$0xff] %vm449, %v1807
    %s1809 = scalar_lea.vmem [#allocation5], 80
    %v1810 = vld [vmem:[%s1809] sm:$0xff]
    %1812 = vset.pattern.permute.xlu0 0
    %1813 = vperm.xlu0 %1812, %v1792
    %v1814 = vpop.permute.xlu0 %1813
    %v1816 = vmul.f32 %v1814, %v1810
    %v1817 = vpack.c.bf16 %v1800, %v1800
    %1818 = vrot.lane.b32.xlu0 %v1547, 120
    %v1819 = vpop.permute.xlu0 %1818
    %v1821 = vsel %vm427, %v1817, 0
    %v1824 = vsel %vm462, %v1819, 0
    %1826 = vmatprep.subr.bf16.mxu0 0
    %1827 = vmatpush1.bf16.msra.mxu0 %v1824
    %1828 = vmatprep.subr.bf16.mxu0 0
    %1829 = vmatpush1.bf16.msra.mxu0 0
    %1830 = vmatprep.subr.bf16.mxu0 0
    %1831 = vmatpush1.bf16.msra.mxu0 0
    %1832 = vmatprep.subr.bf16.mxu0 0
    %1833 = vmatpush1.bf16.msra.mxu0 0
    %1834 = vmatprep.subr.bf16.mxu0 0
    %1835 = vmatpush1.bf16.msra.mxu0 0
    %1836 = vmatprep.subr.bf16.mxu0 0
    %1837 = vmatpush1.bf16.msra.mxu0 0
    %1838 = vmatprep.subr.bf16.mxu0 0
    %1839 = vmatpush1.bf16.msra.mxu0 0
    %1840 = vmatprep.subr.bf16.mxu0 0
    %1841 = vmatpush1.bf16.msra.mxu0 0
    %1842 = vmatprep.subr.bf16.mxu0 0
    %1843 = vmatpush1.bf16.msra.mxu0 0
    %1844 = vmatprep.subr.bf16.mxu0 0
    %1845 = vmatpush1.bf16.msra.mxu0 0
    %1846 = vmatprep.subr.bf16.mxu0 0
    %1847 = vmatpush1.bf16.msra.mxu0 0
    %1848 = vmatprep.subr.bf16.mxu0 0
    %1849 = vmatpush1.bf16.msra.mxu0 0
    %1850 = vmatprep.subr.bf16.mxu0 0
    %1851 = vmatpush1.bf16.msra.mxu0 0
    %1852 = vmatprep.subr.bf16.mxu0 0
    %1853 = vmatpush1.bf16.msra.mxu0 0
    %1854 = vmatprep.subr.bf16.mxu0 0
    %1855 = vmatpush1.bf16.msra.mxu0 0
    %1856 = vmatprep.subr.bf16.mxu0 0
    %1857 = vmatpush1.bf16.msra.mxu0 0
    %1858 = vmatprep.mubr.bf16.mxu0 0
    %1859 = vmatmul.mubr.bf16.gmra.mrb[0].mxu0 %v1821
    %v1860 = vpop.f32.mrb[0].mxu0
    %v1861 = vadd.f32 0.0, %v1860
    %v1862 = vpop.f32.mrb[0].mxu0
    %v1863 = vpop.f32.mrb[0].mxu0
    %v1864 = vpop.f32.mrb[0].mxu0
    %1865 = vdwg.mxu0
    %v1866 = vadd.f32 %v1816, %v1861
    %1867 = vst.msk [vmem:[%s1809] sm:$0xff] %vm378, %v1866
    %1868 = vst.msk [vmem:[%s1784] sm:$0xff] %vm449, %v1789
    %1869 = vrot.lane.b32.xlu0 %v1464, 116
    %v1870 = vpop.permute.xlu0 %1869
    %1871 = vrot.lane.b32.xlu0 %v1465, 116
    %v1872 = vpop.permute.xlu0 %1871
    %v1874 = vsel %vm378, %v1870, 0
    %v1877 = vsel %vm378, %v1872, 0
    %1879 = vmatprep.subr.bf16.mxu0 0
    %1880 = vmatpush1.bf16.xpose.msra.mxu0 %v1877
    %1881 = vmatprep.subr.bf16.mxu0 0
    %1882 = vmatpush1.bf16.xpose.msra.mxu0 0
    %1883 = vmatprep.subr.bf16.mxu0 0
    %1884 = vmatpush1.bf16.xpose.msra.mxu0 0
    %1885 = vmatprep.subr.bf16.mxu0 0
    %1886 = vmatpush1.bf16.xpose.msra.mxu0 0
    %1887 = vmatprep.subr.bf16.mxu0 0
    %1888 = vmatpush1.bf16.xpose.msra.mxu0 0
    %1889 = vmatprep.subr.bf16.mxu0 0
    %1890 = vmatpush1.bf16.xpose.msra.mxu0 0
    %1891 = vmatprep.subr.bf16.mxu0 0
    %1892 = vmatpush1.bf16.xpose.msra.mxu0 0
    %1893 = vmatprep.subr.bf16.mxu0 0
    %1894 = vmatpush1.bf16.xpose.msra.mxu0 0
    %1895 = vmatprep.subr.bf16.mxu0 0
    %1896 = vmatpush1.bf16.xpose.msra.mxu0 0
    %1897 = vmatprep.subr.bf16.mxu0 0
    %1898 = vmatpush1.bf16.xpose.msra.mxu0 0
    %1899 = vmatprep.subr.bf16.mxu0 0
    %1900 = vmatpush1.bf16.xpose.msra.mxu0 0
    %1901 = vmatprep.subr.bf16.mxu0 0
    %1902 = vmatpush1.bf16.xpose.msra.mxu0 0
    %1903 = vmatprep.subr.bf16.mxu0 0
    %1904 = vmatpush1.bf16.xpose.msra.mxu0 0
    %1905 = vmatprep.subr.bf16.mxu0 0
    %1906 = vmatpush1.bf16.xpose.msra.mxu0 0
    %1907 = vmatprep.subr.bf16.mxu0 0
    %1908 = vmatpush1.bf16.xpose.msra.mxu0 0
    %1909 = vmatprep.subr.bf16.mxu0 0
    %1910 = vmatpush1.bf16.xpose.msra.mxu0 0
    %1911 = vmatprep.mubr.bf16.mxu0 0
    %1912 = vmatmul.mubr.bf16.gmra.mrb[0].mxu0 %v1874
    %v1913 = vpop.f32.mrb[0].mxu0
    %v1914 = vadd.f32 0.0, %v1913
    %v1915 = vpop.f32.mrb[0].mxu0
    %v1916 = vpop.f32.mrb[0].mxu0
    %v1917 = vpop.f32.mrb[0].mxu0
    %1918 = vdwg.mxu0
    %v1919 = vmul.f32 %v1914, 0.5
    %s1920 = scalar_lea.vmem [#allocation3], 88
    %v1921 = vld [vmem:[%s1920] sm:$0xff]
    %v1922 = vsel %vm427, %v1919, -inf
    %1923 = vmax.xlane.f32.xlu0 %v1922
    %v1924 = vpop.xlane.xlu0 %1923
    %v1925 = vmax.f32 %v1921, %v1924
    %v1926 = vsub.f32 %v1921, %v1925
    %v1927 = vmul.f32 %v1926, 1.442695
    %v1928 = vpow.pop %v1927
    %1930 = vset.pattern.permute.xlu0 0
    %1931 = vperm.xlu0 %1930, %v1925
    %v1932 = vpop.permute.xlu0 %1931
    %v1934 = vsub.f32 %v1919, %v1932
    %v1935 = vmul.f32 %v1934, 1.442695
    %v1936 = vpow.pop %v1935
    %s1937 = scalar_lea.vmem [#allocation4], 88
    %v1938 = vld [vmem:[%s1937] sm:$0xff]
    %v1939 = vmul.f32 %v1928, %v1938
    %v1940 = vsel %vm427, %v1936, 0.0
    %1941 = vadd.xlane.f32.xlu0 %v1940
    %v1942 = vpop.xlane.xlu0 %1941
    %v1943 = vadd.f32 %v1939, %v1942
    %1944 = vst.msk [vmem:[%s1937] sm:$0xff] %vm449, %v1943
    %s1945 = scalar_lea.vmem [#allocation5], 88
    %v1946 = vld [vmem:[%s1945] sm:$0xff]
    %1948 = vset.pattern.permute.xlu0 0
    %1949 = vperm.xlu0 %1948, %v1928
    %v1950 = vpop.permute.xlu0 %1949
    %v1952 = vmul.f32 %v1950, %v1946
    %v1953 = vpack.c.bf16 %v1936, %v1936
    %1954 = vrot.lane.b32.xlu0 %v1547, 116
    %v1955 = vpop.permute.xlu0 %1954
    %v1957 = vsel %vm427, %v1953, 0
    %v1960 = vsel %vm462, %v1955, 0
    %1962 = vmatprep.subr.bf16.mxu0 0
    %1963 = vmatpush1.bf16.msra.mxu0 %v1960
    %1964 = vmatprep.subr.bf16.mxu0 0
    %1965 = vmatpush1.bf16.msra.mxu0 0
    %1966 = vmatprep.subr.bf16.mxu0 0
    %1967 = vmatpush1.bf16.msra.mxu0 0
    %1968 = vmatprep.subr.bf16.mxu0 0
    %1969 = vmatpush1.bf16.msra.mxu0 0
    %1970 = vmatprep.subr.bf16.mxu0 0
    %1971 = vmatpush1.bf16.msra.mxu0 0
    %1972 = vmatprep.subr.bf16.mxu0 0
    %1973 = vmatpush1.bf16.msra.mxu0 0
    %1974 = vmatprep.subr.bf16.mxu0 0
    %1975 = vmatpush1.bf16.msra.mxu0 0
    %1976 = vmatprep.subr.bf16.mxu0 0
    %1977 = vmatpush1.bf16.msra.mxu0 0
    %1978 = vmatprep.subr.bf16.mxu0 0
    %1979 = vmatpush1.bf16.msra.mxu0 0
    %1980 = vmatprep.subr.bf16.mxu0 0
    %1981 = vmatpush1.bf16.msra.mxu0 0
    %1982 = vmatprep.subr.bf16.mxu0 0
    %1983 = vmatpush1.bf16.msra.mxu0 0
    %1984 = vmatprep.subr.bf16.mxu0 0
    %1985 = vmatpush1.bf16.msra.mxu0 0
    %1986 = vmatprep.subr.bf16.mxu0 0
    %1987 = vmatpush1.bf16.msra.mxu0 0
    %1988 = vmatprep.subr.bf16.mxu0 0
    %1989 = vmatpush1.bf16.msra.mxu0 0
    %1990 = vmatprep.subr.bf16.mxu0 0
    %1991 = vmatpush1.bf16.msra.mxu0 0
    %1992 = vmatprep.subr.bf16.mxu0 0
    %1993 = vmatpush1.bf16.msra.mxu0 0
    %1994 = vmatprep.mubr.bf16.mxu0 0
    %1995 = vmatmul.mubr.bf16.gmra.mrb[0].mxu0 %v1957
    %v1996 = vpop.f32.mrb[0].mxu0
    %v1997 = vadd.f32 0.0, %v1996
    %v1998 = vpop.f32.mrb[0].mxu0
    %v1999 = vpop.f32.mrb[0].mxu0
    %v2000 = vpop.f32.mrb[0].mxu0
    %2001 = vdwg.mxu0
    %v2002 = vadd.f32 %v1952, %v1997
    %2003 = vst.msk [vmem:[%s1945] sm:$0xff] %vm378, %v2002
    %2004 = vst.msk [vmem:[%s1920] sm:$0xff] %vm449, %v1925
    %2005 = vrot.lane.b32.xlu0 %v1464, 112
    %v2006 = vpop.permute.xlu0 %2005
    %2007 = vrot.lane.b32.xlu0 %v1465, 112
    %v2008 = vpop.permute.xlu0 %2007
    %v2010 = vsel %vm378, %v2006, 0
    %v2013 = vsel %vm378, %v2008, 0
    %2015 = vmatprep.subr.bf16.mxu0 0
    %2016 = vmatpush1.bf16.xpose.msra.mxu0 %v2013
    %2017 = vmatprep.subr.bf16.mxu0 0
    %2018 = vmatpush1.bf16.xpose.msra.mxu0 0
    %2019 = vmatprep.subr.bf16.mxu0 0
    %2020 = vmatpush1.bf16.xpose.msra.mxu0 0
    %2021 = vmatprep.subr.bf16.mxu0 0
    %2022 = vmatpush1.bf16.xpose.msra.mxu0 0
    %2023 = vmatprep.subr.bf16.mxu0 0
    %2024 = vmatpush1.bf16.xpose.msra.mxu0 0
    %2025 = vmatprep.subr.bf16.mxu0 0
    %2026 = vmatpush1.bf16.xpose.msra.mxu0 0
    %2027 = vmatprep.subr.bf16.mxu0 0
    %2028 = vmatpush1.bf16.xpose.msra.mxu0 0
    %2029 = vmatprep.subr.bf16.mxu0 0
    %2030 = vmatpush1.bf16.xpose.msra.mxu0 0
    %2031 = vmatprep.subr.bf16.mxu0 0
    %2032 = vmatpush1.bf16.xpose.msra.mxu0 0
    %2033 = vmatprep.subr.bf16.mxu0 0
    %2034 = vmatpush1.bf16.xpose.msra.mxu0 0
    %2035 = vmatprep.subr.bf16.mxu0 0
    %2036 = vmatpush1.bf16.xpose.msra.mxu0 0
    %2037 = vmatprep.subr.bf16.mxu0 0
    %2038 = vmatpush1.bf16.xpose.msra.mxu0 0
    %2039 = vmatprep.subr.bf16.mxu0 0
    %2040 = vmatpush1.bf16.xpose.msra.mxu0 0
    %2041 = vmatprep.subr.bf16.mxu0 0
    %2042 = vmatpush1.bf16.xpose.msra.mxu0 0
    %2043 = vmatprep.subr.bf16.mxu0 0
    %2044 = vmatpush1.bf16.xpose.msra.mxu0 0
    %2045 = vmatprep.subr.bf16.mxu0 0
    %2046 = vmatpush1.bf16.xpose.msra.mxu0 0
    %2047 = vmatprep.mubr.bf16.mxu0 0
    %2048 = vmatmul.mubr.bf16.gmra.mrb[0].mxu0 %v2010
    %v2049 = vpop.f32.mrb[0].mxu0
    %v2050 = vadd.f32 0.0, %v2049
    %v2051 = vpop.f32.mrb[0].mxu0
    %v2052 = vpop.f32.mrb[0].mxu0
    %v2053 = vpop.f32.mrb[0].mxu0
    %2054 = vdwg.mxu0
    %v2055 = vmul.f32 %v2050, 0.5
    %s2056 = scalar_lea.vmem [#allocation3], 96
    %v2057 = vld [vmem:[%s2056] sm:$0xff]
    %v2058 = vsel %vm427, %v2055, -inf
    %2059 = vmax.xlane.f32.xlu0 %v2058
    %v2060 = vpop.xlane.xlu0 %2059
    %v2061 = vmax.f32 %v2057, %v2060
    %v2062 = vsub.f32 %v2057, %v2061
    %v2063 = vmul.f32 %v2062, 1.442695
    %v2064 = vpow.pop %v2063
    %2066 = vset.pattern.permute.xlu0 0
    %2067 = vperm.xlu0 %2066, %v2061
    %v2068 = vpop.permute.xlu0 %2067
    %v2070 = vsub.f32 %v2055, %v2068
    %v2071 = vmul.f32 %v2070, 1.442695
    %v2072 = vpow.pop %v2071
    %s2073 = scalar_lea.vmem [#allocation4], 96
    %v2074 = vld [vmem:[%s2073] sm:$0xff]
    %v2075 = vmul.f32 %v2064, %v2074
    %v2076 = vsel %vm427, %v2072, 0.0
    %2077 = vadd.xlane.f32.xlu0 %v2076
    %v2078 = vpop.xlane.xlu0 %2077
    %v2079 = vadd.f32 %v2075, %v2078
    %2080 = vst.msk [vmem:[%s2073] sm:$0xff] %vm449, %v2079
    %s2081 = scalar_lea.vmem [#allocation5], 96
    %v2082 = vld [vmem:[%s2081] sm:$0xff]
    %2084 = vset.pattern.permute.xlu0 0
    %2085 = vperm.xlu0 %2084, %v2064
    %v2086 = vpop.permute.xlu0 %2085
    %v2088 = vmul.f32 %v2086, %v2082
    %v2089 = vpack.c.bf16 %v2072, %v2072
    %2090 = vrot.lane.b32.xlu0 %v1547, 112
    %v2091 = vpop.permute.xlu0 %2090
    %v2093 = vsel %vm427, %v2089, 0
    %v2096 = vsel %vm462, %v2091, 0
    %2098 = vmatprep.subr.bf16.mxu0 0
    %2099 = vmatpush1.bf16.msra.mxu0 %v2096
    %2100 = vmatprep.subr.bf16.mxu0 0
    %2101 = vmatpush1.bf16.msra.mxu0 0
    %2102 = vmatprep.subr.bf16.mxu0 0
    %2103 = vmatpush1.bf16.msra.mxu0 0
    %2104 = vmatprep.subr.bf16.mxu0 0
    %2105 = vmatpush1.bf16.msra.mxu0 0
    %2106 = vmatprep.subr.bf16.mxu0 0
    %2107 = vmatpush1.bf16.msra.mxu0 0
    %2108 = vmatprep.subr.bf16.mxu0 0
    %2109 = vmatpush1.bf16.msra.mxu0 0
    %2110 = vmatprep.subr.bf16.mxu0 0
    %2111 = vmatpush1.bf16.msra.mxu0 0
    %2112 = vmatprep.subr.bf16.mxu0 0
    %2113 = vmatpush1.bf16.msra.mxu0 0
    %2114 = vmatprep.subr.bf16.mxu0 0
    %2115 = vmatpush1.bf16.msra.mxu0 0
    %2116 = vmatprep.subr.bf16.mxu0 0
    %2117 = vmatpush1.bf16.msra.mxu0 0
    %2118 = vmatprep.subr.bf16.mxu0 0
    %2119 = vmatpush1.bf16.msra.mxu0 0
    %2120 = vmatprep.subr.bf16.mxu0 0
    %2121 = vmatpush1.bf16.msra.mxu0 0
    %2122 = vmatprep.subr.bf16.mxu0 0
    %2123 = vmatpush1.bf16.msra.mxu0 0
    %2124 = vmatprep.subr.bf16.mxu0 0
    %2125 = vmatpush1.bf16.msra.mxu0 0
    %2126 = vmatprep.subr.bf16.mxu0 0
    %2127 = vmatpush1.bf16.msra.mxu0 0
    %2128 = vmatprep.subr.bf16.mxu0 0
    %2129 = vmatpush1.bf16.msra.mxu0 0
    %2130 = vmatprep.mubr.bf16.mxu0 0
    %2131 = vmatmul.mubr.bf16.gmra.mrb[0].mxu0 %v2093
    %v2132 = vpop.f32.mrb[0].mxu0
    %v2133 = vadd.f32 0.0, %v2132
    %v2134 = vpop.f32.mrb[0].mxu0
    %v2135 = vpop.f32.mrb[0].mxu0
    %v2136 = vpop.f32.mrb[0].mxu0
    %2137 = vdwg.mxu0
    %v2138 = vadd.f32 %v2088, %v2133
    %2139 = vst.msk [vmem:[%s2081] sm:$0xff] %vm378, %v2138
    %2140 = vst.msk [vmem:[%s2056] sm:$0xff] %vm449, %v2061
    %2141 = vrot.lane.b32.xlu0 %v1464, 108
    %v2142 = vpop.permute.xlu0 %2141
    %2143 = vrot.lane.b32.xlu0 %v1465, 108
    %v2144 = vpop.permute.xlu0 %2143
    %v2146 = vsel %vm378, %v2142, 0
    %v2149 = vsel %vm378, %v2144, 0
    %2151 = vmatprep.subr.bf16.mxu0 0
    %2152 = vmatpush1.bf16.xpose.msra.mxu0 %v2149
    %2153 = vmatprep.subr.bf16.mxu0 0
    %2154 = vmatpush1.bf16.xpose.msra.mxu0 0
    %2155 = vmatprep.subr.bf16.mxu0 0
    %2156 = vmatpush1.bf16.xpose.msra.mxu0 0
    %2157 = vmatprep.subr.bf16.mxu0 0
    %2158 = vmatpush1.bf16.xpose.msra.mxu0 0
    %2159 = vmatprep.subr.bf16.mxu0 0
    %2160 = vmatpush1.bf16.xpose.msra.mxu0 0
    %2161 = vmatprep.subr.bf16.mxu0 0
    %2162 = vmatpush1.bf16.xpose.msra.mxu0 0
    %2163 = vmatprep.subr.bf16.mxu0 0
    %2164 = vmatpush1.bf16.xpose.msra.mxu0 0
    %2165 = vmatprep.subr.bf16.mxu0 0
    %2166 = vmatpush1.bf16.xpose.msra.mxu0 0
    %2167 = vmatprep.subr.bf16.mxu0 0
    %2168 = vmatpush1.bf16.xpose.msra.mxu0 0
    %2169 = vmatprep.subr.bf16.mxu0 0
    %2170 = vmatpush1.bf16.xpose.msra.mxu0 0
    %2171 = vmatprep.subr.bf16.mxu0 0
    %2172 = vmatpush1.bf16.xpose.msra.mxu0 0
    %2173 = vmatprep.subr.bf16.mxu0 0
    %2174 = vmatpush1.bf16.xpose.msra.mxu0 0
    %2175 = vmatprep.subr.bf16.mxu0 0
    %2176 = vmatpush1.bf16.xpose.msra.mxu0 0
    %2177 = vmatprep.subr.bf16.mxu0 0
    %2178 = vmatpush1.bf16.xpose.msra.mxu0 0
    %2179 = vmatprep.subr.bf16.mxu0 0
    %2180 = vmatpush1.bf16.xpose.msra.mxu0 0
    %2181 = vmatprep.subr.bf16.mxu0 0
    %2182 = vmatpush1.bf16.xpose.msra.mxu0 0
    %2183 = vmatprep.mubr.bf16.mxu0 0
    %2184 = vmatmul.mubr.bf16.gmra.mrb[0].mxu0 %v2146
    %v2185 = vpop.f32.mrb[0].mxu0
    %v2186 = vadd.f32 0.0, %v2185
    %v2187 = vpop.f32.mrb[0].mxu0
    %v2188 = vpop.f32.mrb[0].mxu0
    %v2189 = vpop.f32.mrb[0].mxu0
    %2190 = vdwg.mxu0
    %v2191 = vmul.f32 %v2186, 0.5
    %s2192 = scalar_lea.vmem [#allocation3], 104
    %v2193 = vld [vmem:[%s2192] sm:$0xff]
    %v2194 = vsel %vm427, %v2191, -inf
    %2195 = vmax.xlane.f32.xlu0 %v2194
    %v2196 = vpop.xlane.xlu0 %2195
    %v2197 = vmax.f32 %v2193, %v2196
    %v2198 = vsub.f32 %v2193, %v2197
    %v2199 = vmul.f32 %v2198, 1.442695
    %v2200 = vpow.pop %v2199
    %2202 = vset.pattern.permute.xlu0 0
    %2203 = vperm.xlu0 %2202, %v2197
    %v2204 = vpop.permute.xlu0 %2203
    %v2206 = vsub.f32 %v2191, %v2204
    %v2207 = vmul.f32 %v2206, 1.442695
    %v2208 = vpow.pop %v2207
    %s2209 = scalar_lea.vmem [#allocation4], 104
    %v2210 = vld [vmem:[%s2209] sm:$0xff]
    %v2211 = vmul.f32 %v2200, %v2210
    %v2212 = vsel %vm427, %v2208, 0.0
    %2213 = vadd.xlane.f32.xlu0 %v2212
    %v2214 = vpop.xlane.xlu0 %2213
    %v2215 = vadd.f32 %v2211, %v2214
    %2216 = vst.msk [vmem:[%s2209] sm:$0xff] %vm449, %v2215
    %s2217 = scalar_lea.vmem [#allocation5], 104
    %v2218 = vld [vmem:[%s2217] sm:$0xff]
    %2220 = vset.pattern.permute.xlu0 0
    %2221 = vperm.xlu0 %2220, %v2200
    %v2222 = vpop.permute.xlu0 %2221
    %v2224 = vmul.f32 %v2222, %v2218
    %v2225 = vpack.c.bf16 %v2208, %v2208
    %2226 = vrot.lane.b32.xlu0 %v1547, 108
    %v2227 = vpop.permute.xlu0 %2226
    %v2229 = vsel %vm427, %v2225, 0
    %v2232 = vsel %vm462, %v2227, 0
    %2234 = vmatprep.subr.bf16.mxu0 0
    %2235 = vmatpush1.bf16.msra.mxu0 %v2232
    %2236 = vmatprep.subr.bf16.mxu0 0
    %2237 = vmatpush1.bf16.msra.mxu0 0
    %2238 = vmatprep.subr.bf16.mxu0 0
    %2239 = vmatpush1.bf16.msra.mxu0 0
    %2240 = vmatprep.subr.bf16.mxu0 0
    %2241 = vmatpush1.bf16.msra.mxu0 0
    %2242 = vmatprep.subr.bf16.mxu0 0
    %2243 = vmatpush1.bf16.msra.mxu0 0
    %2244 = vmatprep.subr.bf16.mxu0 0
    %2245 = vmatpush1.bf16.msra.mxu0 0
    %2246 = vmatprep.subr.bf16.mxu0 0
    %2247 = vmatpush1.bf16.msra.mxu0 0
    %2248 = vmatprep.subr.bf16.mxu0 0
    %2249 = vmatpush1.bf16.msra.mxu0 0
    %2250 = vmatprep.subr.bf16.mxu0 0
    %2251 = vmatpush1.bf16.msra.mxu0 0
    %2252 = vmatprep.subr.bf16.mxu0 0
    %2253 = vmatpush1.bf16.msra.mxu0 0
    %2254 = vmatprep.subr.bf16.mxu0 0
    %2255 = vmatpush1.bf16.msra.mxu0 0
    %2256 = vmatprep.subr.bf16.mxu0 0
    %2257 = vmatpush1.bf16.msra.mxu0 0
    %2258 = vmatprep.subr.bf16.mxu0 0
    %2259 = vmatpush1.bf16.msra.mxu0 0
    %2260 = vmatprep.subr.bf16.mxu0 0
    %2261 = vmatpush1.bf16.msra.mxu0 0
    %2262 = vmatprep.subr.bf16.mxu0 0
    %2263 = vmatpush1.bf16.msra.mxu0 0
    %2264 = vmatprep.subr.bf16.mxu0 0
    %2265 = vmatpush1.bf16.msra.mxu0 0
    %2266 = vmatprep.mubr.bf16.mxu0 0
    %2267 = vmatmul.mubr.bf16.gmra.mrb[0].mxu0 %v2229
    %v2268 = vpop.f32.mrb[0].mxu0
    %v2269 = vadd.f32 0.0, %v2268
    %v2270 = vpop.f32.mrb[0].mxu0
    %v2271 = vpop.f32.mrb[0].mxu0
    %v2272 = vpop.f32.mrb[0].mxu0
    %2273 = vdwg.mxu0
    %v2274 = vadd.f32 %v2224, %v2269
    %2275 = vst.msk [vmem:[%s2217] sm:$0xff] %vm378, %v2274
    %2276 = vst.msk [vmem:[%s2192] sm:$0xff] %vm449, %v2197
    %2277 = vrot.lane.b32.xlu0 %v1464, 104
    %v2278 = vpop.permute.xlu0 %2277
    %2279 = vrot.lane.b32.xlu0 %v1465, 104
    %v2280 = vpop.permute.xlu0 %2279
    %v2282 = vsel %vm378, %v2278, 0
    %v2285 = vsel %vm378, %v2280, 0
    %2287 = vmatprep.subr.bf16.mxu0 0
    %2288 = vmatpush1.bf16.xpose.msra.mxu0 %v2285
    %2289 = vmatprep.subr.bf16.mxu0 0
    %2290 = vmatpush1.bf16.xpose.msra.mxu0 0
    %2291 = vmatprep.subr.bf16.mxu0 0
    %2292 = vmatpush1.bf16.xpose.msra.mxu0 0
    %2293 = vmatprep.subr.bf16.mxu0 0
    %2294 = vmatpush1.bf16.xpose.msra.mxu0 0
    %2295 = vmatprep.subr.bf16.mxu0 0
    %2296 = vmatpush1.bf16.xpose.msra.mxu0 0
    %2297 = vmatprep.subr.bf16.mxu0 0
    %2298 = vmatpush1.bf16.xpose.msra.mxu0 0
    %2299 = vmatprep.subr.bf16.mxu0 0
    %2300 = vmatpush1.bf16.xpose.msra.mxu0 0
    %2301 = vmatprep.subr.bf16.mxu0 0
    %2302 = vmatpush1.bf16.xpose.msra.mxu0 0
    %2303 = vmatprep.subr.bf16.mxu0 0
    %2304 = vmatpush1.bf16.xpose.msra.mxu0 0
    %2305 = vmatprep.subr.bf16.mxu0 0
    %2306 = vmatpush1.bf16.xpose.msra.mxu0 0
    %2307 = vmatprep.subr.bf16.mxu0 0
    %2308 = vmatpush1.bf16.xpose.msra.mxu0 0
    %2309 = vmatprep.subr.bf16.mxu0 0
    %2310 = vmatpush1.bf16.xpose.msra.mxu0 0
    %2311 = vmatprep.subr.bf16.mxu0 0
    %2312 = vmatpush1.bf16.xpose.msra.mxu0 0
    %2313 = vmatprep.subr.bf16.mxu0 0
    %2314 = vmatpush1.bf16.xpose.msra.mxu0 0
    %2315 = vmatprep.subr.bf16.mxu0 0
    %2316 = vmatpush1.bf16.xpose.msra.mxu0 0
    %2317 = vmatprep.subr.bf16.mxu0 0
    %2318 = vmatpush1.bf16.xpose.msra.mxu0 0
    %2319 = vmatprep.mubr.bf16.mxu0 0
    %2320 = vmatmul.mubr.bf16.gmra.mrb[0].mxu0 %v2282
    %v2321 = vpop.f32.mrb[0].mxu0
    %v2322 = vadd.f32 0.0, %v2321
    %v2323 = vpop.f32.mrb[0].mxu0
    %v2324 = vpop.f32.mrb[0].mxu0
    %v2325 = vpop.f32.mrb[0].mxu0
    %2326 = vdwg.mxu0
    %v2327 = vmul.f32 %v2322, 0.5
    %s2328 = scalar_lea.vmem [#allocation3], 112
    %v2329 = vld [vmem:[%s2328] sm:$0xff]
    %v2330 = vsel %vm427, %v2327, -inf
    %2331 = vmax.xlane.f32.xlu0 %v2330
    %v2332 = vpop.xlane.xlu0 %2331
    %v2333 = vmax.f32 %v2329, %v2332
    %v2334 = vsub.f32 %v2329, %v2333
    %v2335 = vmul.f32 %v2334, 1.442695
    %v2336 = vpow.pop %v2335
    %2338 = vset.pattern.permute.xlu0 0
    %2339 = vperm.xlu0 %2338, %v2333
    %v2340 = vpop.permute.xlu0 %2339
    %v2342 = vsub.f32 %v2327, %v2340
    %v2343 = vmul.f32 %v2342, 1.442695
    %v2344 = vpow.pop %v2343
    %s2345 = scalar_lea.vmem [#allocation4], 112
    %v2346 = vld [vmem:[%s2345] sm:$0xff]
    %v2347 = vmul.f32 %v2336, %v2346
    %v2348 = vsel %vm427, %v2344, 0.0
    %2349 = vadd.xlane.f32.xlu0 %v2348
    %v2350 = vpop.xlane.xlu0 %2349
    %v2351 = vadd.f32 %v2347, %v2350
    %2352 = vst.msk [vmem:[%s2345] sm:$0xff] %vm449, %v2351
    %s2353 = scalar_lea.vmem [#allocation5], 112
    %v2354 = vld [vmem:[%s2353] sm:$0xff]
    %2356 = vset.pattern.permute.xlu0 0
    %2357 = vperm.xlu0 %2356, %v2336
    %v2358 = vpop.permute.xlu0 %2357
    %v2360 = vmul.f32 %v2358, %v2354
    %v2361 = vpack.c.bf16 %v2344, %v2344
    %2362 = vrot.lane.b32.xlu0 %v1547, 104
    %v2363 = vpop.permute.xlu0 %2362
    %v2365 = vsel %vm427, %v2361, 0
    %v2368 = vsel %vm462, %v2363, 0
    %2370 = vmatprep.subr.bf16.mxu0 0
    %2371 = vmatpush1.bf16.msra.mxu0 %v2368
    %2372 = vmatprep.subr.bf16.mxu0 0
    %2373 = vmatpush1.bf16.msra.mxu0 0
    %2374 = vmatprep.subr.bf16.mxu0 0
    %2375 = vmatpush1.bf16.msra.mxu0 0
    %2376 = vmatprep.subr.bf16.mxu0 0
    %2377 = vmatpush1.bf16.msra.mxu0 0
    %2378 = vmatprep.subr.bf16.mxu0 0
    %2379 = vmatpush1.bf16.msra.mxu0 0
    %2380 = vmatprep.subr.bf16.mxu0 0
    %2381 = vmatpush1.bf16.msra.mxu0 0
    %2382 = vmatprep.subr.bf16.mxu0 0
    %2383 = vmatpush1.bf16.msra.mxu0 0
    %2384 = vmatprep.subr.bf16.mxu0 0
    %2385 = vmatpush1.bf16.msra.mxu0 0
    %2386 = vmatprep.subr.bf16.mxu0 0
    %2387 = vmatpush1.bf16.msra.mxu0 0
    %2388 = vmatprep.subr.bf16.mxu0 0
    %2389 = vmatpush1.bf16.msra.mxu0 0
    %2390 = vmatprep.subr.bf16.mxu0 0
    %2391 = vmatpush1.bf16.msra.mxu0 0
    %2392 = vmatprep.subr.bf16.mxu0 0
    %2393 = vmatpush1.bf16.msra.mxu0 0
    %2394 = vmatprep.subr.bf16.mxu0 0
    %2395 = vmatpush1.bf16.msra.mxu0 0
    %2396 = vmatprep.subr.bf16.mxu0 0
    %2397 = vmatpush1.bf16.msra.mxu0 0
    %2398 = vmatprep.subr.bf16.mxu0 0
    %2399 = vmatpush1.bf16.msra.mxu0 0
    %2400 = vmatprep.subr.bf16.mxu0 0
    %2401 = vmatpush1.bf16.msra.mxu0 0
    %2402 = vmatprep.mubr.bf16.mxu0 0
    %2403 = vmatmul.mubr.bf16.gmra.mrb[0].mxu0 %v2365
    %v2404 = vpop.f32.mrb[0].mxu0
    %v2405 = vadd.f32 0.0, %v2404
    %v2406 = vpop.f32.mrb[0].mxu0
    %v2407 = vpop.f32.mrb[0].mxu0
    %v2408 = vpop.f32.mrb[0].mxu0
    %2409 = vdwg.mxu0
    %v2410 = vadd.f32 %v2360, %v2405
    %2411 = vst.msk [vmem:[%s2353] sm:$0xff] %vm378, %v2410
    %2412 = vst.msk [vmem:[%s2328] sm:$0xff] %vm449, %v2333
    %2413 = vrot.lane.b32.xlu0 %v1464, 100
    %v2414 = vpop.permute.xlu0 %2413
    %2415 = vrot.lane.b32.xlu0 %v1465, 100
    %v2416 = vpop.permute.xlu0 %2415
    %v2418 = vsel %vm378, %v2414, 0
    %v2421 = vsel %vm378, %v2416, 0
    %2423 = vmatprep.subr.bf16.mxu0 0
    %2424 = vmatpush1.bf16.xpose.msra.mxu0 %v2421
    %2425 = vmatprep.subr.bf16.mxu0 0
    %2426 = vmatpush1.bf16.xpose.msra.mxu0 0
    %2427 = vmatprep.subr.bf16.mxu0 0
    %2428 = vmatpush1.bf16.xpose.msra.mxu0 0
    %2429 = vmatprep.subr.bf16.mxu0 0
    %2430 = vmatpush1.bf16.xpose.msra.mxu0 0
    %2431 = vmatprep.subr.bf16.mxu0 0
    %2432 = vmatpush1.bf16.xpose.msra.mxu0 0
    %2433 = vmatprep.subr.bf16.mxu0 0
    %2434 = vmatpush1.bf16.xpose.msra.mxu0 0
    %2435 = vmatprep.subr.bf16.mxu0 0
    %2436 = vmatpush1.bf16.xpose.msra.mxu0 0
    %2437 = vmatprep.subr.bf16.mxu0 0
    %2438 = vmatpush1.bf16.xpose.msra.mxu0 0
    %2439 = vmatprep.subr.bf16.mxu0 0
    %2440 = vmatpush1.bf16.xpose.msra.mxu0 0
    %2441 = vmatprep.subr.bf16.mxu0 0
    %2442 = vmatpush1.bf16.xpose.msra.mxu0 0
    %2443 = vmatprep.subr.bf16.mxu0 0
    %2444 = vmatpush1.bf16.xpose.msra.mxu0 0
    %2445 = vmatprep.subr.bf16.mxu0 0
    %2446 = vmatpush1.bf16.xpose.msra.mxu0 0
    %2447 = vmatprep.subr.bf16.mxu0 0
    %2448 = vmatpush1.bf16.xpose.msra.mxu0 0
    %2449 = vmatprep.subr.bf16.mxu0 0
    %2450 = vmatpush1.bf16.xpose.msra.mxu0 0
    %2451 = vmatprep.subr.bf16.mxu0 0
    %2452 = vmatpush1.bf16.xpose.msra.mxu0 0
    %2453 = vmatprep.subr.bf16.mxu0 0
    %2454 = vmatpush1.bf16.xpose.msra.mxu0 0
    %2455 = vmatprep.mubr.bf16.mxu0 0
    %2456 = vmatmul.mubr.bf16.gmra.mrb[0].mxu0 %v2418
    %v2457 = vpop.f32.mrb[0].mxu0
    %v2458 = vadd.f32 0.0, %v2457
    %v2459 = vpop.f32.mrb[0].mxu0
    %v2460 = vpop.f32.mrb[0].mxu0
    %v2461 = vpop.f32.mrb[0].mxu0
    %2462 = vdwg.mxu0
    %v2463 = vmul.f32 %v2458, 0.5
    %s2464 = scalar_lea.vmem [#allocation3], 120
    %v2465 = vld [vmem:[%s2464] sm:$0xff]
    %v2466 = vsel %vm427, %v2463, -inf
    %2467 = vmax.xlane.f32.xlu0 %v2466
    %v2468 = vpop.xlane.xlu0 %2467
    %v2469 = vmax.f32 %v2465, %v2468
    %v2470 = vsub.f32 %v2465, %v2469
    %v2471 = vmul.f32 %v2470, 1.442695
    %v2472 = vpow.pop %v2471
    %2474 = vset.pattern.permute.xlu0 0
    %2475 = vperm.xlu0 %2474, %v2469
    %v2476 = vpop.permute.xlu0 %2475
    %v2478 = vsub.f32 %v2463, %v2476
    %v2479 = vmul.f32 %v2478, 1.442695
    %v2480 = vpow.pop %v2479
    %s2481 = scalar_lea.vmem [#allocation4], 120
    %v2482 = vld [vmem:[%s2481] sm:$0xff]
    %v2483 = vmul.f32 %v2472, %v2482
    %v2484 = vsel %vm427, %v2480, 0.0
    %2485 = vadd.xlane.f32.xlu0 %v2484
    %v2486 = vpop.xlane.xlu0 %2485
    %v2487 = vadd.f32 %v2483, %v2486
    %2488 = vst.msk [vmem:[%s2481] sm:$0xff] %vm449, %v2487
    %s2489 = scalar_lea.vmem [#allocation5], 120
    %v2490 = vld [vmem:[%s2489] sm:$0xff]
    %2492 = vset.pattern.permute.xlu0 0
    %2493 = vperm.xlu0 %2492, %v2472
    %v2494 = vpop.permute.xlu0 %2493
    %v2496 = vmul.f32 %v2494, %v2490
    %v2497 = vpack.c.bf16 %v2480, %v2480
    %2498 = vrot.lane.b32.xlu0 %v1547, 100
    %v2499 = vpop.permute.xlu0 %2498
    %v2501 = vsel %vm427, %v2497, 0
    %v2504 = vsel %vm462, %v2499, 0
    %2506 = vmatprep.subr.bf16.mxu0 0
    %2507 = vmatpush1.bf16.msra.mxu0 %v2504
    %2508 = vmatprep.subr.bf16.mxu0 0
    %2509 = vmatpush1.bf16.msra.mxu0 0
    %2510 = vmatprep.subr.bf16.mxu0 0
    %2511 = vmatpush1.bf16.msra.mxu0 0
    %2512 = vmatprep.subr.bf16.mxu0 0
    %2513 = vmatpush1.bf16.msra.mxu0 0
    %2514 = vmatprep.subr.bf16.mxu0 0
    %2515 = vmatpush1.bf16.msra.mxu0 0
    %2516 = vmatprep.subr.bf16.mxu0 0
    %2517 = vmatpush1.bf16.msra.mxu0 0
    %2518 = vmatprep.subr.bf16.mxu0 0
    %2519 = vmatpush1.bf16.msra.mxu0 0
    %2520 = vmatprep.subr.bf16.mxu0 0
    %2521 = vmatpush1.bf16.msra.mxu0 0
    %2522 = vmatprep.subr.bf16.mxu0 0
    %2523 = vmatpush1.bf16.msra.mxu0 0
    %2524 = vmatprep.subr.bf16.mxu0 0
    %2525 = vmatpush1.bf16.msra.mxu0 0
    %2526 = vmatprep.subr.bf16.mxu0 0
    %2527 = vmatpush1.bf16.msra.mxu0 0
    %2528 = vmatprep.subr.bf16.mxu0 0
    %2529 = vmatpush1.bf16.msra.mxu0 0
    %2530 = vmatprep.subr.bf16.mxu0 0
    %2531 = vmatpush1.bf16.msra.mxu0 0
    %2532 = vmatprep.subr.bf16.mxu0 0
    %2533 = vmatpush1.bf16.msra.mxu0 0
    %2534 = vmatprep.subr.bf16.mxu0 0
    %2535 = vmatpush1.bf16.msra.mxu0 0
    %2536 = vmatprep.subr.bf16.mxu0 0
    %2537 = vmatpush1.bf16.msra.mxu0 0
    %2538 = vmatprep.mubr.bf16.mxu0 0
    %2539 = vmatmul.mubr.bf16.gmra.mrb[0].mxu0 %v2501
    %v2540 = vpop.f32.mrb[0].mxu0
    %v2541 = vadd.f32 0.0, %v2540
    %v2542 = vpop.f32.mrb[0].mxu0
    %v2543 = vpop.f32.mrb[0].mxu0
    %v2544 = vpop.f32.mrb[0].mxu0
    %2545 = vdwg.mxu0
    %v2546 = vadd.f32 %v2496, %v2541
    %2547 = vst.msk [vmem:[%s2489] sm:$0xff] %vm378, %v2546
    %2548 = vst.msk [vmem:[%s2464] sm:$0xff] %vm449, %v2469
    // Predicated region
    $region66: #{tpu_custom_call.1} parent=1 // pred_check
      %p2549 = pneg %p105
    $region67: #{tpu_custom_call.1} parent=1 // pred_check_branch
      %2551 = sbr.rel (%p2549) target = $region69
    $region68: #{tpu_custom_call.1} parent=1 // pred_region
      %v2552 = vld [vmem:[%s9] sm:$0x1]
      %v2553 = vld [vmem:[#allocation14] sm:$0xf]
      %v2554 = vld [vmem:[#allocation14 + $0x4] sm:$0xf]
      %v2555 = vld [vmem:[#allocation14 + $0x8] sm:$0xf]
      %v2556 = vld [vmem:[#allocation14 + $0xc] sm:$0xf]
      %v2557 = vld [vmem:[#allocation4] sm:$0xff]
      %v2558 = vrcp.pop %v2557
      %v2559 = vld [vmem:[#allocation5] sm:$0xff]
      %2561 = vset.pattern.permute.xlu0 0
      %2562 = vperm.xlu0 %2561, %v2558
      %v2563 = vpop.permute.xlu0 %2562
      %v2565 = vmul.f32 %v2559, %v2563
      %v2566 = vpack.c.bf16 %v2565, %v2565
      %v2567 = vld [vmem:[%s579] sm:$0xff]
      %v2568 = vrcp.pop %v2567
      %v2569 = vld [vmem:[%s587] sm:$0xff]
      %2571 = vset.pattern.permute.xlu0 0
      %2572 = vperm.xlu0 %2571, %v2568
      %v2573 = vpop.permute.xlu0 %2572
      %v2575 = vmul.f32 %v2569, %v2573
      %v2576 = vpack.c.bf16 %v2575, %v2575
      %v2578 = vunpack.c.l.b16 %v2553
      %v2579 = vpack.c.b16 %v2578, %v2578
      %v2580 = vrot.slane %v2579, 2
      %v2582 = vsel %vm378, %v2576, 0
      %vm2584 = vcmask 1041408
      %v2586 = vsel %vm2584, %v2580, 0
      %2588 = vmatprep.subr.bf16.mxu0 0
      %2589 = vmatpush1.bf16.msra.mxu0 %v2586
      %2590 = vmatprep.subr.bf16.mxu0 0
      %2591 = vmatpush1.bf16.msra.mxu0 0
      %2592 = vmatprep.subr.bf16.mxu0 0
      %2593 = vmatpush1.bf16.msra.mxu0 0
      %2594 = vmatprep.subr.bf16.mxu0 0
      %2595 = vmatpush1.bf16.msra.mxu0 0
      %2596 = vmatprep.subr.bf16.mxu0 0
      %2597 = vmatpush1.bf16.msra.mxu0 0
      %2598 = vmatprep.subr.bf16.mxu0 0
      %2599 = vmatpush1.bf16.msra.mxu0 0
      %2600 = vmatprep.subr.bf16.mxu0 0
      %2601 = vmatpush1.bf16.msra.mxu0 0
      %2602 = vmatprep.subr.bf16.mxu0 0
      %2603 = vmatpush1.bf16.msra.mxu0 0
      %2604 = vmatprep.subr.bf16.mxu0 0
      %2605 = vmatpush1.bf16.msra.mxu0 0
      %2606 = vmatprep.subr.bf16.mxu0 0
      %2607 = vmatpush1.bf16.msra.mxu0 0
      %2608 = vmatprep.subr.bf16.mxu0 0
      %2609 = vmatpush1.bf16.msra.mxu0 0
      %2610 = vmatprep.subr.bf16.mxu0 0
      %2611 = vmatpush1.bf16.msra.mxu0 0
      %2612 = vmatprep.subr.bf16.mxu0 0
      %2613 = vmatpush1.bf16.msra.mxu0 0
      %2614 = vmatprep.subr.bf16.mxu0 0
      %2615 = vmatpush1.bf16.msra.mxu0 0
      %2616 = vmatprep.subr.bf16.mxu0 0
      %2617 = vmatpush1.bf16.msra.mxu0 0
      %2618 = vmatprep.subr.bf16.mxu0 0
      %2619 = vmatpush1.bf16.msra.mxu0 0
      %2620 = vmatprep.mubr.bf16.mxu0 0
      %2621 = vmatmul.mubr.bf16.gmra.mrb[0].mxu0 %v2582
      %v2622 = vpop.f32.mrb[0].mxu0
      %v2623 = vadd.f32 0.0, %v2622
      %v2624 = vpop.f32.mrb[0].mxu0
      %v2625 = vpop.f32.mrb[0].mxu0
      %v2626 = vpop.f32.mrb[0].mxu0
      %2627 = vdwg.mxu0
      %v2629 = vsel %vm378, %v2566, 0
      %v2632 = vsel %vm2584, %v2553, 0
      %2634 = vmatprep.subr.bf16.mxu0 0
      %2635 = vmatpush1.bf16.msra.mxu0 %v2632
      %2636 = vmatprep.subr.bf16.mxu0 0
      %2637 = vmatpush1.bf16.msra.mxu0 0
      %2638 = vmatprep.subr.bf16.mxu0 0
      %2639 = vmatpush1.bf16.msra.mxu0 0
      %2640 = vmatprep.subr.bf16.mxu0 0
      %2641 = vmatpush1.bf16.msra.mxu0 0
      %2642 = vmatprep.subr.bf16.mxu0 0
      %2643 = vmatpush1.bf16.msra.mxu0 0
      %2644 = vmatprep.subr.bf16.mxu0 0
      %2645 = vmatpush1.bf16.msra.mxu0 0
      %2646 = vmatprep.subr.bf16.mxu0 0
      %2647 = vmatpush1.bf16.msra.mxu0 0
      %2648 = vmatprep.subr.bf16.mxu0 0
      %2649 = vmatpush1.bf16.msra.mxu0 0
      %2650 = vmatprep.subr.bf16.mxu0 0
      %2651 = vmatpush1.bf16.msra.mxu0 0
      %2652 = vmatprep.subr.bf16.mxu0 0
      %2653 = vmatpush1.bf16.msra.mxu0 0
      %2654 = vmatprep.subr.bf16.mxu0 0
      %2655 = vmatpush1.bf16.msra.mxu0 0
      %2656 = vmatprep.subr.bf16.mxu0 0
      %2657 = vmatpush1.bf16.msra.mxu0 0
      %2658 = vmatprep.subr.bf16.mxu0 0
      %2659 = vmatpush1.bf16.msra.mxu0 0
      %2660 = vmatprep.subr.bf16.mxu0 0
      %2661 = vmatpush1.bf16.msra.mxu0 0
      %2662 = vmatprep.subr.bf16.mxu0 0
      %2663 = vmatpush1.bf16.msra.mxu0 0
      %2664 = vmatprep.subr.bf16.mxu0 0
      %2665 = vmatpush1.bf16.msra.mxu0 0
      %2666 = vmatprep.mubr.bf16.mxu0 0
      %2667 = vmatmul.mubr.bf16.gmra.mrb[0].mxu0 %v2629
      %v2668 = vpop.f32.mrb[0].mxu0
      %v2669 = vadd.f32 %v2623, %v2668
      %v2670 = vpop.f32.mrb[0].mxu0
      %v2671 = vpop.f32.mrb[0].mxu0
      %v2672 = vpop.f32.mrb[0].mxu0
      %2673 = vdwg.mxu0
      %v2674 = vld [vmem:[%s716] sm:$0xff]
      %v2675 = vrcp.pop %v2674
      %v2676 = vld [vmem:[%s724] sm:$0xff]
      %2678 = vset.pattern.permute.xlu0 0
      %2679 = vperm.xlu0 %2678, %v2675
      %v2680 = vpop.permute.xlu0 %2679
      %v2682 = vmul.f32 %v2676, %v2680
      %v2683 = vpack.c.bf16 %v2682, %v2682
      %v2685 = vsel %vm378, %v2683, 0
      %v2688 = vsel %vm2584, %v2554, 0
      %2690 = vmatprep.subr.bf16.mxu0 0
      %2691 = vmatpush1.bf16.msra.mxu0 %v2688
      %2692 = vmatprep.subr.bf16.mxu0 0
      %2693 = vmatpush1.bf16.msra.mxu0 0
      %2694 = vmatprep.subr.bf16.mxu0 0
      %2695 = vmatpush1.bf16.msra.mxu0 0
      %2696 = vmatprep.subr.bf16.mxu0 0
      %2697 = vmatpush1.bf16.msra.mxu0 0
      %2698 = vmatprep.subr.bf16.mxu0 0
      %2699 = vmatpush1.bf16.msra.mxu0 0
      %2700 = vmatprep.subr.bf16.mxu0 0
      %2701 = vmatpush1.bf16.msra.mxu0 0
      %2702 = vmatprep.subr.bf16.mxu0 0
      %2703 = vmatpush1.bf16.msra.mxu0 0
      %2704 = vmatprep.subr.bf16.mxu0 0
      %2705 = vmatpush1.bf16.msra.mxu0 0
      %2706 = vmatprep.subr.bf16.mxu0 0
      %2707 = vmatpush1.bf16.msra.mxu0 0
      %2708 = vmatprep.subr.bf16.mxu0 0
      %2709 = vmatpush1.bf16.msra.mxu0 0
      %2710 = vmatprep.subr.bf16.mxu0 0
      %2711 = vmatpush1.bf16.msra.mxu0 0
      %2712 = vmatprep.subr.bf16.mxu0 0
      %2713 = vmatpush1.bf16.msra.mxu0 0
      %2714 = vmatprep.subr.bf16.mxu0 0
      %2715 = vmatpush1.bf16.msra.mxu0 0
      %2716 = vmatprep.subr.bf16.mxu0 0
      %2717 = vmatpush1.bf16.msra.mxu0 0
      %2718 = vmatprep.subr.bf16.mxu0 0
      %2719 = vmatpush1.bf16.msra.mxu0 0
      %2720 = vmatprep.subr.bf16.mxu0 0
      %2721 = vmatpush1.bf16.msra.mxu0 0
      %2722 = vmatprep.mubr.bf16.mxu0 0
      %2723 = vmatmul.mubr.bf16.gmra.mrb[0].mxu0 %v2685
      %v2724 = vpop.f32.mrb[0].mxu0
      %v2725 = vadd.f32 0.0, %v2724
      %v2726 = vpop.f32.mrb[0].mxu0
      %v2727 = vpop.f32.mrb[0].mxu0
      %v2728 = vpop.f32.mrb[0].mxu0
      %2729 = vdwg.mxu0
      %v2730 = vadd.f32 %v2669, %v2725
      %v2731 = vld [vmem:[%s852] sm:$0xff]
      %v2732 = vrcp.pop %v2731
      %v2733 = vld [vmem:[%s860] sm:$0xff]
      %2735 = vset.pattern.permute.xlu0 0
      %2736 = vperm.xlu0 %2735, %v2732
      %v2737 = vpop.permute.xlu0 %2736
      %v2739 = vmul.f32 %v2733, %v2737
      %v2740 = vpack.c.bf16 %v2739, %v2739
      %v2742 = vunpack.c.l.b16 %v2554
      %v2743 = vpack.c.b16 %v2742, %v2742
      %v2744 = vrot.slane %v2743, 2
      %v2746 = vsel %vm378, %v2740, 0
      %v2749 = vsel %vm2584, %v2744, 0
      %2751 = vmatprep.subr.bf16.mxu0 0
      %2752 = vmatpush1.bf16.msra.mxu0 %v2749
      %2753 = vmatprep.subr.bf16.mxu0 0
      %2754 = vmatpush1.bf16.msra.mxu0 0
      %2755 = vmatprep.subr.bf16.mxu0 0
      %2756 = vmatpush1.bf16.msra.mxu0 0
      %2757 = vmatprep.subr.bf16.mxu0 0
      %2758 = vmatpush1.bf16.msra.mxu0 0
      %2759 = vmatprep.subr.bf16.mxu0 0
      %2760 = vmatpush1.bf16.msra.mxu0 0
      %2761 = vmatprep.subr.bf16.mxu0 0
      %2762 = vmatpush1.bf16.msra.mxu0 0
      %2763 = vmatprep.subr.bf16.mxu0 0
      %2764 = vmatpush1.bf16.msra.mxu0 0
      %2765 = vmatprep.subr.bf16.mxu0 0
      %2766 = vmatpush1.bf16.msra.mxu0 0
      %2767 = vmatprep.subr.bf16.mxu0 0
      %2768 = vmatpush1.bf16.msra.mxu0 0
      %2769 = vmatprep.subr.bf16.mxu0 0
      %2770 = vmatpush1.bf16.msra.mxu0 0
      %2771 = vmatprep.subr.bf16.mxu0 0
      %2772 = vmatpush1.bf16.msra.mxu0 0
      %2773 = vmatprep.subr.bf16.mxu0 0
      %2774 = vmatpush1.bf16.msra.mxu0 0
      %2775 = vmatprep.subr.bf16.mxu0 0
      %2776 = vmatpush1.bf16.msra.mxu0 0
      %2777 = vmatprep.subr.bf16.mxu0 0
      %2778 = vmatpush1.bf16.msra.mxu0 0
      %2779 = vmatprep.subr.bf16.mxu0 0
      %2780 = vmatpush1.bf16.msra.mxu0 0
      %2781 = vmatprep.subr.bf16.mxu0 0
      %2782 = vmatpush1.bf16.msra.mxu0 0
      %2783 = vmatprep.mubr.bf16.mxu0 0
      %2784 = vmatmul.mubr.bf16.gmra.mrb[0].mxu0 %v2746
      %v2785 = vpop.f32.mrb[0].mxu0
      %v2786 = vadd.f32 0.0, %v2785
      %v2787 = vpop.f32.mrb[0].mxu0
      %v2788 = vpop.f32.mrb[0].mxu0
      %v2789 = vpop.f32.mrb[0].mxu0
      %2790 = vdwg.mxu0
      %v2791 = vadd.f32 %v2730, %v2786
      %v2792 = vld [vmem:[%s988] sm:$0xff]
      %v2793 = vrcp.pop %v2792
      %v2794 = vld [vmem:[%s996] sm:$0xff]
      %2796 = vset.pattern.permute.xlu0 0
      %2797 = vperm.xlu0 %2796, %v2793
      %v2798 = vpop.permute.xlu0 %2797
      %v2800 = vmul.f32 %v2794, %v2798
      %v2801 = vpack.c.bf16 %v2800, %v2800
      %v2803 = vsel %vm378, %v2801, 0
      %v2806 = vsel %vm2584, %v2555, 0
      %2808 = vmatprep.subr.bf16.mxu0 0
      %2809 = vmatpush1.bf16.msra.mxu0 %v2806
      %2810 = vmatprep.subr.bf16.mxu0 0
      %2811 = vmatpush1.bf16.msra.mxu0 0
      %2812 = vmatprep.subr.bf16.mxu0 0
      %2813 = vmatpush1.bf16.msra.mxu0 0
      %2814 = vmatprep.subr.bf16.mxu0 0
      %2815 = vmatpush1.bf16.msra.mxu0 0
      %2816 = vmatprep.subr.bf16.mxu0 0
      %2817 = vmatpush1.bf16.msra.mxu0 0
      %2818 = vmatprep.subr.bf16.mxu0 0
      %2819 = vmatpush1.bf16.msra.mxu0 0
      %2820 = vmatprep.subr.bf16.mxu0 0
      %2821 = vmatpush1.bf16.msra.mxu0 0
      %2822 = vmatprep.subr.bf16.mxu0 0
      %2823 = vmatpush1.bf16.msra.mxu0 0
      %2824 = vmatprep.subr.bf16.mxu0 0
      %2825 = vmatpush1.bf16.msra.mxu0 0
      %2826 = vmatprep.subr.bf16.mxu0 0
      %2827 = vmatpush1.bf16.msra.mxu0 0
      %2828 = vmatprep.subr.bf16.mxu0 0
      %2829 = vmatpush1.bf16.msra.mxu0 0
      %2830 = vmatprep.subr.bf16.mxu0 0
      %2831 = vmatpush1.bf16.msra.mxu0 0
      %2832 = vmatprep.subr.bf16.mxu0 0
      %2833 = vmatpush1.bf16.msra.mxu0 0
      %2834 = vmatprep.subr.bf16.mxu0 0
      %2835 = vmatpush1.bf16.msra.mxu0 0
      %2836 = vmatprep.subr.bf16.mxu0 0
      %2837 = vmatpush1.bf16.msra.mxu0 0
      %2838 = vmatprep.subr.bf16.mxu0 0
      %2839 = vmatpush1.bf16.msra.mxu0 0
      %2840 = vmatprep.mubr.bf16.mxu0 0
      %2841 = vmatmul.mubr.bf16.gmra.mrb[0].mxu0 %v2803
      %v2842 = vpop.f32.mrb[0].mxu0
      %v2843 = vadd.f32 0.0, %v2842
      %v2844 = vpop.f32.mrb[0].mxu0
      %v2845 = vpop.f32.mrb[0].mxu0
      %v2846 = vpop.f32.mrb[0].mxu0
      %2847 = vdwg.mxu0
      %v2848 = vadd.f32 %v2791, %v2843
      %v2849 = vld [vmem:[%s1124] sm:$0xff]
      %v2850 = vrcp.pop %v2849
      %v2851 = vld [vmem:[%s1132] sm:$0xff]
      %2853 = vset.pattern.permute.xlu0 0
      %2854 = vperm.xlu0 %2853, %v2850
      %v2855 = vpop.permute.xlu0 %2854
      %v2857 = vmul.f32 %v2851, %v2855
      %v2858 = vpack.c.bf16 %v2857, %v2857
      %v2860 = vunpack.c.l.b16 %v2555
      %v2861 = vpack.c.b16 %v2860, %v2860
      %v2862 = vrot.slane %v2861, 2
      %v2864 = vsel %vm378, %v2858, 0
      %v2867 = vsel %vm2584, %v2862, 0
      %2869 = vmatprep.subr.bf16.mxu0 0
      %2870 = vmatpush1.bf16.msra.mxu0 %v2867
      %2871 = vmatprep.subr.bf16.mxu0 0
      %2872 = vmatpush1.bf16.msra.mxu0 0
      %2873 = vmatprep.subr.bf16.mxu0 0
      %2874 = vmatpush1.bf16.msra.mxu0 0
      %2875 = vmatprep.subr.bf16.mxu0 0
      %2876 = vmatpush1.bf16.msra.mxu0 0
      %2877 = vmatprep.subr.bf16.mxu0 0
      %2878 = vmatpush1.bf16.msra.mxu0 0
      %2879 = vmatprep.subr.bf16.mxu0 0
      %2880 = vmatpush1.bf16.msra.mxu0 0
      %2881 = vmatprep.subr.bf16.mxu0 0
      %2882 = vmatpush1.bf16.msra.mxu0 0
      %2883 = vmatprep.subr.bf16.mxu0 0
      %2884 = vmatpush1.bf16.msra.mxu0 0
      %2885 = vmatprep.subr.bf16.mxu0 0
      %2886 = vmatpush1.bf16.msra.mxu0 0
      %2887 = vmatprep.subr.bf16.mxu0 0
      %2888 = vmatpush1.bf16.msra.mxu0 0
      %2889 = vmatprep.subr.bf16.mxu0 0
      %2890 = vmatpush1.bf16.msra.mxu0 0
      %2891 = vmatprep.subr.bf16.mxu0 0
      %2892 = vmatpush1.bf16.msra.mxu0 0
      %2893 = vmatprep.subr.bf16.mxu0 0
      %2894 = vmatpush1.bf16.msra.mxu0 0
      %2895 = vmatprep.subr.bf16.mxu0 0
      %2896 = vmatpush1.bf16.msra.mxu0 0
      %2897 = vmatprep.subr.bf16.mxu0 0
      %2898 = vmatpush1.bf16.msra.mxu0 0
      %2899 = vmatprep.subr.bf16.mxu0 0
      %2900 = vmatpush1.bf16.msra.mxu0 0
      %2901 = vmatprep.mubr.bf16.mxu0 0
      %2902 = vmatmul.mubr.bf16.gmra.mrb[0].mxu0 %v2864
      %v2903 = vpop.f32.mrb[0].mxu0
      %v2904 = vadd.f32 0.0, %v2903
      %v2905 = vpop.f32.mrb[0].mxu0
      %v2906 = vpop.f32.mrb[0].mxu0
      %v2907 = vpop.f32.mrb[0].mxu0
      %2908 = vdwg.mxu0
      %v2909 = vadd.f32 %v2848, %v2904
      %v2910 = vld [vmem:[%s1260] sm:$0xff]
      %v2911 = vrcp.pop %v2910
      %v2912 = vld [vmem:[%s1268] sm:$0xff]
      %2914 = vset.pattern.permute.xlu0 0
      %2915 = vperm.xlu0 %2914, %v2911
      %v2916 = vpop.permute.xlu0 %2915
      %v2918 = vmul.f32 %v2912, %v2916
      %v2919 = vpack.c.bf16 %v2918, %v2918
      %v2921 = vsel %vm378, %v2919, 0
      %v2924 = vsel %vm2584, %v2556, 0
      %2926 = vmatprep.subr.bf16.mxu0 0
      %2927 = vmatpush1.bf16.msra.mxu0 %v2924
      %2928 = vmatprep.subr.bf16.mxu0 0
      %2929 = vmatpush1.bf16.msra.mxu0 0
      %2930 = vmatprep.subr.bf16.mxu0 0
      %2931 = vmatpush1.bf16.msra.mxu0 0
      %2932 = vmatprep.subr.bf16.mxu0 0
      %2933 = vmatpush1.bf16.msra.mxu0 0
      %2934 = vmatprep.subr.bf16.mxu0 0
      %2935 = vmatpush1.bf16.msra.mxu0 0
      %2936 = vmatprep.subr.bf16.mxu0 0
      %2937 = vmatpush1.bf16.msra.mxu0 0
      %2938 = vmatprep.subr.bf16.mxu0 0
      %2939 = vmatpush1.bf16.msra.mxu0 0
      %2940 = vmatprep.subr.bf16.mxu0 0
      %2941 = vmatpush1.bf16.msra.mxu0 0
      %2942 = vmatprep.subr.bf16.mxu0 0
      %2943 = vmatpush1.bf16.msra.mxu0 0
      %2944 = vmatprep.subr.bf16.mxu0 0
      %2945 = vmatpush1.bf16.msra.mxu0 0
      %2946 = vmatprep.subr.bf16.mxu0 0
      %2947 = vmatpush1.bf16.msra.mxu0 0
      %2948 = vmatprep.subr.bf16.mxu0 0
      %2949 = vmatpush1.bf16.msra.mxu0 0
      %2950 = vmatprep.subr.bf16.mxu0 0
      %2951 = vmatpush1.bf16.msra.mxu0 0
      %2952 = vmatprep.subr.bf16.mxu0 0
      %2953 = vmatpush1.bf16.msra.mxu0 0
      %2954 = vmatprep.subr.bf16.mxu0 0
      %2955 = vmatpush1.bf16.msra.mxu0 0
      %2956 = vmatprep.subr.bf16.mxu0 0
      %2957 = vmatpush1.bf16.msra.mxu0 0
      %2958 = vmatprep.mubr.bf16.mxu0 0
      %2959 = vmatmul.mubr.bf16.gmra.mrb[0].mxu0 %v2921
      %v2960 = vpop.f32.mrb[0].mxu0
      %v2961 = vadd.f32 0.0, %v2960
      %v2962 = vpop.f32.mrb[0].mxu0
      %v2963 = vpop.f32.mrb[0].mxu0
      %v2964 = vpop.f32.mrb[0].mxu0
      %2965 = vdwg.mxu0
      %v2966 = vadd.f32 %v2909, %v2961
      %v2967 = vld [vmem:[%s1396] sm:$0xff]
      %v2968 = vrcp.pop %v2967
      %v2969 = vld [vmem:[%s1404] sm:$0xff]
      %2971 = vset.pattern.permute.xlu0 0
      %2972 = vperm.xlu0 %2971, %v2968
      %v2973 = vpop.permute.xlu0 %2972
      %v2975 = vmul.f32 %v2969, %v2973
      %v2976 = vpack.c.bf16 %v2975, %v2975
      %v2978 = vunpack.c.l.b16 %v2556
      %v2979 = vpack.c.b16 %v2978, %v2978
      %v2980 = vrot.slane %v2979, 2
      %v2982 = vsel %vm378, %v2976, 0
      %v2985 = vsel %vm2584, %v2980, 0
      %2987 = vmatprep.subr.bf16.mxu0 0
      %2988 = vmatpush1.bf16.msra.mxu0 %v2985
      %2989 = vmatprep.subr.bf16.mxu0 0
      %2990 = vmatpush1.bf16.msra.mxu0 0
      %2991 = vmatprep.subr.bf16.mxu0 0
      %2992 = vmatpush1.bf16.msra.mxu0 0
      %2993 = vmatprep.subr.bf16.mxu0 0
      %2994 = vmatpush1.bf16.msra.mxu0 0
      %2995 = vmatprep.subr.bf16.mxu0 0
      %2996 = vmatpush1.bf16.msra.mxu0 0
      %2997 = vmatprep.subr.bf16.mxu0 0
      %2998 = vmatpush1.bf16.msra.mxu0 0
      %2999 = vmatprep.subr.bf16.mxu0 0
      %3000 = vmatpush1.bf16.msra.mxu0 0
      %3001 = vmatprep.subr.bf16.mxu0 0
      %3002 = vmatpush1.bf16.msra.mxu0 0
      %3003 = vmatprep.subr.bf16.mxu0 0
      %3004 = vmatpush1.bf16.msra.mxu0 0
      %3005 = vmatprep.subr.bf16.mxu0 0
      %3006 = vmatpush1.bf16.msra.mxu0 0
      %3007 = vmatprep.subr.bf16.mxu0 0
      %3008 = vmatpush1.bf16.msra.mxu0 0
      %3009 = vmatprep.subr.bf16.mxu0 0
      %3010 = vmatpush1.bf16.msra.mxu0 0
      %3011 = vmatprep.subr.bf16.mxu0 0
      %3012 = vmatpush1.bf16.msra.mxu0 0
      %3013 = vmatprep.subr.bf16.mxu0 0
      %3014 = vmatpush1.bf16.msra.mxu0 0
      %3015 = vmatprep.subr.bf16.mxu0 0
      %3016 = vmatpush1.bf16.msra.mxu0 0
      %3017 = vmatprep.subr.bf16.mxu0 0
      %3018 = vmatpush1.bf16.msra.mxu0 0
      %3019 = vmatprep.mubr.bf16.mxu0 0
      %3020 = vmatmul.mubr.bf16.gmra.mrb[0].mxu0 %v2982
      %v3021 = vpop.f32.mrb[0].mxu0
      %v3022 = vadd.f32 0.0, %v3021
      %v3023 = vpop.f32.mrb[0].mxu0
      %v3024 = vpop.f32.mrb[0].mxu0
      %v3025 = vpop.f32.mrb[0].mxu0
      %3026 = vdwg.mxu0
      %v3027 = vadd.f32 %v2966, %v3022
      %v3029 = vlaneseq
      %v3030 = vshrl.u32 %v3029, 7
      %v3031 = vsub.s32 0, %v3030
      %v3032 = vrot.slane %v2552, %v3031
      %v3034 = vadd.f32 %v3027, %v3032
      %3035 = vst.msk [vmem:[#allocation15] sm:$0xff] %vm266, %v3034
      %v3036 = vld [vmem:[%s1530] sm:$0xff]
      %v3037 = vrcp.pop %v3036
      %v3038 = vld [vmem:[%s1538] sm:$0xff]
      %3040 = vset.pattern.permute.xlu0 0
      %3041 = vperm.xlu0 %3040, %v3037
      %v3042 = vpop.permute.xlu0 %3041
      %v3044 = vmul.f32 %v3038, %v3042
      %v3045 = vpack.c.bf16 %v3044, %v3044
      %v3046 = vld [vmem:[%s1665] sm:$0xff]
      %v3047 = vrcp.pop %v3046
      %v3048 = vld [vmem:[%s1673] sm:$0xff]
      %3050 = vset.pattern.permute.xlu0 0
      %3051 = vperm.xlu0 %3050, %v3047
      %v3052 = vpop.permute.xlu0 %3051
      %v3054 = vmul.f32 %v3048, %v3052
      %v3055 = vpack.c.bf16 %v3054, %v3054
      %v3057 = vsel %vm378, %v3055, 0
      %3059 = vmatprep.subr.bf16.mxu0 0
      %3060 = vmatpush1.bf16.msra.mxu0 %v2586
      %3061 = vmatprep.subr.bf16.mxu0 0
      %3062 = vmatpush1.bf16.msra.mxu0 0
      %3063 = vmatprep.subr.bf16.mxu0 0
      %3064 = vmatpush1.bf16.msra.mxu0 0
      %3065 = vmatprep.subr.bf16.mxu0 0
      %3066 = vmatpush1.bf16.msra.mxu0 0
      %3067 = vmatprep.subr.bf16.mxu0 0
      %3068 = vmatpush1.bf16.msra.mxu0 0
      %3069 = vmatprep.subr.bf16.mxu0 0
      %3070 = vmatpush1.bf16.msra.mxu0 0
      %3071 = vmatprep.subr.bf16.mxu0 0
      %3072 = vmatpush1.bf16.msra.mxu0 0
      %3073 = vmatprep.subr.bf16.mxu0 0
      %3074 = vmatpush1.bf16.msra.mxu0 0
      %3075 = vmatprep.subr.bf16.mxu0 0
      %3076 = vmatpush1.bf16.msra.mxu0 0
      %3077 = vmatprep.subr.bf16.mxu0 0
      %3078 = vmatpush1.bf16.msra.mxu0 0
      %3079 = vmatprep.subr.bf16.mxu0 0
      %3080 = vmatpush1.bf16.msra.mxu0 0
      %3081 = vmatprep.subr.bf16.mxu0 0
      %3082 = vmatpush1.bf16.msra.mxu0 0
      %3083 = vmatprep.subr.bf16.mxu0 0
      %3084 = vmatpush1.bf16.msra.mxu0 0
      %3085 = vmatprep.subr.bf16.mxu0 0
      %3086 = vmatpush1.bf16.msra.mxu0 0
      %3087 = vmatprep.subr.bf16.mxu0 0
      %3088 = vmatpush1.bf16.msra.mxu0 0
      %3089 = vmatprep.subr.bf16.mxu0 0
      %3090 = vmatpush1.bf16.msra.mxu0 0
      %3091 = vmatprep.mubr.bf16.mxu0 0
      %3092 = vmatmul.mubr.bf16.gmra.mrb[0].mxu0 %v3057
      %v3093 = vpop.f32.mrb[0].mxu0
      %v3094 = vadd.f32 0.0, %v3093
      %v3095 = vpop.f32.mrb[0].mxu0
      %v3096 = vpop.f32.mrb[0].mxu0
      %v3097 = vpop.f32.mrb[0].mxu0
      %3098 = vdwg.mxu0
      %v3100 = vsel %vm378, %v3045, 0
      %3102 = vmatprep.subr.bf16.mxu0 0
      %3103 = vmatpush1.bf16.msra.mxu0 %v2632
      %3104 = vmatprep.subr.bf16.mxu0 0
      %3105 = vmatpush1.bf16.msra.mxu0 0
      %3106 = vmatprep.subr.bf16.mxu0 0
      %3107 = vmatpush1.bf16.msra.mxu0 0
      %3108 = vmatprep.subr.bf16.mxu0 0
      %3109 = vmatpush1.bf16.msra.mxu0 0
      %3110 = vmatprep.subr.bf16.mxu0 0
      %3111 = vmatpush1.bf16.msra.mxu0 0
      %3112 = vmatprep.subr.bf16.mxu0 0
      %3113 = vmatpush1.bf16.msra.mxu0 0
      %3114 = vmatprep.subr.bf16.mxu0 0
      %3115 = vmatpush1.bf16.msra.mxu0 0
      %3116 = vmatprep.subr.bf16.mxu0 0
      %3117 = vmatpush1.bf16.msra.mxu0 0
      %3118 = vmatprep.subr.bf16.mxu0 0
      %3119 = vmatpush1.bf16.msra.mxu0 0
      %3120 = vmatprep.subr.bf16.mxu0 0
      %3121 = vmatpush1.bf16.msra.mxu0 0
      %3122 = vmatprep.subr.bf16.mxu0 0
      %3123 = vmatpush1.bf16.msra.mxu0 0
      %3124 = vmatprep.subr.bf16.mxu0 0
      %3125 = vmatpush1.bf16.msra.mxu0 0
      %3126 = vmatprep.subr.bf16.mxu0 0
      %3127 = vmatpush1.bf16.msra.mxu0 0
      %3128 = vmatprep.subr.bf16.mxu0 0
      %3129 = vmatpush1.bf16.msra.mxu0 0
      %3130 = vmatprep.subr.bf16.mxu0 0
      %3131 = vmatpush1.bf16.msra.mxu0 0
      %3132 = vmatprep.subr.bf16.mxu0 0
      %3133 = vmatpush1.bf16.msra.mxu0 0
      %3134 = vmatprep.mubr.bf16.mxu0 0
      %3135 = vmatmul.mubr.bf16.gmra.mrb[0].mxu0 %v3100
      %v3136 = vpop.f32.mrb[0].mxu0
      %v3137 = vadd.f32 %v3094, %v3136
      %v3138 = vpop.f32.mrb[0].mxu0
      %v3139 = vpop.f32.mrb[0].mxu0
      %v3140 = vpop.f32.mrb[0].mxu0
      %3141 = vdwg.mxu0
      %v3142 = vld [vmem:[%s1801] sm:$0xff]
      %v3143 = vrcp.pop %v3142
      %v3144 = vld [vmem:[%s1809] sm:$0xff]
      %3146 = vset.pattern.permute.xlu0 0
      %3147 = vperm.xlu0 %3146, %v3143
      %v3148 = vpop.permute.xlu0 %3147
      %v3150 = vmul.f32 %v3144, %v3148
      %v3151 = vpack.c.bf16 %v3150, %v3150
      %v3153 = vsel %vm378, %v3151, 0
      %3155 = vmatprep.subr.bf16.mxu0 0
      %3156 = vmatpush1.bf16.msra.mxu0 %v2688
      %3157 = vmatprep.subr.bf16.mxu0 0
      %3158 = vmatpush1.bf16.msra.mxu0 0
      %3159 = vmatprep.subr.bf16.mxu0 0
      %3160 = vmatpush1.bf16.msra.mxu0 0
      %3161 = vmatprep.subr.bf16.mxu0 0
      %3162 = vmatpush1.bf16.msra.mxu0 0
      %3163 = vmatprep.subr.bf16.mxu0 0
      %3164 = vmatpush1.bf16.msra.mxu0 0
      %3165 = vmatprep.subr.bf16.mxu0 0
      %3166 = vmatpush1.bf16.msra.mxu0 0
      %3167 = vmatprep.subr.bf16.mxu0 0
      %3168 = vmatpush1.bf16.msra.mxu0 0
      %3169 = vmatprep.subr.bf16.mxu0 0
      %3170 = vmatpush1.bf16.msra.mxu0 0
      %3171 = vmatprep.subr.bf16.mxu0 0
      %3172 = vmatpush1.bf16.msra.mxu0 0
      %3173 = vmatprep.subr.bf16.mxu0 0
      %3174 = vmatpush1.bf16.msra.mxu0 0
      %3175 = vmatprep.subr.bf16.mxu0 0
      %3176 = vmatpush1.bf16.msra.mxu0 0
      %3177 = vmatprep.subr.bf16.mxu0 0
      %3178 = vmatpush1.bf16.msra.mxu0 0
      %3179 = vmatprep.subr.bf16.mxu0 0
      %3180 = vmatpush1.bf16.msra.mxu0 0
      %3181 = vmatprep.subr.bf16.mxu0 0
      %3182 = vmatpush1.bf16.msra.mxu0 0
      %3183 = vmatprep.subr.bf16.mxu0 0
      %3184 = vmatpush1.bf16.msra.mxu0 0
      %3185 = vmatprep.subr.bf16.mxu0 0
      %3186 = vmatpush1.bf16.msra.mxu0 0
      %3187 = vmatprep.mubr.bf16.mxu0 0
      %3188 = vmatmul.mubr.bf16.gmra.mrb[0].mxu0 %v3153
      %v3189 = vpop.f32.mrb[0].mxu0
      %v3190 = vadd.f32 0.0, %v3189
      %v3191 = vpop.f32.mrb[0].mxu0
      %v3192 = vpop.f32.mrb[0].mxu0
      %v3193 = vpop.f32.mrb[0].mxu0
      %3194 = vdwg.mxu0
      %v3195 = vadd.f32 %v3137, %v3190
      %v3196 = vld [vmem:[%s1937] sm:$0xff]
      %v3197 = vrcp.pop %v3196
      %v3198 = vld [vmem:[%s1945] sm:$0xff]
      %3200 = vset.pattern.permute.xlu0 0
      %3201 = vperm.xlu0 %3200, %v3197
      %v3202 = vpop.permute.xlu0 %3201
      %v3204 = vmul.f32 %v3198, %v3202
      %v3205 = vpack.c.bf16 %v3204, %v3204
      %v3207 = vsel %vm378, %v3205, 0
      %3209 = vmatprep.subr.bf16.mxu0 0
      %3210 = vmatpush1.bf16.msra.mxu0 %v2749
      %3211 = vmatprep.subr.bf16.mxu0 0
      %3212 = vmatpush1.bf16.msra.mxu0 0
      %3213 = vmatprep.subr.bf16.mxu0 0
      %3214 = vmatpush1.bf16.msra.mxu0 0
      %3215 = vmatprep.subr.bf16.mxu0 0
      %3216 = vmatpush1.bf16.msra.mxu0 0
      %3217 = vmatprep.subr.bf16.mxu0 0
      %3218 = vmatpush1.bf16.msra.mxu0 0
      %3219 = vmatprep.subr.bf16.mxu0 0
      %3220 = vmatpush1.bf16.msra.mxu0 0
      %3221 = vmatprep.subr.bf16.mxu0 0
      %3222 = vmatpush1.bf16.msra.mxu0 0
      %3223 = vmatprep.subr.bf16.mxu0 0
      %3224 = vmatpush1.bf16.msra.mxu0 0
      %3225 = vmatprep.subr.bf16.mxu0 0
      %3226 = vmatpush1.bf16.msra.mxu0 0
      %3227 = vmatprep.subr.bf16.mxu0 0
      %3228 = vmatpush1.bf16.msra.mxu0 0
      %3229 = vmatprep.subr.bf16.mxu0 0
      %3230 = vmatpush1.bf16.msra.mxu0 0
      %3231 = vmatprep.subr.bf16.mxu0 0
      %3232 = vmatpush1.bf16.msra.mxu0 0
      %3233 = vmatprep.subr.bf16.mxu0 0
      %3234 = vmatpush1.bf16.msra.mxu0 0
      %3235 = vmatprep.subr.bf16.mxu0 0
      %3236 = vmatpush1.bf16.msra.mxu0 0
      %3237 = vmatprep.subr.bf16.mxu0 0
      %3238 = vmatpush1.bf16.msra.mxu0 0
      %3239 = vmatprep.subr.bf16.mxu0 0
      %3240 = vmatpush1.bf16.msra.mxu0 0
      %3241 = vmatprep.mubr.bf16.mxu0 0
      %3242 = vmatmul.mubr.bf16.gmra.mrb[0].mxu0 %v3207
      %v3243 = vpop.f32.mrb[0].mxu0
      %v3244 = vadd.f32 0.0, %v3243
      %v3245 = vpop.f32.mrb[0].mxu0
      %v3246 = vpop.f32.mrb[0].mxu0
      %v3247 = vpop.f32.mrb[0].mxu0
      %3248 = vdwg.mxu0
      %v3249 = vadd.f32 %v3195, %v3244
      %v3250 = vld [vmem:[%s2073] sm:$0xff]
      %v3251 = vrcp.pop %v3250
      %v3252 = vld [vmem:[%s2081] sm:$0xff]
      %3254 = vset.pattern.permute.xlu0 0
      %3255 = vperm.xlu0 %3254, %v3251
      %v3256 = vpop.permute.xlu0 %3255
      %v3258 = vmul.f32 %v3252, %v3256
      %v3259 = vpack.c.bf16 %v3258, %v3258
      %v3261 = vsel %vm378, %v3259, 0
      %3263 = vmatprep.subr.bf16.mxu0 0
      %3264 = vmatpush1.bf16.msra.mxu0 %v2806
      %3265 = vmatprep.subr.bf16.mxu0 0
      %3266 = vmatpush1.bf16.msra.mxu0 0
      %3267 = vmatprep.subr.bf16.mxu0 0
      %3268 = vmatpush1.bf16.msra.mxu0 0
      %3269 = vmatprep.subr.bf16.mxu0 0
      %3270 = vmatpush1.bf16.msra.mxu0 0
      %3271 = vmatprep.subr.bf16.mxu0 0
      %3272 = vmatpush1.bf16.msra.mxu0 0
      %3273 = vmatprep.subr.bf16.mxu0 0
      %3274 = vmatpush1.bf16.msra.mxu0 0
      %3275 = vmatprep.subr.bf16.mxu0 0
      %3276 = vmatpush1.bf16.msra.mxu0 0
      %3277 = vmatprep.subr.bf16.mxu0 0
      %3278 = vmatpush1.bf16.msra.mxu0 0
      %3279 = vmatprep.subr.bf16.mxu0 0
      %3280 = vmatpush1.bf16.msra.mxu0 0
      %3281 = vmatprep.subr.bf16.mxu0 0
      %3282 = vmatpush1.bf16.msra.mxu0 0
      %3283 = vmatprep.subr.bf16.mxu0 0
      %3284 = vmatpush1.bf16.msra.mxu0 0
      %3285 = vmatprep.subr.bf16.mxu0 0
      %3286 = vmatpush1.bf16.msra.mxu0 0
      %3287 = vmatprep.subr.bf16.mxu0 0
      %3288 = vmatpush1.bf16.msra.mxu0 0
      %3289 = vmatprep.subr.bf16.mxu0 0
      %3290 = vmatpush1.bf16.msra.mxu0 0
      %3291 = vmatprep.subr.bf16.mxu0 0
      %3292 = vmatpush1.bf16.msra.mxu0 0
      %3293 = vmatprep.subr.bf16.mxu0 0
      %3294 = vmatpush1.bf16.msra.mxu0 0
      %3295 = vmatprep.mubr.bf16.mxu0 0
      %3296 = vmatmul.mubr.bf16.gmra.mrb[0].mxu0 %v3261
      %v3297 = vpop.f32.mrb[0].mxu0
      %v3298 = vadd.f32 0.0, %v3297
      %v3299 = vpop.f32.mrb[0].mxu0
      %v3300 = vpop.f32.mrb[0].mxu0
      %v3301 = vpop.f32.mrb[0].mxu0
      %3302 = vdwg.mxu0
      %v3303 = vadd.f32 %v3249, %v3298
      %v3304 = vld [vmem:[%s2209] sm:$0xff]
      %v3305 = vrcp.pop %v3304
      %v3306 = vld [vmem:[%s2217] sm:$0xff]
      %3308 = vset.pattern.permute.xlu0 0
      %3309 = vperm.xlu0 %3308, %v3305
      %v3310 = vpop.permute.xlu0 %3309
      %v3312 = vmul.f32 %v3306, %v3310
      %v3313 = vpack.c.bf16 %v3312, %v3312
      %v3315 = vsel %vm378, %v3313, 0
      %3317 = vmatprep.subr.bf16.mxu0 0
      %3318 = vmatpush1.bf16.msra.mxu0 %v2867
      %3319 = vmatprep.subr.bf16.mxu0 0
      %3320 = vmatpush1.bf16.msra.mxu0 0
      %3321 = vmatprep.subr.bf16.mxu0 0
      %3322 = vmatpush1.bf16.msra.mxu0 0
      %3323 = vmatprep.subr.bf16.mxu0 0
      %3324 = vmatpush1.bf16.msra.mxu0 0
      %3325 = vmatprep.subr.bf16.mxu0 0
      %3326 = vmatpush1.bf16.msra.mxu0 0
      %3327 = vmatprep.subr.bf16.mxu0 0
      %3328 = vmatpush1.bf16.msra.mxu0 0
      %3329 = vmatprep.subr.bf16.mxu0 0
      %3330 = vmatpush1.bf16.msra.mxu0 0
      %3331 = vmatprep.subr.bf16.mxu0 0
      %3332 = vmatpush1.bf16.msra.mxu0 0
      %3333 = vmatprep.subr.bf16.mxu0 0
      %3334 = vmatpush1.bf16.msra.mxu0 0
      %3335 = vmatprep.subr.bf16.mxu0 0
      %3336 = vmatpush1.bf16.msra.mxu0 0
      %3337 = vmatprep.subr.bf16.mxu0 0
      %3338 = vmatpush1.bf16.msra.mxu0 0
      %3339 = vmatprep.subr.bf16.mxu0 0
      %3340 = vmatpush1.bf16.msra.mxu0 0
      %3341 = vmatprep.subr.bf16.mxu0 0
      %3342 = vmatpush1.bf16.msra.mxu0 0
      %3343 = vmatprep.subr.bf16.mxu0 0
      %3344 = vmatpush1.bf16.msra.mxu0 0
      %3345 = vmatprep.subr.bf16.mxu0 0
      %3346 = vmatpush1.bf16.msra.mxu0 0
      %3347 = vmatprep.subr.bf16.mxu0 0
      %3348 = vmatpush1.bf16.msra.mxu0 0
      %3349 = vmatprep.mubr.bf16.mxu0 0
      %3350 = vmatmul.mubr.bf16.gmra.mrb[0].mxu0 %v3315
      %v3351 = vpop.f32.mrb[0].mxu0
      %v3352 = vadd.f32 0.0, %v3351
      %v3353 = vpop.f32.mrb[0].mxu0
      %v3354 = vpop.f32.mrb[0].mxu0
      %v3355 = vpop.f32.mrb[0].mxu0
      %3356 = vdwg.mxu0
      %v3357 = vadd.f32 %v3303, %v3352
      %v3358 = vld [vmem:[%s2345] sm:$0xff]
      %v3359 = vrcp.pop %v3358
      %v3360 = vld [vmem:[%s2353] sm:$0xff]
      %3362 = vset.pattern.permute.xlu0 0
      %3363 = vperm.xlu0 %3362, %v3359
      %v3364 = vpop.permute.xlu0 %3363
      %v3366 = vmul.f32 %v3360, %v3364
      %v3367 = vpack.c.bf16 %v3366, %v3366
      %v3369 = vsel %vm378, %v3367, 0
      %3371 = vmatprep.subr.bf16.mxu0 0
      %3372 = vmatpush1.bf16.msra.mxu0 %v2924
      %3373 = vmatprep.subr.bf16.mxu0 0
      %3374 = vmatpush1.bf16.msra.mxu0 0
      %3375 = vmatprep.subr.bf16.mxu0 0
      %3376 = vmatpush1.bf16.msra.mxu0 0
      %3377 = vmatprep.subr.bf16.mxu0 0
      %3378 = vmatpush1.bf16.msra.mxu0 0
      %3379 = vmatprep.subr.bf16.mxu0 0
      %3380 = vmatpush1.bf16.msra.mxu0 0
      %3381 = vmatprep.subr.bf16.mxu0 0
      %3382 = vmatpush1.bf16.msra.mxu0 0
      %3383 = vmatprep.subr.bf16.mxu0 0
      %3384 = vmatpush1.bf16.msra.mxu0 0
      %3385 = vmatprep.subr.bf16.mxu0 0
      %3386 = vmatpush1.bf16.msra.mxu0 0
      %3387 = vmatprep.subr.bf16.mxu0 0
      %3388 = vmatpush1.bf16.msra.mxu0 0
      %3389 = vmatprep.subr.bf16.mxu0 0
      %3390 = vmatpush1.bf16.msra.mxu0 0
      %3391 = vmatprep.subr.bf16.mxu0 0
      %3392 = vmatpush1.bf16.msra.mxu0 0
      %3393 = vmatprep.subr.bf16.mxu0 0
      %3394 = vmatpush1.bf16.msra.mxu0 0
      %3395 = vmatprep.subr.bf16.mxu0 0
      %3396 = vmatpush1.bf16.msra.mxu0 0
      %3397 = vmatprep.subr.bf16.mxu0 0
      %3398 = vmatpush1.bf16.msra.mxu0 0
      %3399 = vmatprep.subr.bf16.mxu0 0
      %3400 = vmatpush1.bf16.msra.mxu0 0
      %3401 = vmatprep.subr.bf16.mxu0 0
      %3402 = vmatpush1.bf16.msra.mxu0 0
      %3403 = vmatprep.mubr.bf16.mxu0 0
      %3404 = vmatmul.mubr.bf16.gmra.mrb[0].mxu0 %v3369
      %v3405 = vpop.f32.mrb[0].mxu0
      %v3406 = vadd.f32 0.0, %v3405
      %v3407 = vpop.f32.mrb[0].mxu0
      %v3408 = vpop.f32.mrb[0].mxu0
      %v3409 = vpop.f32.mrb[0].mxu0
      %3410 = vdwg.mxu0
      %v3411 = vadd.f32 %v3357, %v3406
      %v3412 = vld [vmem:[%s2481] sm:$0xff]
      %v3413 = vrcp.pop %v3412
      %v3414 = vld [vmem:[%s2489] sm:$0xff]
      %3416 = vset.pattern.permute.xlu0 0
      %3417 = vperm.xlu0 %3416, %v3413
      %v3418 = vpop.permute.xlu0 %3417
      %v3420 = vmul.f32 %v3414, %v3418
      %v3421 = vpack.c.bf16 %v3420, %v3420
      %v3423 = vsel %vm378, %v3421, 0
      %3425 = vmatprep.subr.bf16.mxu0 0
      %3426 = vmatpush1.bf16.msra.mxu0 %v2985
      %3427 = vmatprep.subr.bf16.mxu0 0
      %3428 = vmatpush1.bf16.msra.mxu0 0
      %3429 = vmatprep.subr.bf16.mxu0 0
      %3430 = vmatpush1.bf16.msra.mxu0 0
      %3431 = vmatprep.subr.bf16.mxu0 0
      %3432 = vmatpush1.bf16.msra.mxu0 0
      %3433 = vmatprep.subr.bf16.mxu0 0
      %3434 = vmatpush1.bf16.msra.mxu0 0
      %3435 = vmatprep.subr.bf16.mxu0 0
      %3436 = vmatpush1.bf16.msra.mxu0 0
      %3437 = vmatprep.subr.bf16.mxu0 0
      %3438 = vmatpush1.bf16.msra.mxu0 0
      %3439 = vmatprep.subr.bf16.mxu0 0
      %3440 = vmatpush1.bf16.msra.mxu0 0
      %3441 = vmatprep.subr.bf16.mxu0 0
      %3442 = vmatpush1.bf16.msra.mxu0 0
      %3443 = vmatprep.subr.bf16.mxu0 0
      %3444 = vmatpush1.bf16.msra.mxu0 0
      %3445 = vmatprep.subr.bf16.mxu0 0
      %3446 = vmatpush1.bf16.msra.mxu0 0
      %3447 = vmatprep.subr.bf16.mxu0 0
      %3448 = vmatpush1.bf16.msra.mxu0 0
      %3449 = vmatprep.subr.bf16.mxu0 0
      %3450 = vmatpush1.bf16.msra.mxu0 0
      %3451 = vmatprep.subr.bf16.mxu0 0
      %3452 = vmatpush1.bf16.msra.mxu0 0
      %3453 = vmatprep.subr.bf16.mxu0 0
      %3454 = vmatpush1.bf16.msra.mxu0 0
      %3455 = vmatprep.subr.bf16.mxu0 0
      %3456 = vmatpush1.bf16.msra.mxu0 0
      %3457 = vmatprep.mubr.bf16.mxu0 0
      %3458 = vmatmul.mubr.bf16.gmra.mrb[0].mxu0 %v3423
      %v3459 = vpop.f32.mrb[0].mxu0
      %v3460 = vadd.f32 0.0, %v3459
      %v3461 = vpop.f32.mrb[0].mxu0
      %v3462 = vpop.f32.mrb[0].mxu0
      %v3463 = vpop.f32.mrb[0].mxu0
      %3464 = vdwg.mxu0
      %v3465 = vadd.f32 %v3411, %v3460
      %v3466 = vadd.f32 %v3465, %v3032
      %s3467 = scalar_lea.vmem [#allocation15], 8
      %3468 = vst.msk [vmem:[%s3467] sm:$0xff] %vm266, %v3466
    $region69: #{tpu_custom_call.1} parent=1 // pred_fallthru
      _
    // Predicated region
    $region70: #{tpu_custom_call.1} parent=1 // pred_check
      _
    $region71: #{tpu_custom_call.1} parent=1 // pred_check_branch
      %3470 = sbr.rel (0) target = $region73
    $region72: #{tpu_custom_call.1} parent=1 // pred_region
      %s3472 = ssub.s32 256, 256
      %3473 = vsyncadd [#allocation8], %s3472
      %s3474 = sshll.u32 [#allocation15], 4
      %s3475 = int_to_ptr.vmem [resolvable:$true] %s3474
      %3480 = dma.vmem_to_hbm [thread:$0]  %s3475, 256, %s10, [#allocation8], 128, 128, 8
    $region73: #{tpu_custom_call.1} parent=1 // pred_fallthru
      _
    // Predicated region
    $region74: #{tpu_custom_call.1} parent=1 // pred_check
      _
    $region75: #{tpu_custom_call.1} parent=1 // pred_check_branch
      %3482 = sbr.rel (0) target = $region77
    $region76: #{tpu_custom_call.1} parent=1 // pred_region
      %3483 = dma.done [#allocation8], 256
    $region77: #{tpu_custom_call.1} parent=1 // pred_fallthru
      _
    %3484 = vsyncpa [#allocation7], 1
    %3485 = vsyncpa [#allocation10], 1
    %3486 = vsyncpa [#allocation13], 1
    %3487 = vsyncpa [#allocation8], 1

</llo_original>
